<compile_context>
chip_gen: v6e
topology: v6e:2x2x1
jax: 0.10.0
libtpu: 0.0.40
codegen_flags: <defaults>
</compile_context>

<pallas_src>
import functools

import jax
import jax.numpy as jnp
from jax.experimental import pallas as pl
from jax.experimental.pallas import tpu as pltpu

LANE = 128


def _round_up(v, m):
    return ((v + m - 1) // m) * m


def _full_spec(shape):
    nd = len(shape)
    return pl.BlockSpec(shape, lambda i, _nd=nd: (0,) * _nd)


_SEQ_PARAMS = pltpu.CompilerParams(
    dimension_semantics=("arbitrary",),
    vmem_limit_bytes=32 * 1024 * 1024,
)

_BATCH_PARALLEL_PARAMS = pltpu.CompilerParams(
    dimension_semantics=("parallel",),          # megacore-shardable on v7x
    vmem_limit_bytes=32 * 1024 * 1024,
)


# --------------------------------------------------------------------------------------
# Kernel 1: fused Conv3x3(pad=1) + bias + ReLU + global average pool  (+ optional fc)
# Grid is over the batch; each step processes one image.
# --------------------------------------------------------------------------------------
def _conv_gap_body(x_ref, w_ref, b_ref, m_ref, *, taps, vrows, inv_hw):
    # x_ref: (1, (H+2)*(W+2), C_in) f32   padded NHWC image, rows flattened
    # w_ref: (9, C_in, C_pad)       bf16  per-tap weights, out-channels zero-padded to 128
    # b_ref: (1, C_pad)             f32
    # m_ref: (vrows, 1)             f32   1.0 on rows that are real output pixels
    acc = None
    for k, off in enumerate(taps):
        lhs = x_ref[0, pl.ds(off, vrows), :].astype(jnp.bfloat16)          # (vrows, C_in)
        part = jnp.dot(lhs, w_ref[k], preferred_element_type=jnp.float32)  # (vrows, C_pad)
        acc = part if acc is None else acc + part
    acc = jnp.maximum(acc + b_ref[...], 0.0) * m_ref[...]
    return jnp.sum(acc, axis=0, keepdims=True) * inv_hw                    # fused GAP (1, C_pad)


def _conv_gap_kernel(x_ref, w_ref, b_ref, m_ref, o_ref, *, taps, vrows, inv_hw):
    o_ref[0] = _conv_gap_body(x_ref, w_ref, b_ref, m_ref,
                              taps=taps, vrows=vrows, inv_hw=inv_hw)


def _conv_gap_fc_kernel(x_ref, w_ref, b_ref, m_ref, fw_ref, fb_ref, o_ref,
                        *, taps, vrows, inv_hw):
    pooled = _conv_gap_body(x_ref, w_ref, b_ref, m_ref,
                            taps=taps, vrows=vrows, inv_hw=inv_hw)         # (1, C_pad)
    o_ref[0] = jnp.dot(pooled, fw_ref[...],
                       preferred_element_type=jnp.float32) + fb_ref[...]   # (1, CLS_pad)


def _conv_prep(conv_w, conv_b, x):
    # x: (N, C_in, H, W) NCHW (PyTorch convention), stride=1, padding=1.
    N, Cin, H, W = x.shape
    Cout = conv_w.shape[0]
    Hp, Wp = H + 2, W + 2
    PR = Hp * Wp
    VROWS = (H - 1) * Wp + W                      # rows covering every valid output pixel
    CP = _round_up(max(Cout, LANE), LANE)         # lane-dense output channels

    # NHWC, spatially padded, rows flattened (one padded copy, no 9x expansion).
    x_rows = jnp.pad(jnp.transpose(x, (0, 2, 3, 1)), ((0, 0), (1, 1), (1, 1), (0, 0)))
    x_rows = x_rows.reshape(N, PR, Cin).astype(jnp.float32)
    # (Cout, Cin, 3, 3) -> (9, Cin, CP), tap-major (dh, dw), bf16 for the MXU.
    w9 = jnp.transpose(conv_w, (2, 3, 1, 0)).reshape(9, Cin, Cout)
    w9 = jnp.pad(w9, ((0, 0), (0, 0), (0, CP - Cout))).astype(jnp.bfloat16)
    b = jnp.pad(conv_b, (0, CP - Cout)).reshape(1, CP).astype(jnp.float32)
    # Valid-row mask: accumulator row r is a real pixel iff (r % Wp) < W.
    mask = (jnp.arange(VROWS) % Wp < W).astype(jnp.float32).reshape(VROWS, 1)
    taps = tuple(dh * Wp + dw for dh in range(3) for dw in range(3))
    meta = dict(N=N, Cin=Cin, H=H, W=W, PR=PR, VROWS=VROWS, CP=CP, Cout=Cout, taps=taps)
    return x_rows, w9, b, mask, meta


def conv3x3_relu_gap(conv_w, conv_b, x):
    x_rows, w9, b, mask, m = _conv_prep(conv_w, conv_b, x)
    out = pl.pallas_call(
        functools.partial(_conv_gap_kernel, taps=m["taps"], vrows=m["VROWS"],
                          inv_hw=1.0 / (m["H"] * m["W"])),
        grid=(m["N"],),
        in_specs=[
            pl.BlockSpec((1, m["PR"], m["Cin"]), lambda n: (n, 0, 0)),
            pl.BlockSpec((9, m["Cin"], m["CP"]), lambda n: (0, 0, 0)),
            pl.BlockSpec((1, m["CP"]), lambda n: (0, 0)),
            pl.BlockSpec((m["VROWS"], 1), lambda n: (0, 0)),
        ],
        out_specs=pl.BlockSpec((1, 1, m["CP"]), lambda n: (n, 0, 0)),
        out_shape=jax.ShapeDtypeStruct((m["N"], 1, m["CP"]), jnp.float32),
        compiler_params=_BATCH_PARALLEL_PARAMS,
    )(x_rows, w9, b, mask)
    return out[:, 0, :m["Cout"]]                                           # (N, Cout)


def conv3x3_relu_gap_fc(conv_w, conv_b, fc_w, fc_b, x):
    # Fully fused eval path: conv + GAP + fc; pooled features never hit HBM.
    x_rows, w9, b, mask, m = _conv_prep(conv_w, conv_b, x)
    C, D = fc_w.shape
    assert D == m["Cout"]
    CLSP = _round_up(max(C, LANE), LANE)
    fw = jnp.zeros((m["CP"], CLSP), jnp.float32)
    fw = fw.at[:D, :C].set(jnp.transpose(fc_w).astype(jnp.float32))        # pad rows & cols
    fb = jnp.pad(fc_b, (0, CLSP - C)).reshape(1, CLSP).astype(jnp.float32)
    out = pl.pallas_call(
        functools.partial(_conv_gap_fc_kernel, taps=m["taps"], vrows=m["VROWS"],
                          inv_hw=1.0 / (m["H"] * m["W"])),
        grid=(m["N"],),
        in_specs=[
            pl.BlockSpec((1, m["PR"], m["Cin"]), lambda n: (n, 0, 0)),
            pl.BlockSpec((9, m["Cin"], m["CP"]), lambda n: (0, 0, 0)),
            pl.BlockSpec((1, m["CP"]), lambda n: (0, 0)),
            pl.BlockSpec((m["VROWS"], 1), lambda n: (0, 0)),
            pl.BlockSpec((m["CP"], CLSP), lambda n: (0, 0)),
            pl.BlockSpec((1, CLSP), lambda n: (0, 0)),
        ],
        out_specs=pl.BlockSpec((1, 1, CLSP), lambda n: (n, 0, 0)),
        out_shape=jax.ShapeDtypeStruct((m["N"], 1, CLSP), jnp.float32),
        compiler_params=_BATCH_PARALLEL_PARAMS,
    )(x_rows, w9, b, mask, fw, fb)
    return out[:, 0, :C]                                                   # (N, classes)


# --------------------------------------------------------------------------------------
# Kernel 2: centered covariance X_c^T X_c (feeds the eigendecomposition for PCA)
# --------------------------------------------------------------------------------------
def _cov_kernel(x_ref, cov_ref):
    x = x_ref[...]
    xc = x - jnp.mean(x, axis=0, keepdims=True)
    cov_ref[...] = jax.lax.dot_general(
        xc, xc, (((0,), (0,)), ((), ())), preferred_element_type=jnp.float32)


def pallas_feature_cov(feat):
    N, D = feat.shape
    return pl.pallas_call(
        _cov_kernel,
        grid=(1,),
        in_specs=[_full_spec((N, D))],
        out_specs=_full_spec((D, D)),
        out_shape=jax.ShapeDtypeStruct((D, D), jnp.float32),
        compiler_params=_SEQ_PARAMS,
    )(feat.astype(jnp.float32))


# --------------------------------------------------------------------------------------
# Kernel 3: fused center + PCA projection + L2 normalize + Lloyd k-means + labels
# --------------------------------------------------------------------------------------
def _cluster_kernel(x_ref, comp_ref, o_ref, *, n_iters, n_clusters, n_pad):
    x = x_ref[...]                                                   # (N, D) f32
    n = x.shape[0]
    k = n_clusters

    # center + PCA transform + row L2 normalize (epsilon-guarded)
    xc = x - jnp.mean(x, axis=0, keepdims=True)
    z = jnp.dot(xc, comp_ref[...], preferred_element_type=jnp.float32)        # (N, P)
    xl2 = z * jax.lax.rsqrt(jnp.sum(z * z, axis=1, keepdims=True) + 1e-12)

    col = jax.lax.broadcasted_iota(jnp.int32, (n, k), 1)
    x_sq = jnp.sum(xl2 * xl2, axis=1, keepdims=True)                          # (N, 1)

    # Deterministic init: first K points, kept transposed (P, K).  Built with a
    # selection matmul so no in-kernel transpose is needed.
    sel = (jax.lax.broadcasted_iota(jnp.int32, (n, k), 0) == col).astype(jnp.float32)
    c0 = jax.lax.dot_general(xl2, sel, (((0,), (0,)), ((), ())),
                             preferred_element_type=jnp.float32)              # (P, K)

    def assign(c):                                     # c: (P, K) -> labels (N, 1) int32
        c_sq = jnp.sum(c * c, axis=0, keepdims=True)                          # (1, K) VPU/XLU
        dist = x_sq - 2.0 * jnp.dot(xl2, c, preferred_element_type=jnp.float32) + c_sq
        dmin = jnp.min(dist, axis=1, keepdims=True)
        cand = jnp.where(dist <= dmin, col, k)
        return jnp.min(cand, axis=1, keepdims=True)

    def body(_, c):
        labels = assign(c)
        onehot = (labels == col).astype(jnp.float32)                          # (N, K)
        counts = jnp.sum(onehot, axis=0, keepdims=True)                       # (1, K) VPU/XLU
        sums = jax.lax.dot_general(xl2, onehot, (((0,), (0,)), ((), ())),
                                   preferred_element_type=jnp.float32)        # (P, K)
        # empty clusters keep their previous centroid (sklearn would re-seed)
        return jnp.where(counts > 0.0, sums / jnp.maximum(counts, 1.0), c)

    c = jax.lax.fori_loop(0, n_iters, body, c0, unroll=True)
    labels = assign(c).astype(jnp.float32)                                    # (N, 1)

    # Lane-dense label row: o[0, m] = label of sample m for m < N, zero beyond.
    scatter = (jax.lax.broadcasted_iota(jnp.int32, (n, n_pad), 0) ==
               jax.lax.broadcasted_iota(jnp.int32, (n, n_pad), 1)).astype(jnp.float32)
    o_ref[...] = jnp.sum(labels * scatter, axis=0, keepdims=True).astype(jnp.int32)


def pallas_pca_l2_kmeans(feat, components, n_clusters, n_iters=10):
    N, D = feat.shape
    assert N >= n_clusters, "batch must be >= cluster_classes for first-K centroid init"
    n_pad = _round_up(max(N, LANE), LANE)
    labels = pl.pallas_call(
        functools.partial(_cluster_kernel, n_iters=n_iters,
                          n_clusters=n_clusters, n_pad=n_pad),
        grid=(1,),
        in_specs=[_full_spec((N, D)), _full_spec(components.shape)],
        out_specs=_full_spec((1, n_pad)),
        out_shape=jax.ShapeDtypeStruct((1, n_pad), jnp.int32),
        compiler_params=_SEQ_PARAMS,
    )(feat.astype(jnp.float32), components.astype(jnp.float32))
    return labels[0, :N]


# --------------------------------------------------------------------------------------
# Model glue
# --------------------------------------------------------------------------------------
def init_params(key, in_channels, hidden_channels, cluster_classes):
    k1, k2, k3, k4 = jax.random.split(key, 4)
    return dict(
        conv_w=0.1 * jax.random.normal(k1, (hidden_channels, in_channels, 3, 3), jnp.float32),
        conv_b=0.05 * jax.random.normal(k2, (hidden_channels,), jnp.float32),
        fc_w=0.1 * jax.random.normal(k3, (cluster_classes, hidden_channels), jnp.float32),
        fc_b=0.05 * jax.random.normal(k4, (cluster_classes,), jnp.float32),
    )


def backbone_forward(params, x):
    # TODO(synk): get_backbone_model is unspecified; synthetic backbone =
    # Conv3x3(pad=1) + ReLU + GlobalAvgPool, fused into a single Pallas kernel.
    return conv3x3_relu_gap(params["conv_w"], params["conv_b"], x)   # (N, hidden) == final_length


def cluster_train(conv_out, n_components, classes):
    cov = pallas_feature_cov(conv_out)
    # TODO(synk): PCA fit requires an eigendecomposition/SVD with no clean Pallas equivalent -> jnp.linalg.eigh.
    _, eigvecs = jnp.linalg.eigh(cov)
    components = eigvecs[:, ::-1][:, :n_components]                  # top-n principal axes, (D, n)
    # TODO(synk): sklearn KMeans uses randomized k-means++ init; deterministic first-K init + 10 Lloyd steps here.
    return pallas_pca_l2_kmeans(conv_out, components, classes, n_iters=10)


def deepcluster_forward(params, x, n_components, classes, mode="pseudo_labels"):
    if mode == "pseudo_labels":
        # torch.no_grad()/eval-vs-train flags are no-ops here (no BN/dropout in the synthetic backbone).
        conv_out = backbone_forward(params, x)
        pseudo_label = cluster_train(conv_out, n_components, classes)
        return conv_out, pseudo_label     # labels are int32 (torch.long is int64; 32-bit is TPU-native)
    elif mode == "eval":
        # conv + GAP + fc fused in one kernel; pooled features stay in VMEM.
        return conv3x3_relu_gap_fc(params["conv_w"], params["conv_b"],
                                   params["fc_w"], params["fc_b"], x)
    raise ValueError(mode)


if __name__ == "__main__":
    key = jax.random.PRNGKey(0)
    k_param, k_x = jax.random.split(key)

    batch, in_channels, spatial = 8, 4, 16
    hidden_channels = 32          # backbone.final_length
    pca_n_components = 4
    cluster_classes = 3

    params = init_params(k_param, in_channels, hidden_channels, cluster_classes)
    x = jax.random.normal(k_x, (batch, in_channels, spatial, spatial), jnp.float32)

    conv_out, pseudo_label = deepcluster_forward(
        params, x, pca_n_components, cluster_classes, mode="pseudo_labels")
    logits = deepcluster_forward(params, x, pca_n_components, cluster_classes, mode="eval")

    jax.block_until_ready((conv_out, pseudo_label, logits))
    assert conv_out.shape == (batch, hidden_channels)
    assert pseudo_label.shape == (batch,)
    assert pseudo_label.dtype == jnp.int32
    assert logits.shape == (batch, cluster_classes)
    print("KERNEL_OK")
</pallas_src>

<mosaic_0001>
module attributes {stable_mosaic.version = 11 : i64} {
  func.func @_conv_gap_kernel(%arg0: i32, %arg1: memref<1x324x4xf32, #tpu.memory_space<vmem>>, %arg2: memref<9x4x128xbf16, #tpu.memory_space<vmem>>, %arg3: memref<1x128xf32, #tpu.memory_space<vmem>>, %arg4: memref<286x1xf32, #tpu.memory_space<vmem>>, %arg5: memref<1x1x128xf32, #tpu.memory_space<vmem>>) attributes {dimension_semantics = [#tpu.dimension_semantics<parallel>], iteration_bounds = array<i64: 8>, scalar_prefetch = 0 : i64, scratch_operands = 0 : i64, tpu.core_type = #tpu.core_type<tc>, window_params = [{transform_indices = @transform_0, window_bounds = array<i64: 1, 324, 4>}, {pipeline_mode = #tpu.pipeline_mode<synchronous>, transform_indices = @transform_1, window_bounds = array<i64: 9, 4, 128>}, {pipeline_mode = #tpu.pipeline_mode<synchronous>, transform_indices = @transform_2, window_bounds = array<i64: 1, 128>}, {pipeline_mode = #tpu.pipeline_mode<synchronous>, transform_indices = @transform_3, window_bounds = array<i64: 286, 1>}, {transform_indices = @transform_4, window_bounds = array<i64: 1, 1, 128>}]} {
    %c0 = arith.constant 0 : index
    %c0_0 = arith.constant 0 : index
    %c0_1 = arith.constant 0 : index
    %0 = vector.load %arg1[%c0, %c0_0, %c0_1] : memref<1x324x4xf32, #tpu.memory_space<vmem>>, vector<1x286x4xf32>
    %1 = vector.shape_cast %0 : vector<1x286x4xf32> to vector<286x4xf32>
    %2 = arith.truncf %1 : vector<286x4xf32> to vector<286x4xbf16>
    %c0_2 = arith.constant 0 : index
    %c0_3 = arith.constant 0 : index
    %c0_4 = arith.constant 0 : index
    %3 = vector.load %arg2[%c0_2, %c0_3, %c0_4] : memref<9x4x128xbf16, #tpu.memory_space<vmem>>, vector<1x4x128xbf16>
    %4 = vector.shape_cast %3 : vector<1x4x128xbf16> to vector<4x128xbf16>
    %cst = arith.constant dense<0.000000e+00> : vector<286x128xf32>
    %5 = tpu.matmul %2, %4, %cst {dimension_numbers = #tpu.dot_dimension_numbers<[1], [0], [0], [1], [0, 0, 1, 1], [], []>} : vector<286x4xbf16>, vector<4x128xbf16>, vector<286x128xf32> -> vector<286x128xf32>
    %c0_5 = arith.constant 0 : index
    %c1 = arith.constant 1 : index
    %c0_6 = arith.constant 0 : index
    %6 = vector.load %arg1[%c0_5, %c1, %c0_6] : memref<1x324x4xf32, #tpu.memory_space<vmem>>, vector<1x286x4xf32>
    %7 = vector.shape_cast %6 : vector<1x286x4xf32> to vector<286x4xf32>
    %8 = arith.truncf %7 : vector<286x4xf32> to vector<286x4xbf16>
    %c1_7 = arith.constant 1 : index
    %c0_8 = arith.constant 0 : index
    %c0_9 = arith.constant 0 : index
    %9 = vector.load %arg2[%c1_7, %c0_8, %c0_9] : memref<9x4x128xbf16, #tpu.memory_space<vmem>>, vector<1x4x128xbf16>
    %10 = vector.shape_cast %9 : vector<1x4x128xbf16> to vector<4x128xbf16>
    %cst_10 = arith.constant dense<0.000000e+00> : vector<286x128xf32>
    %11 = tpu.matmul %8, %10, %cst_10 {dimension_numbers = #tpu.dot_dimension_numbers<[1], [0], [0], [1], [0, 0, 1, 1], [], []>} : vector<286x4xbf16>, vector<4x128xbf16>, vector<286x128xf32> -> vector<286x128xf32>
    %12 = arith.addf %5, %11 : vector<286x128xf32>
    %c0_11 = arith.constant 0 : index
    %c2 = arith.constant 2 : index
    %c0_12 = arith.constant 0 : index
    %13 = vector.load %arg1[%c0_11, %c2, %c0_12] : memref<1x324x4xf32, #tpu.memory_space<vmem>>, vector<1x286x4xf32>
    %14 = vector.shape_cast %13 : vector<1x286x4xf32> to vector<286x4xf32>
    %15 = arith.truncf %14 : vector<286x4xf32> to vector<286x4xbf16>
    %c2_13 = arith.constant 2 : index
    %c0_14 = arith.constant 0 : index
    %c0_15 = arith.constant 0 : index
    %16 = vector.load %arg2[%c2_13, %c0_14, %c0_15] : memref<9x4x128xbf16, #tpu.memory_space<vmem>>, vector<1x4x128xbf16>
    %17 = vector.shape_cast %16 : vector<1x4x128xbf16> to vector<4x128xbf16>
    %cst_16 = arith.constant dense<0.000000e+00> : vector<286x128xf32>
    %18 = tpu.matmul %15, %17, %cst_16 {dimension_numbers = #tpu.dot_dimension_numbers<[1], [0], [0], [1], [0, 0, 1, 1], [], []>} : vector<286x4xbf16>, vector<4x128xbf16>, vector<286x128xf32> -> vector<286x128xf32>
    %19 = arith.addf %12, %18 : vector<286x128xf32>
    %c0_17 = arith.constant 0 : index
    %c18 = arith.constant 18 : index
    %c0_18 = arith.constant 0 : index
    %20 = vector.load %arg1[%c0_17, %c18, %c0_18] : memref<1x324x4xf32, #tpu.memory_space<vmem>>, vector<1x286x4xf32>
    %21 = vector.shape_cast %20 : vector<1x286x4xf32> to vector<286x4xf32>
    %22 = arith.truncf %21 : vector<286x4xf32> to vector<286x4xbf16>
    %c3 = arith.constant 3 : index
    %c0_19 = arith.constant 0 : index
    %c0_20 = arith.constant 0 : index
    %23 = vector.load %arg2[%c3, %c0_19, %c0_20] : memref<9x4x128xbf16, #tpu.memory_space<vmem>>, vector<1x4x128xbf16>
    %24 = vector.shape_cast %23 : vector<1x4x128xbf16> to vector<4x128xbf16>
    %cst_21 = arith.constant dense<0.000000e+00> : vector<286x128xf32>
    %25 = tpu.matmul %22, %24, %cst_21 {dimension_numbers = #tpu.dot_dimension_numbers<[1], [0], [0], [1], [0, 0, 1, 1], [], []>} : vector<286x4xbf16>, vector<4x128xbf16>, vector<286x128xf32> -> vector<286x128xf32>
    %26 = arith.addf %19, %25 : vector<286x128xf32>
    %c0_22 = arith.constant 0 : index
    %c19 = arith.constant 19 : index
    %c0_23 = arith.constant 0 : index
    %27 = vector.load %arg1[%c0_22, %c19, %c0_23] : memref<1x324x4xf32, #tpu.memory_space<vmem>>, vector<1x286x4xf32>
    %28 = vector.shape_cast %27 : vector<1x286x4xf32> to vector<286x4xf32>
    %29 = arith.truncf %28 : vector<286x4xf32> to vector<286x4xbf16>
    %c4 = arith.constant 4 : index
    %c0_24 = arith.constant 0 : index
    %c0_25 = arith.constant 0 : index
    %30 = vector.load %arg2[%c4, %c0_24, %c0_25] : memref<9x4x128xbf16, #tpu.memory_space<vmem>>, vector<1x4x128xbf16>
    %31 = vector.shape_cast %30 : vector<1x4x128xbf16> to vector<4x128xbf16>
    %cst_26 = arith.constant dense<0.000000e+00> : vector<286x128xf32>
    %32 = tpu.matmul %29, %31, %cst_26 {dimension_numbers = #tpu.dot_dimension_numbers<[1], [0], [0], [1], [0, 0, 1, 1], [], []>} : vector<286x4xbf16>, vector<4x128xbf16>, vector<286x128xf32> -> vector<286x128xf32>
    %33 = arith.addf %26, %32 : vector<286x128xf32>
    %c0_27 = arith.constant 0 : index
    %c20 = arith.constant 20 : index
    %c0_28 = arith.constant 0 : index
    %34 = vector.load %arg1[%c0_27, %c20, %c0_28] : memref<1x324x4xf32, #tpu.memory_space<vmem>>, vector<1x286x4xf32>
    %35 = vector.shape_cast %34 : vector<1x286x4xf32> to vector<286x4xf32>
    %36 = arith.truncf %35 : vector<286x4xf32> to vector<286x4xbf16>
    %c5 = arith.constant 5 : index
    %c0_29 = arith.constant 0 : index
    %c0_30 = arith.constant 0 : index
    %37 = vector.load %arg2[%c5, %c0_29, %c0_30] : memref<9x4x128xbf16, #tpu.memory_space<vmem>>, vector<1x4x128xbf16>
    %38 = vector.shape_cast %37 : vector<1x4x128xbf16> to vector<4x128xbf16>
    %cst_31 = arith.constant dense<0.000000e+00> : vector<286x128xf32>
    %39 = tpu.matmul %36, %38, %cst_31 {dimension_numbers = #tpu.dot_dimension_numbers<[1], [0], [0], [1], [0, 0, 1, 1], [], []>} : vector<286x4xbf16>, vector<4x128xbf16>, vector<286x128xf32> -> vector<286x128xf32>
    %40 = arith.addf %33, %39 : vector<286x128xf32>
    %c0_32 = arith.constant 0 : index
    %c36 = arith.constant 36 : index
    %c0_33 = arith.constant 0 : index
    %41 = vector.load %arg1[%c0_32, %c36, %c0_33] : memref<1x324x4xf32, #tpu.memory_space<vmem>>, vector<1x286x4xf32>
    %42 = vector.shape_cast %41 : vector<1x286x4xf32> to vector<286x4xf32>
    %43 = arith.truncf %42 : vector<286x4xf32> to vector<286x4xbf16>
    %c6 = arith.constant 6 : index
    %c0_34 = arith.constant 0 : index
    %c0_35 = arith.constant 0 : index
    %44 = vector.load %arg2[%c6, %c0_34, %c0_35] : memref<9x4x128xbf16, #tpu.memory_space<vmem>>, vector<1x4x128xbf16>
    %45 = vector.shape_cast %44 : vector<1x4x128xbf16> to vector<4x128xbf16>
    %cst_36 = arith.constant dense<0.000000e+00> : vector<286x128xf32>
    %46 = tpu.matmul %43, %45, %cst_36 {dimension_numbers = #tpu.dot_dimension_numbers<[1], [0], [0], [1], [0, 0, 1, 1], [], []>} : vector<286x4xbf16>, vector<4x128xbf16>, vector<286x128xf32> -> vector<286x128xf32>
    %47 = arith.addf %40, %46 : vector<286x128xf32>
    %c0_37 = arith.constant 0 : index
    %c37 = arith.constant 37 : index
    %c0_38 = arith.constant 0 : index
    %48 = vector.load %arg1[%c0_37, %c37, %c0_38] : memref<1x324x4xf32, #tpu.memory_space<vmem>>, vector<1x286x4xf32>
    %49 = vector.shape_cast %48 : vector<1x286x4xf32> to vector<286x4xf32>
    %50 = arith.truncf %49 : vector<286x4xf32> to vector<286x4xbf16>
    %c7 = arith.constant 7 : index
    %c0_39 = arith.constant 0 : index
    %c0_40 = arith.constant 0 : index
    %51 = vector.load %arg2[%c7, %c0_39, %c0_40] : memref<9x4x128xbf16, #tpu.memory_space<vmem>>, vector<1x4x128xbf16>
    %52 = vector.shape_cast %51 : vector<1x4x128xbf16> to vector<4x128xbf16>
    %cst_41 = arith.constant dense<0.000000e+00> : vector<286x128xf32>
    %53 = tpu.matmul %50, %52, %cst_41 {dimension_numbers = #tpu.dot_dimension_numbers<[1], [0], [0], [1], [0, 0, 1, 1], [], []>} : vector<286x4xbf16>, vector<4x128xbf16>, vector<286x128xf32> -> vector<286x128xf32>
    %54 = arith.addf %47, %53 : vector<286x128xf32>
    %c0_42 = arith.constant 0 : index
    %c38 = arith.constant 38 : index
    %c0_43 = arith.constant 0 : index
    %55 = vector.load %arg1[%c0_42, %c38, %c0_43] : memref<1x324x4xf32, #tpu.memory_space<vmem>>, vector<1x286x4xf32>
    %56 = vector.shape_cast %55 : vector<1x286x4xf32> to vector<286x4xf32>
    %57 = arith.truncf %56 : vector<286x4xf32> to vector<286x4xbf16>
    %c8 = arith.constant 8 : index
    %c0_44 = arith.constant 0 : index
    %c0_45 = arith.constant 0 : index
    %58 = vector.load %arg2[%c8, %c0_44, %c0_45] : memref<9x4x128xbf16, #tpu.memory_space<vmem>>, vector<1x4x128xbf16>
    %59 = vector.shape_cast %58 : vector<1x4x128xbf16> to vector<4x128xbf16>
    %cst_46 = arith.constant dense<0.000000e+00> : vector<286x128xf32>
    %60 = tpu.matmul %57, %59, %cst_46 {dimension_numbers = #tpu.dot_dimension_numbers<[1], [0], [0], [1], [0, 0, 1, 1], [], []>} : vector<286x4xbf16>, vector<4x128xbf16>, vector<286x128xf32> -> vector<286x128xf32>
    %61 = arith.addf %54, %60 : vector<286x128xf32>
    %c0_47 = arith.constant 0 : index
    %c0_48 = arith.constant 0 : index
    %62 = vector.load %arg3[%c0_47, %c0_48] : memref<1x128xf32, #tpu.memory_space<vmem>>, vector<1x128xf32>
    %63 = vector.broadcast %62 : vector<1x128xf32> to vector<286x128xf32>
    %64 = arith.addf %61, %63 : vector<286x128xf32>
    %cst_49 = arith.constant 0.000000e+00 : f32
    %65 = vector.broadcast %cst_49 : f32 to vector<286x128xf32>
    %66 = arith.maximumf %64, %65 : vector<286x128xf32>
    %c0_50 = arith.constant 0 : index
    %c0_51 = arith.constant 0 : index
    %67 = vector.load %arg4[%c0_50, %c0_51] : memref<286x1xf32, #tpu.memory_space<vmem>>, vector<286x1xf32>
    %68 = vector.broadcast %67 : vector<286x1xf32> to vector<286x128xf32>
    %69 = arith.mulf %66, %68 : vector<286x128xf32>
    %cst_52 = arith.constant dense<0.000000e+00> : vector<128xf32>
    %70 = vector.multi_reduction <add>, %69, %cst_52 [0] : vector<286x128xf32> to vector<128xf32>
    %71 = vector.shape_cast %70 : vector<128xf32> to vector<1x128xf32>
    %cst_53 = arith.constant 3.906250e-03 : f32
    %72 = vector.broadcast %cst_53 : f32 to vector<1x128xf32>
    %73 = arith.mulf %71, %72 : vector<1x128xf32>
    %c0_54 = arith.constant 0 : index
    %c0_55 = arith.constant 0 : index
    %c0_56 = arith.constant 0 : index
    %74 = vector.load %arg5[%c0_54, %c0_55, %c0_56] : memref<1x1x128xf32, #tpu.memory_space<vmem>>, vector<1x1x128xf32>
    %75 = vector.shape_cast %74 : vector<1x1x128xf32> to vector<1x128xf32>
    %76 = vector.shape_cast %73 : vector<1x128xf32> to vector<1x1x128xf32>
    tpu.vector_store %arg5[%c0_54, %c0_55, %c0_56], %76 {strides = array<i32>} : memref<1x1x128xf32, #tpu.memory_space<vmem>>, vector<1x1x128xf32>,
    return
  }
  func.func @transform_0(%arg0: i32) -> (i32, i32, i32) {
    %c0_i32 = arith.constant 0 : i32
    %c0_i32_0 = arith.constant 0 : i32
    %c0_i32_1 = arith.constant 0 : i32
    return %arg0, %c0_i32, %c0_i32_0 : i32, i32, i32
  }
  func.func @transform_1(%arg0: i32) -> (i32, i32, i32) {
    %c0_i32 = arith.constant 0 : i32
    %c0_i32_0 = arith.constant 0 : i32
    %c0_i32_1 = arith.constant 0 : i32
    %c0_i32_2 = arith.constant 0 : i32
    return %c0_i32, %c0_i32_0, %c0_i32_1 : i32, i32, i32
  }
  func.func @transform_2(%arg0: i32) -> (i32, i32) {
    %c0_i32 = arith.constant 0 : i32
    %c0_i32_0 = arith.constant 0 : i32
    %c0_i32_1 = arith.constant 0 : i32
    return %c0_i32, %c0_i32_0 : i32, i32
  }
  func.func @transform_3(%arg0: i32) -> (i32, i32) {
    %c0_i32 = arith.constant 0 : i32
    %c0_i32_0 = arith.constant 0 : i32
    %c0_i32_1 = arith.constant 0 : i32
    return %c0_i32, %c0_i32_0 : i32, i32
  }
  func.func @transform_4(%arg0: i32) -> (i32, i32, i32) {
    %c0_i32 = arith.constant 0 : i32
    %c0_i32_0 = arith.constant 0 : i32
    %c0_i32_1 = arith.constant 0 : i32
    return %arg0, %c0_i32, %c0_i32_0 : i32, i32, i32
  }
}

</mosaic_0001>

<llo_original>
// kernel: tpu_custom_call.1
$region0: #{tpu_custom_call.1}
  #allocation0 [shape = 'u32[]', space=smem, size = 0x4, offset = 0x4, fixed_abs, tag = 'smem constant byte address 0x4 - core index']
  #allocation1 [shape = 'u32[144,128]{1,0:T(1,128)}', space=vmem, size = 0x12000, scoped, tag = 'internal scratch']
  %s0 = inlined_call_operand.vmem [shape: f32[8,324,4], index: 0, kind: input, shape index: {}]
  %s1 = inlined_call_operand.vmem [shape: bf16[9,4,128], index: 1, kind: input, shape index: {}]
  %s2 = inlined_call_operand.vmem [shape: f32[1,128], index: 2, kind: input, shape index: {}]
  %s3 = inlined_call_operand.vmem [shape: f32[286,1], index: 3, kind: input, shape index: {}]
  %s4 = inlined_call_operand.hbm [shape: f32[8,1,128], index: 4, kind: output, shape index: {}]
  %s5 = sld [smem:[#allocation0]]
  $region49: #{tpu_custom_call.1} parent=0
    _
  %s7 = ssub.s32 1, %s5
  %s8 = scalar_select 0, %s7, %s5
  $region1: #{tpu_custom_call.1} parent=0
    #allocation2 [shape = 'u8[1024]{0}', space=vmem, size = 0x400, scoped, tag = 'output window, operand 0']
    #allocation3 [shape = 's32[2]{0}', space=sflag, size = 0x8, scoped, tag = 'scoped memory for tpu_custom_call.1']
    %9 = vsyncpa [#allocation3], 0
    %s10 = scalar_lea.sflag [#allocation3], 1
    %11 = vsyncpa %s10, 0
    loop: start=0, step=1, limit=10
    $region2: #{tpu_custom_call.1} parent=1 // loop_pre_header
      _
    $region3: #{tpu_custom_call.1} parent=1 // loop_header
      %s13 = sphi 0, %s17
      %p14 = scmp.ge.s32.totalorder %s13, 10
      %s23 = sphi 0, %s25
      %s26 = sphi 0, %s23
      %s27 = sphi 0, %s26
      %s43 = sphi 0, %s27
      %s47 = sphi 0, %s47
      %s49 = sphi 0, %s47
      %s50 = sphi 0, %s49
      %s64 = sphi 0, %s50
      %s68 = sphi 0, %s68
      %s70 = sphi 0, %s68
      %s71 = sphi 0, %s70
      %s85 = sphi 0, %s71
      %s89 = sphi 0, %s89
      %s91 = sphi 0, %s89
      %s92 = sphi 0, %s91
      %s106 = sphi 0, %s92
      %s112 = sphi 0, %s114
      %s115 = sphi 0, %s112
      %s116 = sphi 0, %s115
      %s132 = sphi 0, %s116
    $region4: #{tpu_custom_call.1} parent=1 // loop_header_branch
      %16 = sbr.rel (%p14) target = $region8
    $region5: #{tpu_custom_call.1} parent=1 // loop_body
      %s18 = ssub.s32 %s13, 1
      %s19 = ssub.s32 %s13, 2
      %s20 = sadd.s32 %s13, 1
      %s21 = ssub.s32 %s13, %s20
      %p22 = scmp.eq.s32.totalorder %s21, 0
      %s24 = sadd.s32 %s23, 1
      %s25 = scalar_select %p22, %s23, %s24
      %p28 = pneg %p22
      %p29 = scmp.eq.s32.totalorder %s13, 7
      %p30 = por %p28, %p29
      %p31 = scmp.ne.s32.totalorder %s23, %s26
      %p32 = scmp.eq.s32.totalorder %s13, 0
      %p33 = por %p31, %p32
      %p34 = scmp.ne.s32.totalorder %s23, %s26
      %p35 = scmp.eq.s32.totalorder %s18, 7
      %p36 = por %p34, %p35
      %p37 = scmp.ne.s32.totalorder %s26, %s27
      %p38 = scmp.eq.s32.totalorder %s18, 0
      %p39 = por %p37, %p38
      %p40 = scmp.ne.s32.totalorder %s26, %s27
      %p41 = scmp.eq.s32.totalorder %s19, 7
      %p42 = por %p40, %p41
      %p44 = scmp.ne.s32.totalorder %s27, %s43
      %p45 = scmp.eq.s32.totalorder %s19, 0
      %p46 = por %p44, %p45
      %s48 = sadd.s32 %s47, 1
      %p51 = scmp.eq.s32.totalorder %s13, 7
      %p52 = scmp.ne.s32.totalorder %s47, %s49
      %p53 = scmp.eq.s32.totalorder %s13, 0
      %p54 = por %p52, %p53
      %p55 = scmp.ne.s32.totalorder %s47, %s49
      %p56 = scmp.eq.s32.totalorder %s18, 7
      %p57 = por %p55, %p56
      %p58 = scmp.ne.s32.totalorder %s49, %s50
      %p59 = scmp.eq.s32.totalorder %s18, 0
      %p60 = por %p58, %p59
      %p61 = scmp.ne.s32.totalorder %s49, %s50
      %p62 = scmp.eq.s32.totalorder %s19, 7
      %p63 = por %p61, %p62
      %p65 = scmp.ne.s32.totalorder %s50, %s64
      %p66 = scmp.eq.s32.totalorder %s19, 0
      %p67 = por %p65, %p66
      %s69 = sadd.s32 %s68, 1
      %p72 = scmp.eq.s32.totalorder %s13, 7
      %p73 = scmp.ne.s32.totalorder %s68, %s70
      %p74 = scmp.eq.s32.totalorder %s13, 0
      %p75 = por %p73, %p74
      %p76 = scmp.ne.s32.totalorder %s68, %s70
      %p77 = scmp.eq.s32.totalorder %s18, 7
      %p78 = por %p76, %p77
      %p79 = scmp.ne.s32.totalorder %s70, %s71
      %p80 = scmp.eq.s32.totalorder %s18, 0
      %p81 = por %p79, %p80
      %p82 = scmp.ne.s32.totalorder %s70, %s71
      %p83 = scmp.eq.s32.totalorder %s19, 7
      %p84 = por %p82, %p83
      %p86 = scmp.ne.s32.totalorder %s71, %s85
      %p87 = scmp.eq.s32.totalorder %s19, 0
      %p88 = por %p86, %p87
      %s90 = sadd.s32 %s89, 1
      %p93 = scmp.eq.s32.totalorder %s13, 7
      %p94 = scmp.ne.s32.totalorder %s89, %s91
      %p95 = scmp.eq.s32.totalorder %s13, 0
      %p96 = por %p94, %p95
      %p97 = scmp.ne.s32.totalorder %s89, %s91
      %p98 = scmp.eq.s32.totalorder %s18, 7
      %p99 = por %p97, %p98
      %p100 = scmp.ne.s32.totalorder %s91, %s92
      %p101 = scmp.eq.s32.totalorder %s18, 0
      %p102 = por %p100, %p101
      %p103 = scmp.ne.s32.totalorder %s91, %s92
      %p104 = scmp.eq.s32.totalorder %s19, 7
      %p105 = por %p103, %p104
      %p107 = scmp.ne.s32.totalorder %s92, %s106
      %p108 = scmp.eq.s32.totalorder %s19, 0
      %p109 = por %p107, %p108
      %s110 = ssub.s32 %s13, %s20
      %p111 = scmp.eq.s32.totalorder %s110, 0
      %s113 = sadd.s32 %s112, 1
      %s114 = scalar_select %p111, %s112, %s113
      %p117 = pneg %p111
      %p118 = scmp.eq.s32.totalorder %s13, 7
      %p119 = por %p117, %p118
      %p120 = scmp.ne.s32.totalorder %s112, %s115
      %p121 = scmp.eq.s32.totalorder %s13, 0
      %p122 = por %p120, %p121
      %p123 = scmp.ne.s32.totalorder %s112, %s115
      %p124 = scmp.eq.s32.totalorder %s18, 7
      %p125 = por %p123, %p124
      %p126 = scmp.ne.s32.totalorder %s115, %s116
      %p127 = scmp.eq.s32.totalorder %s18, 0
      %p128 = por %p126, %p127
      %p129 = scmp.ne.s32.totalorder %s115, %s116
      %p130 = scmp.eq.s32.totalorder %s19, 7
      %p131 = por %p129, %p130
      %p133 = scmp.ne.s32.totalorder %s116, %s132
      %p134 = scmp.eq.s32.totalorder %s19, 0
      %p135 = por %p133, %p134
      %p136 = scmp.le.s32.totalorder 1, %s13
      %p137 = scmp.lt.s32.totalorder %s13, 9
      %p138 = pnand %p136, %p137
      %p139 = pneg %p138
      // Predicated region
      $region9: #{tpu_custom_call.1} parent=5 // pred_check
        _
      $region10: #{tpu_custom_call.1} parent=5 // pred_check_branch
        %141 = sbr.rel (%p138) target = $region12
      $region11: #{tpu_custom_call.1} parent=5 // pred_region
        %s142 = ssub.s32 %s13, 1
        // Predicated region
        $region13: #{tpu_custom_call.1} parent=11 // pred_check
          %p143 = pneg %p60
        $region14: #{tpu_custom_call.1} parent=11 // pred_check_branch
          %145 = sbr.rel (%p143) target = $region16
        $region15: #{tpu_custom_call.1} parent=11 // pred_region
          _
        $region16: #{tpu_custom_call.1} parent=11 // pred_fallthru
          _
        // Predicated region
        $region17: #{tpu_custom_call.1} parent=11 // pred_check
          %p146 = pneg %p81
        $region18: #{tpu_custom_call.1} parent=11 // pred_check_branch
          %148 = sbr.rel (%p146) target = $region20
        $region19: #{tpu_custom_call.1} parent=11 // pred_region
          _
        $region20: #{tpu_custom_call.1} parent=11 // pred_fallthru
          _
        // Predicated region
        $region21: #{tpu_custom_call.1} parent=11 // pred_check
          %p149 = pneg %p102
        $region22: #{tpu_custom_call.1} parent=11 // pred_check_branch
          %151 = sbr.rel (%p149) target = $region24
        $region23: #{tpu_custom_call.1} parent=11 // pred_region
          _
        $region24: #{tpu_custom_call.1} parent=11 // pred_fallthru
          _
      $region12: #{tpu_custom_call.1} parent=5 // pred_fallthru
        _
      %p152 = scmp.lt.s32.totalorder %s13, 8
      // Predicated region
      $region25: #{tpu_custom_call.1} parent=5 // pred_check
        %p153 = pneg %p152
      $region26: #{tpu_custom_call.1} parent=5 // pred_check_branch
        %155 = sbr.rel (%p153) target = $region28
      $region27: #{tpu_custom_call.1} parent=5 // pred_region
        // Predicated region
        $region29: #{tpu_custom_call.1} parent=27 // pred_check
          %p156 = pneg %p33
        $region30: #{tpu_custom_call.1} parent=27 // pred_check_branch
          %158 = sbr.rel (%p156) target = $region32
        $region31: #{tpu_custom_call.1} parent=27 // pred_region
          %p159 = scmp.lt.s32.totalorder %s13, 7
          %s160 = scalar_select %p159, %s13, 7
          %s161 = smul.addr %s160, 41
          %s162 = smul.addr %s161, 8
          %s163 = scalar_lea.vmem %s0, %s162
        $region32: #{tpu_custom_call.1} parent=27 // pred_fallthru
          _
      $region28: #{tpu_custom_call.1} parent=5 // pred_fallthru
        _
      %p164 = scmp.le.s32.totalorder 1, %s13
      %p165 = scmp.lt.s32.totalorder %s13, 9
      %p166 = pnand %p164, %p165
      %p167 = pneg %p166
      // Predicated region
      $region33: #{tpu_custom_call.1} parent=5 // pred_check
        _
      $region34: #{tpu_custom_call.1} parent=5 // pred_check_branch
        %169 = sbr.rel (%p166) target = $region36
      $region35: #{tpu_custom_call.1} parent=5 // pred_region
        %s170 = ssub.s32 %s13, 1
        %p171 = scmp.lt.s32.totalorder %s18, 7
        %s172 = scalar_select %p171, %s18, 7
        %s173 = smul.addr %s172, 41
        %s174 = smul.addr %s173, 8
        %s175 = scalar_lea.vmem %s0, %s174
        %p176 = pneg %p39
        %p177 = pneg %p36
        %p178 = pneg %p60
        %p179 = pneg %p57
        %p180 = pneg %p81
        %p181 = pneg %p78
        %p182 = pneg %p102
        %p183 = pneg %p99
        %p184 = pneg %p128
        %p185 = pneg %p125
        %s186 = sand.u32 %s115, 1
        %s187 = scalar_lea.sflag [#allocation3], %s186
        %s188 = sand.u32 %s115, 1
        %s189 = scalar_lea.vmem [#allocation2], %s188
        %p190 = scmp.lt.s32.totalorder %s18, 7
        %s191 = scalar_select %p190, %s18, 7
        %s192 = smul.addr %s191, 41
        %s193 = smul.addr %s192, 8
        %s194 = scalar_lea.vmem %s0, %s193
        %v196 = vld [vmem:[%s194] sm:$0xff]
        %v197 = vld [vmem:[%s194 + $0x8] sm:$0xff]
        %v198 = vld [vmem:[%s194 + $0x10] sm:$0xff]
        %v199 = vld [vmem:[%s194 + $0x18] sm:$0xff]
        %v200 = vld [vmem:[%s194 + $0x20] sm:$0xff]
        %v201 = vld [vmem:[%s194 + $0x28] sm:$0xff]
        %v202 = vld [vmem:[%s194 + $0x30] sm:$0xff]
        %v203 = vld [vmem:[%s194 + $0x38] sm:$0xff]
        %v204 = vld [vmem:[%s194 + $0x40] sm:$0xff]
        %v205 = vld [vmem:[%s194 + $0x48] sm:$0xff]
        %v206 = vld [vmem:[%s194 + $0x50] sm:$0xff]
        %v207 = vld [vmem:[%s194 + $0x58] sm:$0xff]
        %v208 = vld [vmem:[%s194 + $0x60] sm:$0xff]
        %v209 = vld [vmem:[%s194 + $0x68] sm:$0xff]
        %v210 = vld [vmem:[%s194 + $0x70] sm:$0xff]
        %v211 = vld [vmem:[%s194 + $0x78] sm:$0xff]
        %v212 = vld [vmem:[%s194 + $0x80] sm:$0xff]
        %v213 = vld [vmem:[%s194 + $0x88] sm:$0xff]
        %v214 = vld [vmem:[%s194 + $0x90] sm:$0xff]
        %v215 = vld [vmem:[%s194 + $0x98] sm:$0xff]
        %v216 = vld [vmem:[%s194 + $0xa0] sm:$0xff]
        %v217 = vld [vmem:[%s194 + $0xa8] sm:$0xff]
        %v218 = vld [vmem:[%s194 + $0xb0] sm:$0xff]
        %v219 = vld [vmem:[%s194 + $0xb8] sm:$0xff]
        %v220 = vld [vmem:[%s194 + $0xc0] sm:$0xff]
        %v221 = vld [vmem:[%s194 + $0xc8] sm:$0xff]
        %v222 = vld [vmem:[%s194 + $0xd0] sm:$0xff]
        %v223 = vld [vmem:[%s194 + $0xd8] sm:$0xff]
        %v224 = vld [vmem:[%s194 + $0xe0] sm:$0xff]
        %v225 = vld [vmem:[%s194 + $0xe8] sm:$0xff]
        %v226 = vld [vmem:[%s194 + $0xf0] sm:$0xff]
        %v227 = vld [vmem:[%s194 + $0xf8] sm:$0xff]
        %v228 = vld [vmem:[%s194 + $0x100] sm:$0xff]
        %v229 = vld [vmem:[%s194 + $0x108] sm:$0xff]
        %v230 = vld [vmem:[%s194 + $0x110] sm:$0xff]
        %v231 = vld [vmem:[%s194 + $0x118] sm:$0x3f]
        %v232 = vpack.c.bf16 %v197, %v196
        %v233 = vpack.c.bf16 %v199, %v198
        %v234 = vpack.c.bf16 %v201, %v200
        %v235 = vpack.c.bf16 %v203, %v202
        %v236 = vpack.c.bf16 %v205, %v204
        %v237 = vpack.c.bf16 %v207, %v206
        %v238 = vpack.c.bf16 %v209, %v208
        %v239 = vpack.c.bf16 %v211, %v210
        %v240 = vpack.c.bf16 %v213, %v212
        %v241 = vpack.c.bf16 %v215, %v214
        %v242 = vpack.c.bf16 %v217, %v216
        %v243 = vpack.c.bf16 %v219, %v218
        %v244 = vpack.c.bf16 %v221, %v220
        %v245 = vpack.c.bf16 %v223, %v222
        %v246 = vpack.c.bf16 %v225, %v224
        %v247 = vpack.c.bf16 %v227, %v226
        %v248 = vpack.c.bf16 %v229, %v228
        %v249 = vpack.c.bf16 %v231, %v230
        %v250 = vld [vmem:[%s1] sm:$0x3]
        %v251 = vld [vmem:[%s194 + $0x1] sm:$0xff]
        %v252 = vld [vmem:[%s194 + $0x9] sm:$0xff]
        %v253 = vld [vmem:[%s194 + $0x11] sm:$0xff]
        %v254 = vld [vmem:[%s194 + $0x19] sm:$0xff]
        %v255 = vld [vmem:[%s194 + $0x21] sm:$0xff]
        %v256 = vld [vmem:[%s194 + $0x29] sm:$0xff]
        %v257 = vld [vmem:[%s194 + $0x31] sm:$0xff]
        %v258 = vld [vmem:[%s194 + $0x39] sm:$0xff]
        %v259 = vld [vmem:[%s194 + $0x41] sm:$0xff]
        %v260 = vld [vmem:[%s194 + $0x49] sm:$0xff]
        %v261 = vld [vmem:[%s194 + $0x51] sm:$0xff]
        %v262 = vld [vmem:[%s194 + $0x59] sm:$0xff]
        %v263 = vld [vmem:[%s194 + $0x61] sm:$0xff]
        %v264 = vld [vmem:[%s194 + $0x69] sm:$0xff]
        %v265 = vld [vmem:[%s194 + $0x71] sm:$0xff]
        %v266 = vld [vmem:[%s194 + $0x79] sm:$0xff]
        %v267 = vld [vmem:[%s194 + $0x81] sm:$0xff]
        %v268 = vld [vmem:[%s194 + $0x89] sm:$0xff]
        %v269 = vld [vmem:[%s194 + $0x91] sm:$0xff]
        %v270 = vld [vmem:[%s194 + $0x99] sm:$0xff]
        %v271 = vld [vmem:[%s194 + $0xa1] sm:$0xff]
        %v272 = vld [vmem:[%s194 + $0xa9] sm:$0xff]
        %v273 = vld [vmem:[%s194 + $0xb1] sm:$0xff]
        %v274 = vld [vmem:[%s194 + $0xb9] sm:$0xff]
        %v275 = vld [vmem:[%s194 + $0xc1] sm:$0xff]
        %v276 = vld [vmem:[%s194 + $0xc9] sm:$0xff]
        %v277 = vld [vmem:[%s194 + $0xd1] sm:$0xff]
        %v278 = vld [vmem:[%s194 + $0xd9] sm:$0xff]
        %v279 = vld [vmem:[%s194 + $0xe1] sm:$0xff]
        %v280 = vld [vmem:[%s194 + $0xe9] sm:$0xff]
        %v281 = vld [vmem:[%s194 + $0xf1] sm:$0xff]
        %v282 = vld [vmem:[%s194 + $0xf9] sm:$0xff]
        %v283 = vld [vmem:[%s194 + $0x101] sm:$0xff]
        %v284 = vld [vmem:[%s194 + $0x109] sm:$0xff]
        %v285 = vld [vmem:[%s194 + $0x111] sm:$0xff]
        %v286 = vld [vmem:[%s194 + $0x119] sm:$0x3f]
        %v287 = vpack.c.bf16 %v252, %v251
        %v288 = vpack.c.bf16 %v254, %v253
        %v289 = vpack.c.bf16 %v256, %v255
        %v290 = vpack.c.bf16 %v258, %v257
        %v291 = vpack.c.bf16 %v260, %v259
        %v292 = vpack.c.bf16 %v262, %v261
        %v293 = vpack.c.bf16 %v264, %v263
        %v294 = vpack.c.bf16 %v266, %v265
        %v295 = vpack.c.bf16 %v268, %v267
        %v296 = vpack.c.bf16 %v270, %v269
        %v297 = vpack.c.bf16 %v272, %v271
        %v298 = vpack.c.bf16 %v274, %v273
        %v299 = vpack.c.bf16 %v276, %v275
        %v300 = vpack.c.bf16 %v278, %v277
        %v301 = vpack.c.bf16 %v280, %v279
        %v302 = vpack.c.bf16 %v282, %v281
        %v303 = vpack.c.bf16 %v284, %v283
        %v304 = vpack.c.bf16 %v286, %v285
        %s305 = scalar_lea.vmem %s1, 2
        %v306 = vld [vmem:[%s305] sm:$0x3]
        %vm307 = vcmask 31744
        %v309 = vsel %vm307, %v287, 0
        %v312 = vsel %vm307, %v288, 0
        %v315 = vsel %vm307, %v289, 0
        %v318 = vsel %vm307, %v290, 0
        %v321 = vsel %vm307, %v291, 0
        %v324 = vsel %vm307, %v292, 0
        %v327 = vsel %vm307, %v293, 0
        %v330 = vsel %vm307, %v294, 0
        %v333 = vsel %vm307, %v295, 0
        %v336 = vsel %vm307, %v296, 0
        %v339 = vsel %vm307, %v297, 0
        %v342 = vsel %vm307, %v298, 0
        %v345 = vsel %vm307, %v299, 0
        %v348 = vsel %vm307, %v300, 0
        %v351 = vsel %vm307, %v301, 0
        %v354 = vsel %vm307, %v302, 0
        %v357 = vsel %vm307, %v303, 0
        %v360 = vsel %vm307, %v304, 0
        %vm362 = vcmask 1041408
        %v364 = vsel %vm362, %v306, 0
        %366 = vmatprep.subr.bf16.mxu0 0
        %367 = vmatpush1.bf16.msra.mxu0 0
        %368 = vmatprep.subr.bf16.mxu0 0
        %369 = vmatpush1.bf16.msra.mxu0 0
        %370 = vmatprep.subr.bf16.mxu0 0
        %371 = vmatpush1.bf16.msra.mxu0 0
        %372 = vmatprep.subr.bf16.mxu0 0
        %373 = vmatpush1.bf16.msra.mxu0 0
        %374 = vmatprep.subr.bf16.mxu0 0
        %375 = vmatpush1.bf16.msra.mxu0 0
        %376 = vmatprep.subr.bf16.mxu0 0
        %377 = vmatpush1.bf16.msra.mxu0 0
        %378 = vmatprep.subr.bf16.mxu0 0
        %379 = vmatpush1.bf16.msra.mxu0 0
        %380 = vmatprep.subr.bf16.mxu0 0
        %381 = vmatpush1.bf16.msra.mxu0 %v364
        %382 = vmatprep.subr.bf16.mxu0 0
        %383 = vmatpush2.bf16.msra.mxu0 0
        %384 = vmatprep.subr.bf16.mxu0 0
        %385 = vmatpush2.bf16.msra.mxu0 0
        %386 = vmatprep.subr.bf16.mxu0 0
        %387 = vmatpush2.bf16.msra.mxu0 0
        %388 = vmatprep.subr.bf16.mxu0 0
        %389 = vmatpush2.bf16.msra.mxu0 0
        %390 = vmatprep.subr.bf16.mxu0 0
        %391 = vmatpush2.bf16.msra.mxu0 0
        %392 = vmatprep.subr.bf16.mxu0 0
        %393 = vmatpush2.bf16.msra.mxu0 0
        %394 = vmatprep.subr.bf16.mxu0 0
        %395 = vmatpush2.bf16.msra.mxu0 0
        %396 = vmatprep.subr.bf16.mxu0 0
        %397 = vmatpush2.bf16.msra.mxu0 0
        %398 = vmatprep.mubr.bf16.mxu0 0
        %399 = vmatmul.mubr.bf16.gmra.mxu0 %v309
        %v400 = vpop.f32.mrf.mxu0
        %v401 = vadd.f32 0.0, %v400
        %v402 = vpop.f32.mrf.mxu0
        %v403 = vpop.f32.mrf.mxu0
        %v404 = vadd.f32 0.0, %v403
        %v405 = vpop.f32.mrf.mxu0
        %406 = vmatprep.mubr.bf16.mxu0 0
        %407 = vmatmul.mubr.bf16.gmra.mxu0 %v312
        %v408 = vpop.f32.mrf.mxu0
        %v409 = vadd.f32 0.0, %v408
        %v410 = vpop.f32.mrf.mxu0
        %v411 = vpop.f32.mrf.mxu0
        %v412 = vadd.f32 0.0, %v411
        %v413 = vpop.f32.mrf.mxu0
        %414 = vmatprep.mubr.bf16.mxu0 0
        %415 = vmatmul.mubr.bf16.gmra.mxu0 %v315
        %v416 = vpop.f32.mrf.mxu0
        %v417 = vadd.f32 0.0, %v416
        %v418 = vpop.f32.mrf.mxu0
        %v419 = vpop.f32.mrf.mxu0
        %v420 = vadd.f32 0.0, %v419
        %v421 = vpop.f32.mrf.mxu0
        %422 = vmatprep.mubr.bf16.mxu0 0
        %423 = vmatmul.mubr.bf16.gmra.mxu0 %v318
        %v424 = vpop.f32.mrf.mxu0
        %v425 = vadd.f32 0.0, %v424
        %v426 = vpop.f32.mrf.mxu0
        %v427 = vpop.f32.mrf.mxu0
        %v428 = vadd.f32 0.0, %v427
        %v429 = vpop.f32.mrf.mxu0
        %430 = vmatprep.mubr.bf16.mxu0 0
        %431 = vmatmul.mubr.bf16.gmra.mxu0 %v321
        %v432 = vpop.f32.mrf.mxu0
        %v433 = vadd.f32 0.0, %v432
        %v434 = vpop.f32.mrf.mxu0
        %v435 = vpop.f32.mrf.mxu0
        %v436 = vadd.f32 0.0, %v435
        %v437 = vpop.f32.mrf.mxu0
        %438 = vmatprep.mubr.bf16.mxu0 0
        %439 = vmatmul.mubr.bf16.gmra.mxu0 %v324
        %v440 = vpop.f32.mrf.mxu0
        %v441 = vadd.f32 0.0, %v440
        %v442 = vpop.f32.mrf.mxu0
        %v443 = vpop.f32.mrf.mxu0
        %v444 = vadd.f32 0.0, %v443
        %v445 = vpop.f32.mrf.mxu0
        %446 = vmatprep.mubr.bf16.mxu0 0
        %447 = vmatmul.mubr.bf16.gmra.mxu0 %v327
        %v448 = vpop.f32.mrf.mxu0
        %v449 = vadd.f32 0.0, %v448
        %v450 = vpop.f32.mrf.mxu0
        %v451 = vpop.f32.mrf.mxu0
        %v452 = vadd.f32 0.0, %v451
        %v453 = vpop.f32.mrf.mxu0
        %454 = vmatprep.mubr.bf16.mxu0 0
        %455 = vmatmul.mubr.bf16.gmra.mxu0 %v330
        %v456 = vpop.f32.mrf.mxu0
        %v457 = vadd.f32 0.0, %v456
        %v458 = vpop.f32.mrf.mxu0
        %v459 = vpop.f32.mrf.mxu0
        %v460 = vadd.f32 0.0, %v459
        %v461 = vpop.f32.mrf.mxu0
        %462 = vmatprep.mubr.bf16.mxu0 0
        %463 = vmatmul.mubr.bf16.gmra.mxu0 %v333
        %v464 = vpop.f32.mrf.mxu0
        %v465 = vadd.f32 0.0, %v464
        %v466 = vpop.f32.mrf.mxu0
        %v467 = vpop.f32.mrf.mxu0
        %v468 = vadd.f32 0.0, %v467
        %v469 = vpop.f32.mrf.mxu0
        %470 = vmatprep.mubr.bf16.mxu0 0
        %471 = vmatmul.mubr.bf16.gmra.mxu0 %v336
        %v472 = vpop.f32.mrf.mxu0
        %v473 = vadd.f32 0.0, %v472
        %v474 = vpop.f32.mrf.mxu0
        %v475 = vpop.f32.mrf.mxu0
        %v476 = vadd.f32 0.0, %v475
        %v477 = vpop.f32.mrf.mxu0
        %478 = vmatprep.mubr.bf16.mxu0 0
        %479 = vmatmul.mubr.bf16.gmra.mxu0 %v339
        %v480 = vpop.f32.mrf.mxu0
        %v481 = vadd.f32 0.0, %v480
        %v482 = vpop.f32.mrf.mxu0
        %v483 = vpop.f32.mrf.mxu0
        %v484 = vadd.f32 0.0, %v483
        %v485 = vpop.f32.mrf.mxu0
        %486 = vmatprep.mubr.bf16.mxu0 0
        %487 = vmatmul.mubr.bf16.gmra.mxu0 %v342
        %v488 = vpop.f32.mrf.mxu0
        %v489 = vadd.f32 0.0, %v488
        %v490 = vpop.f32.mrf.mxu0
        %v491 = vpop.f32.mrf.mxu0
        %v492 = vadd.f32 0.0, %v491
        %v493 = vpop.f32.mrf.mxu0
        %494 = vmatprep.mubr.bf16.mxu0 0
        %495 = vmatmul.mubr.bf16.gmra.mxu0 %v345
        %v496 = vpop.f32.mrf.mxu0
        %v497 = vadd.f32 0.0, %v496
        %v498 = vpop.f32.mrf.mxu0
        %v499 = vpop.f32.mrf.mxu0
        %v500 = vadd.f32 0.0, %v499
        %v501 = vpop.f32.mrf.mxu0
        %502 = vmatprep.mubr.bf16.mxu0 0
        %503 = vmatmul.mubr.bf16.gmra.mxu0 %v348
        %v504 = vpop.f32.mrf.mxu0
        %v505 = vadd.f32 0.0, %v504
        %v506 = vpop.f32.mrf.mxu0
        %v507 = vpop.f32.mrf.mxu0
        %v508 = vadd.f32 0.0, %v507
        %v509 = vpop.f32.mrf.mxu0
        %510 = vmatprep.mubr.bf16.mxu0 0
        %511 = vmatmul.mubr.bf16.gmra.mxu0 %v351
        %v512 = vpop.f32.mrf.mxu0
        %v513 = vadd.f32 0.0, %v512
        %v514 = vpop.f32.mrf.mxu0
        %v515 = vpop.f32.mrf.mxu0
        %v516 = vadd.f32 0.0, %v515
        %v517 = vpop.f32.mrf.mxu0
        %518 = vmatprep.mubr.bf16.mxu0 0
        %519 = vmatmul.mubr.bf16.gmra.mxu0 %v354
        %v520 = vpop.f32.mrf.mxu0
        %v521 = vadd.f32 0.0, %v520
        %v522 = vpop.f32.mrf.mxu0
        %v523 = vpop.f32.mrf.mxu0
        %v524 = vadd.f32 0.0, %v523
        %v525 = vpop.f32.mrf.mxu0
        %526 = vmatprep.mubr.bf16.mxu0 0
        %527 = vmatmul.mubr.bf16.gmra.mxu0 %v357
        %v528 = vpop.f32.mrf.mxu0
        %v529 = vadd.f32 0.0, %v528
        %v530 = vpop.f32.mrf.mxu0
        %v531 = vpop.f32.mrf.mxu0
        %v532 = vadd.f32 0.0, %v531
        %v533 = vpop.f32.mrf.mxu0
        %534 = vmatprep.mubr.bf16.mxu0 0
        %535 = vmatmul.mubr.bf16.gmra.mxu0 %v360
        %v536 = vpop.f32.mrf.mxu0
        %v537 = vadd.f32 0.0, %v536
        %v538 = vpop.f32.mrf.mxu0
        %v539 = vpop.f32.mrf.mxu0
        %v540 = vadd.f32 0.0, %v539
        %v541 = vpop.f32.mrf.mxu0
        %542 = vdwg.mxu0
        %v544 = vsel %vm307, %v232, 0
        %v547 = vsel %vm307, %v233, 0
        %v550 = vsel %vm307, %v234, 0
        %v553 = vsel %vm307, %v235, 0
        %v556 = vsel %vm307, %v236, 0
        %v559 = vsel %vm307, %v237, 0
        %v562 = vsel %vm307, %v238, 0
        %v565 = vsel %vm307, %v239, 0
        %v568 = vsel %vm307, %v240, 0
        %v571 = vsel %vm307, %v241, 0
        %v574 = vsel %vm307, %v242, 0
        %v577 = vsel %vm307, %v243, 0
        %v580 = vsel %vm307, %v244, 0
        %v583 = vsel %vm307, %v245, 0
        %v586 = vsel %vm307, %v246, 0
        %v589 = vsel %vm307, %v247, 0
        %v592 = vsel %vm307, %v248, 0
        %v595 = vsel %vm307, %v249, 0
        %v598 = vsel %vm362, %v250, 0
        %600 = vmatprep.subr.bf16.mxu0 0
        %601 = vmatpush1.bf16.msra.mxu0 0
        %602 = vmatprep.subr.bf16.mxu0 0
        %603 = vmatpush1.bf16.msra.mxu0 0
        %604 = vmatprep.subr.bf16.mxu0 0
        %605 = vmatpush1.bf16.msra.mxu0 0
        %606 = vmatprep.subr.bf16.mxu0 0
        %607 = vmatpush1.bf16.msra.mxu0 0
        %608 = vmatprep.subr.bf16.mxu0 0
        %609 = vmatpush1.bf16.msra.mxu0 0
        %610 = vmatprep.subr.bf16.mxu0 0
        %611 = vmatpush1.bf16.msra.mxu0 0
        %612 = vmatprep.subr.bf16.mxu0 0
        %613 = vmatpush1.bf16.msra.mxu0 0
        %614 = vmatprep.subr.bf16.mxu0 0
        %615 = vmatpush1.bf16.msra.mxu0 %v598
        %616 = vmatprep.subr.bf16.mxu0 0
        %617 = vmatpush2.bf16.msra.mxu0 0
        %618 = vmatprep.subr.bf16.mxu0 0
        %619 = vmatpush2.bf16.msra.mxu0 0
        %620 = vmatprep.subr.bf16.mxu0 0
        %621 = vmatpush2.bf16.msra.mxu0 0
        %622 = vmatprep.subr.bf16.mxu0 0
        %623 = vmatpush2.bf16.msra.mxu0 0
        %624 = vmatprep.subr.bf16.mxu0 0
        %625 = vmatpush2.bf16.msra.mxu0 0
        %626 = vmatprep.subr.bf16.mxu0 0
        %627 = vmatpush2.bf16.msra.mxu0 0
        %628 = vmatprep.subr.bf16.mxu0 0
        %629 = vmatpush2.bf16.msra.mxu0 0
        %630 = vmatprep.subr.bf16.mxu0 0
        %631 = vmatpush2.bf16.msra.mxu0 0
        %632 = vmatprep.mubr.bf16.mxu0 0
        %633 = vmatmul.mubr.bf16.gmra.mxu0 %v544
        %v634 = vpop.f32.mrf.mxu0
        %v635 = vadd.f32 %v401, %v634
        %v636 = vpop.f32.mrf.mxu0
        %v637 = vpop.f32.mrf.mxu0
        %v638 = vadd.f32 %v404, %v637
        %v639 = vpop.f32.mrf.mxu0
        %640 = vmatprep.mubr.bf16.mxu0 0
        %641 = vmatmul.mubr.bf16.gmra.mxu0 %v547
        %v642 = vpop.f32.mrf.mxu0
        %v643 = vadd.f32 %v409, %v642
        %v644 = vpop.f32.mrf.mxu0
        %v645 = vpop.f32.mrf.mxu0
        %v646 = vadd.f32 %v412, %v645
        %v647 = vpop.f32.mrf.mxu0
        %648 = vmatprep.mubr.bf16.mxu0 0
        %649 = vmatmul.mubr.bf16.gmra.mxu0 %v550
        %v650 = vpop.f32.mrf.mxu0
        %v651 = vadd.f32 %v417, %v650
        %v652 = vpop.f32.mrf.mxu0
        %v653 = vpop.f32.mrf.mxu0
        %v654 = vadd.f32 %v420, %v653
        %v655 = vpop.f32.mrf.mxu0
        %656 = vmatprep.mubr.bf16.mxu0 0
        %657 = vmatmul.mubr.bf16.gmra.mxu0 %v553
        %v658 = vpop.f32.mrf.mxu0
        %v659 = vadd.f32 %v425, %v658
        %v660 = vpop.f32.mrf.mxu0
        %v661 = vpop.f32.mrf.mxu0
        %v662 = vadd.f32 %v428, %v661
        %v663 = vpop.f32.mrf.mxu0
        %664 = vmatprep.mubr.bf16.mxu0 0
        %665 = vmatmul.mubr.bf16.gmra.mxu0 %v556
        %v666 = vpop.f32.mrf.mxu0
        %v667 = vadd.f32 %v433, %v666
        %v668 = vpop.f32.mrf.mxu0
        %v669 = vpop.f32.mrf.mxu0
        %v670 = vadd.f32 %v436, %v669
        %v671 = vpop.f32.mrf.mxu0
        %672 = vmatprep.mubr.bf16.mxu0 0
        %673 = vmatmul.mubr.bf16.gmra.mxu0 %v559
        %v674 = vpop.f32.mrf.mxu0
        %v675 = vadd.f32 %v441, %v674
        %v676 = vpop.f32.mrf.mxu0
        %v677 = vpop.f32.mrf.mxu0
        %v678 = vadd.f32 %v444, %v677
        %v679 = vpop.f32.mrf.mxu0
        %680 = vmatprep.mubr.bf16.mxu0 0
        %681 = vmatmul.mubr.bf16.gmra.mxu0 %v562
        %v682 = vpop.f32.mrf.mxu0
        %v683 = vadd.f32 %v449, %v682
        %v684 = vpop.f32.mrf.mxu0
        %v685 = vpop.f32.mrf.mxu0
        %v686 = vadd.f32 %v452, %v685
        %v687 = vpop.f32.mrf.mxu0
        %688 = vmatprep.mubr.bf16.mxu0 0
        %689 = vmatmul.mubr.bf16.gmra.mxu0 %v565
        %v690 = vpop.f32.mrf.mxu0
        %v691 = vadd.f32 %v457, %v690
        %v692 = vpop.f32.mrf.mxu0
        %v693 = vpop.f32.mrf.mxu0
        %v694 = vadd.f32 %v460, %v693
        %v695 = vpop.f32.mrf.mxu0
        %696 = vmatprep.mubr.bf16.mxu0 0
        %697 = vmatmul.mubr.bf16.gmra.mxu0 %v568
        %v698 = vpop.f32.mrf.mxu0
        %v699 = vadd.f32 %v465, %v698
        %v700 = vpop.f32.mrf.mxu0
        %v701 = vpop.f32.mrf.mxu0
        %v702 = vadd.f32 %v468, %v701
        %v703 = vpop.f32.mrf.mxu0
        %704 = vmatprep.mubr.bf16.mxu0 0
        %705 = vmatmul.mubr.bf16.gmra.mxu0 %v571
        %v706 = vpop.f32.mrf.mxu0
        %v707 = vadd.f32 %v473, %v706
        %v708 = vpop.f32.mrf.mxu0
        %v709 = vpop.f32.mrf.mxu0
        %v710 = vadd.f32 %v476, %v709
        %v711 = vpop.f32.mrf.mxu0
        %712 = vmatprep.mubr.bf16.mxu0 0
        %713 = vmatmul.mubr.bf16.gmra.mxu0 %v574
        %v714 = vpop.f32.mrf.mxu0
        %v715 = vadd.f32 %v481, %v714
        %v716 = vpop.f32.mrf.mxu0
        %v717 = vpop.f32.mrf.mxu0
        %v718 = vadd.f32 %v484, %v717
        %v719 = vpop.f32.mrf.mxu0
        %720 = vmatprep.mubr.bf16.mxu0 0
        %721 = vmatmul.mubr.bf16.gmra.mxu0 %v577
        %v722 = vpop.f32.mrf.mxu0
        %v723 = vadd.f32 %v489, %v722
        %v724 = vpop.f32.mrf.mxu0
        %v725 = vpop.f32.mrf.mxu0
        %v726 = vadd.f32 %v492, %v725
        %v727 = vpop.f32.mrf.mxu0
        %728 = vmatprep.mubr.bf16.mxu0 0
        %729 = vmatmul.mubr.bf16.gmra.mxu0 %v580
        %v730 = vpop.f32.mrf.mxu0
        %v731 = vadd.f32 %v497, %v730
        %v732 = vpop.f32.mrf.mxu0
        %v733 = vpop.f32.mrf.mxu0
        %v734 = vadd.f32 %v500, %v733
        %v735 = vpop.f32.mrf.mxu0
        %736 = vmatprep.mubr.bf16.mxu0 0
        %737 = vmatmul.mubr.bf16.gmra.mxu0 %v583
        %v738 = vpop.f32.mrf.mxu0
        %v739 = vadd.f32 %v505, %v738
        %v740 = vpop.f32.mrf.mxu0
        %v741 = vpop.f32.mrf.mxu0
        %v742 = vadd.f32 %v508, %v741
        %v743 = vpop.f32.mrf.mxu0
        %744 = vmatprep.mubr.bf16.mxu0 0
        %745 = vmatmul.mubr.bf16.gmra.mxu0 %v586
        %v746 = vpop.f32.mrf.mxu0
        %v747 = vadd.f32 %v513, %v746
        %v748 = vpop.f32.mrf.mxu0
        %v749 = vpop.f32.mrf.mxu0
        %v750 = vadd.f32 %v516, %v749
        %v751 = vpop.f32.mrf.mxu0
        %752 = vmatprep.mubr.bf16.mxu0 0
        %753 = vmatmul.mubr.bf16.gmra.mxu0 %v589
        %v754 = vpop.f32.mrf.mxu0
        %v755 = vadd.f32 %v521, %v754
        %v756 = vpop.f32.mrf.mxu0
        %v757 = vpop.f32.mrf.mxu0
        %v758 = vadd.f32 %v524, %v757
        %v759 = vpop.f32.mrf.mxu0
        %760 = vmatprep.mubr.bf16.mxu0 0
        %761 = vmatmul.mubr.bf16.gmra.mxu0 %v592
        %v762 = vpop.f32.mrf.mxu0
        %v763 = vadd.f32 %v529, %v762
        %v764 = vpop.f32.mrf.mxu0
        %v765 = vpop.f32.mrf.mxu0
        %v766 = vadd.f32 %v532, %v765
        %v767 = vpop.f32.mrf.mxu0
        %768 = vmatprep.mubr.bf16.mxu0 0
        %769 = vmatmul.mubr.bf16.gmra.mxu0 %v595
        %v770 = vpop.f32.mrf.mxu0
        %v771 = vadd.f32 %v537, %v770
        %v772 = vpop.f32.mrf.mxu0
        %v773 = vpop.f32.mrf.mxu0
        %v774 = vadd.f32 %v540, %v773
        %v775 = vpop.f32.mrf.mxu0
        %776 = vdwg.mxu0
        %v777 = vld [vmem:[%s194 + $0x2] sm:$0xff]
        %v778 = vld [vmem:[%s194 + $0xa] sm:$0xff]
        %v779 = vld [vmem:[%s194 + $0x12] sm:$0xff]
        %v780 = vld [vmem:[%s194 + $0x1a] sm:$0xff]
        %v781 = vld [vmem:[%s194 + $0x22] sm:$0xff]
        %v782 = vld [vmem:[%s194 + $0x2a] sm:$0xff]
        %v783 = vld [vmem:[%s194 + $0x32] sm:$0xff]
        %v784 = vld [vmem:[%s194 + $0x3a] sm:$0xff]
        %v785 = vld [vmem:[%s194 + $0x42] sm:$0xff]
        %v786 = vld [vmem:[%s194 + $0x4a] sm:$0xff]
        %v787 = vld [vmem:[%s194 + $0x52] sm:$0xff]
        %v788 = vld [vmem:[%s194 + $0x5a] sm:$0xff]
        %v789 = vld [vmem:[%s194 + $0x62] sm:$0xff]
        %v790 = vld [vmem:[%s194 + $0x6a] sm:$0xff]
        %v791 = vld [vmem:[%s194 + $0x72] sm:$0xff]
        %v792 = vld [vmem:[%s194 + $0x7a] sm:$0xff]
        %v793 = vld [vmem:[%s194 + $0x82] sm:$0xff]
        %v794 = vld [vmem:[%s194 + $0x8a] sm:$0xff]
        %v795 = vld [vmem:[%s194 + $0x92] sm:$0xff]
        %v796 = vld [vmem:[%s194 + $0x9a] sm:$0xff]
        %v797 = vld [vmem:[%s194 + $0xa2] sm:$0xff]
        %v798 = vld [vmem:[%s194 + $0xaa] sm:$0xff]
        %v799 = vld [vmem:[%s194 + $0xb2] sm:$0xff]
        %v800 = vld [vmem:[%s194 + $0xba] sm:$0xff]
        %v801 = vld [vmem:[%s194 + $0xc2] sm:$0xff]
        %v802 = vld [vmem:[%s194 + $0xca] sm:$0xff]
        %v803 = vld [vmem:[%s194 + $0xd2] sm:$0xff]
        %v804 = vld [vmem:[%s194 + $0xda] sm:$0xff]
        %v805 = vld [vmem:[%s194 + $0xe2] sm:$0xff]
        %v806 = vld [vmem:[%s194 + $0xea] sm:$0xff]
        %v807 = vld [vmem:[%s194 + $0xf2] sm:$0xff]
        %v808 = vld [vmem:[%s194 + $0xfa] sm:$0xff]
        %v809 = vld [vmem:[%s194 + $0x102] sm:$0xff]
        %v810 = vld [vmem:[%s194 + $0x10a] sm:$0xff]
        %v811 = vld [vmem:[%s194 + $0x112] sm:$0xff]
        %v812 = vld [vmem:[%s194 + $0x11a] sm:$0x3f]
        %v813 = vpack.c.bf16 %v778, %v777
        %v814 = vpack.c.bf16 %v780, %v779
        %v815 = vpack.c.bf16 %v782, %v781
        %v816 = vpack.c.bf16 %v784, %v783
        %v817 = vpack.c.bf16 %v786, %v785
        %v818 = vpack.c.bf16 %v788, %v787
        %v819 = vpack.c.bf16 %v790, %v789
        %v820 = vpack.c.bf16 %v792, %v791
        %v821 = vpack.c.bf16 %v794, %v793
        %v822 = vpack.c.bf16 %v796, %v795
        %v823 = vpack.c.bf16 %v798, %v797
        %v824 = vpack.c.bf16 %v800, %v799
        %v825 = vpack.c.bf16 %v802, %v801
        %v826 = vpack.c.bf16 %v804, %v803
        %v827 = vpack.c.bf16 %v806, %v805
        %v828 = vpack.c.bf16 %v808, %v807
        %v829 = vpack.c.bf16 %v810, %v809
        %v830 = vpack.c.bf16 %v812, %v811
        %s831 = scalar_lea.vmem %s1, 4
        %v832 = vld [vmem:[%s831] sm:$0x3]
        %v834 = vsel %vm307, %v813, 0
        %v837 = vsel %vm307, %v814, 0
        %v840 = vsel %vm307, %v815, 0
        %v843 = vsel %vm307, %v816, 0
        %v846 = vsel %vm307, %v817, 0
        %v849 = vsel %vm307, %v818, 0
        %v852 = vsel %vm307, %v819, 0
        %v855 = vsel %vm307, %v820, 0
        %v858 = vsel %vm307, %v821, 0
        %v861 = vsel %vm307, %v822, 0
        %v864 = vsel %vm307, %v823, 0
        %v867 = vsel %vm307, %v824, 0
        %v870 = vsel %vm307, %v825, 0
        %v873 = vsel %vm307, %v826, 0
        %v876 = vsel %vm307, %v827, 0
        %v879 = vsel %vm307, %v828, 0
        %v882 = vsel %vm307, %v829, 0
        %v885 = vsel %vm307, %v830, 0
        %v888 = vsel %vm362, %v832, 0
        %890 = vmatprep.subr.bf16.mxu0 0
        %891 = vmatpush1.bf16.msra.mxu0 0
        %892 = vmatprep.subr.bf16.mxu0 0
        %893 = vmatpush1.bf16.msra.mxu0 0
        %894 = vmatprep.subr.bf16.mxu0 0
        %895 = vmatpush1.bf16.msra.mxu0 0
        %896 = vmatprep.subr.bf16.mxu0 0
        %897 = vmatpush1.bf16.msra.mxu0 0
        %898 = vmatprep.subr.bf16.mxu0 0
        %899 = vmatpush1.bf16.msra.mxu0 0
        %900 = vmatprep.subr.bf16.mxu0 0
        %901 = vmatpush1.bf16.msra.mxu0 0
        %902 = vmatprep.subr.bf16.mxu0 0
        %903 = vmatpush1.bf16.msra.mxu0 0
        %904 = vmatprep.subr.bf16.mxu0 0
        %905 = vmatpush1.bf16.msra.mxu0 %v888
        %906 = vmatprep.subr.bf16.mxu0 0
        %907 = vmatpush2.bf16.msra.mxu0 0
        %908 = vmatprep.subr.bf16.mxu0 0
        %909 = vmatpush2.bf16.msra.mxu0 0
        %910 = vmatprep.subr.bf16.mxu0 0
        %911 = vmatpush2.bf16.msra.mxu0 0
        %912 = vmatprep.subr.bf16.mxu0 0
        %913 = vmatpush2.bf16.msra.mxu0 0
        %914 = vmatprep.subr.bf16.mxu0 0
        %915 = vmatpush2.bf16.msra.mxu0 0
        %916 = vmatprep.subr.bf16.mxu0 0
        %917 = vmatpush2.bf16.msra.mxu0 0
        %918 = vmatprep.subr.bf16.mxu0 0
        %919 = vmatpush2.bf16.msra.mxu0 0
        %920 = vmatprep.subr.bf16.mxu0 0
        %921 = vmatpush2.bf16.msra.mxu0 0
        %922 = vmatprep.mubr.bf16.mxu0 0
        %923 = vmatmul.mubr.bf16.gmra.mxu0 %v834
        %v924 = vpop.f32.mrf.mxu0
        %v925 = vadd.f32 0.0, %v924
        %v926 = vpop.f32.mrf.mxu0
        %v927 = vpop.f32.mrf.mxu0
        %v928 = vadd.f32 0.0, %v927
        %v929 = vpop.f32.mrf.mxu0
        %930 = vmatprep.mubr.bf16.mxu0 0
        %931 = vmatmul.mubr.bf16.gmra.mxu0 %v837
        %v932 = vpop.f32.mrf.mxu0
        %v933 = vadd.f32 0.0, %v932
        %v934 = vpop.f32.mrf.mxu0
        %v935 = vpop.f32.mrf.mxu0
        %v936 = vadd.f32 0.0, %v935
        %v937 = vpop.f32.mrf.mxu0
        %938 = vmatprep.mubr.bf16.mxu0 0
        %939 = vmatmul.mubr.bf16.gmra.mxu0 %v840
        %v940 = vpop.f32.mrf.mxu0
        %v941 = vadd.f32 0.0, %v940
        %v942 = vpop.f32.mrf.mxu0
        %v943 = vpop.f32.mrf.mxu0
        %v944 = vadd.f32 0.0, %v943
        %v945 = vpop.f32.mrf.mxu0
        %946 = vmatprep.mubr.bf16.mxu0 0
        %947 = vmatmul.mubr.bf16.gmra.mxu0 %v843
        %v948 = vpop.f32.mrf.mxu0
        %v949 = vadd.f32 0.0, %v948
        %v950 = vpop.f32.mrf.mxu0
        %v951 = vpop.f32.mrf.mxu0
        %v952 = vadd.f32 0.0, %v951
        %v953 = vpop.f32.mrf.mxu0
        %954 = vmatprep.mubr.bf16.mxu0 0
        %955 = vmatmul.mubr.bf16.gmra.mxu0 %v846
        %v956 = vpop.f32.mrf.mxu0
        %v957 = vadd.f32 0.0, %v956
        %v958 = vpop.f32.mrf.mxu0
        %v959 = vpop.f32.mrf.mxu0
        %v960 = vadd.f32 0.0, %v959
        %v961 = vpop.f32.mrf.mxu0
        %962 = vmatprep.mubr.bf16.mxu0 0
        %963 = vmatmul.mubr.bf16.gmra.mxu0 %v849
        %v964 = vpop.f32.mrf.mxu0
        %v965 = vadd.f32 0.0, %v964
        %v966 = vpop.f32.mrf.mxu0
        %v967 = vpop.f32.mrf.mxu0
        %v968 = vadd.f32 0.0, %v967
        %v969 = vpop.f32.mrf.mxu0
        %970 = vmatprep.mubr.bf16.mxu0 0
        %971 = vmatmul.mubr.bf16.gmra.mxu0 %v852
        %v972 = vpop.f32.mrf.mxu0
        %v973 = vadd.f32 0.0, %v972
        %v974 = vpop.f32.mrf.mxu0
        %v975 = vpop.f32.mrf.mxu0
        %v976 = vadd.f32 0.0, %v975
        %v977 = vpop.f32.mrf.mxu0
        %978 = vmatprep.mubr.bf16.mxu0 0
        %979 = vmatmul.mubr.bf16.gmra.mxu0 %v855
        %v980 = vpop.f32.mrf.mxu0
        %v981 = vadd.f32 0.0, %v980
        %v982 = vpop.f32.mrf.mxu0
        %v983 = vpop.f32.mrf.mxu0
        %v984 = vadd.f32 0.0, %v983
        %v985 = vpop.f32.mrf.mxu0
        %986 = vmatprep.mubr.bf16.mxu0 0
        %987 = vmatmul.mubr.bf16.gmra.mxu0 %v858
        %v988 = vpop.f32.mrf.mxu0
        %v989 = vadd.f32 0.0, %v988
        %v990 = vpop.f32.mrf.mxu0
        %v991 = vpop.f32.mrf.mxu0
        %v992 = vadd.f32 0.0, %v991
        %v993 = vpop.f32.mrf.mxu0
        %994 = vmatprep.mubr.bf16.mxu0 0
        %995 = vmatmul.mubr.bf16.gmra.mxu0 %v861
        %v996 = vpop.f32.mrf.mxu0
        %v997 = vadd.f32 0.0, %v996
        %v998 = vpop.f32.mrf.mxu0
        %v999 = vpop.f32.mrf.mxu0
        %v1000 = vadd.f32 0.0, %v999
        %v1001 = vpop.f32.mrf.mxu0
        %1002 = vmatprep.mubr.bf16.mxu0 0
        %1003 = vmatmul.mubr.bf16.gmra.mxu0 %v864
        %v1004 = vpop.f32.mrf.mxu0
        %v1005 = vadd.f32 0.0, %v1004
        %v1006 = vpop.f32.mrf.mxu0
        %v1007 = vpop.f32.mrf.mxu0
        %v1008 = vadd.f32 0.0, %v1007
        %v1009 = vpop.f32.mrf.mxu0
        %1010 = vmatprep.mubr.bf16.mxu0 0
        %1011 = vmatmul.mubr.bf16.gmra.mxu0 %v867
        %v1012 = vpop.f32.mrf.mxu0
        %v1013 = vadd.f32 0.0, %v1012
        %v1014 = vpop.f32.mrf.mxu0
        %v1015 = vpop.f32.mrf.mxu0
        %v1016 = vadd.f32 0.0, %v1015
        %v1017 = vpop.f32.mrf.mxu0
        %1018 = vmatprep.mubr.bf16.mxu0 0
        %1019 = vmatmul.mubr.bf16.gmra.mxu0 %v870
        %v1020 = vpop.f32.mrf.mxu0
        %v1021 = vadd.f32 0.0, %v1020
        %v1022 = vpop.f32.mrf.mxu0
        %v1023 = vpop.f32.mrf.mxu0
        %v1024 = vadd.f32 0.0, %v1023
        %v1025 = vpop.f32.mrf.mxu0
        %1026 = vmatprep.mubr.bf16.mxu0 0
        %1027 = vmatmul.mubr.bf16.gmra.mxu0 %v873
        %v1028 = vpop.f32.mrf.mxu0
        %v1029 = vadd.f32 0.0, %v1028
        %v1030 = vpop.f32.mrf.mxu0
        %v1031 = vpop.f32.mrf.mxu0
        %v1032 = vadd.f32 0.0, %v1031
        %v1033 = vpop.f32.mrf.mxu0
        %1034 = vmatprep.mubr.bf16.mxu0 0
        %1035 = vmatmul.mubr.bf16.gmra.mxu0 %v876
        %v1036 = vpop.f32.mrf.mxu0
        %v1037 = vadd.f32 0.0, %v1036
        %v1038 = vpop.f32.mrf.mxu0
        %v1039 = vpop.f32.mrf.mxu0
        %v1040 = vadd.f32 0.0, %v1039
        %v1041 = vpop.f32.mrf.mxu0
        %1042 = vmatprep.mubr.bf16.mxu0 0
        %1043 = vmatmul.mubr.bf16.gmra.mxu0 %v879
        %v1044 = vpop.f32.mrf.mxu0
        %v1045 = vadd.f32 0.0, %v1044
        %v1046 = vpop.f32.mrf.mxu0
        %v1047 = vpop.f32.mrf.mxu0
        %v1048 = vadd.f32 0.0, %v1047
        %v1049 = vpop.f32.mrf.mxu0
        %1050 = vmatprep.mubr.bf16.mxu0 0
        %1051 = vmatmul.mubr.bf16.gmra.mxu0 %v882
        %v1052 = vpop.f32.mrf.mxu0
        %v1053 = vadd.f32 0.0, %v1052
        %v1054 = vpop.f32.mrf.mxu0
        %v1055 = vpop.f32.mrf.mxu0
        %v1056 = vadd.f32 0.0, %v1055
        %v1057 = vpop.f32.mrf.mxu0
        %1058 = vmatprep.mubr.bf16.mxu0 0
        %1059 = vmatmul.mubr.bf16.gmra.mxu0 %v885
        %v1060 = vpop.f32.mrf.mxu0
        %v1061 = vadd.f32 0.0, %v1060
        %v1062 = vpop.f32.mrf.mxu0
        %v1063 = vpop.f32.mrf.mxu0
        %v1064 = vadd.f32 0.0, %v1063
        %v1065 = vpop.f32.mrf.mxu0
        %1066 = vdwg.mxu0
        %v1067 = vadd.f32 %v635, %v925
        %v1068 = vadd.f32 %v638, %v928
        %v1069 = vadd.f32 %v643, %v933
        %v1070 = vadd.f32 %v646, %v936
        %v1071 = vadd.f32 %v651, %v941
        %v1072 = vadd.f32 %v654, %v944
        %v1073 = vadd.f32 %v659, %v949
        %v1074 = vadd.f32 %v662, %v952
        %v1075 = vadd.f32 %v667, %v957
        %v1076 = vadd.f32 %v670, %v960
        %v1077 = vadd.f32 %v675, %v965
        %v1078 = vadd.f32 %v678, %v968
        %v1079 = vadd.f32 %v683, %v973
        %v1080 = vadd.f32 %v686, %v976
        %v1081 = vadd.f32 %v691, %v981
        %v1082 = vadd.f32 %v694, %v984
        %v1083 = vadd.f32 %v699, %v989
        %v1084 = vadd.f32 %v702, %v992
        %v1085 = vadd.f32 %v707, %v997
        %v1086 = vadd.f32 %v710, %v1000
        %v1087 = vadd.f32 %v715, %v1005
        %v1088 = vadd.f32 %v718, %v1008
        %v1089 = vadd.f32 %v723, %v1013
        %v1090 = vadd.f32 %v726, %v1016
        %v1091 = vadd.f32 %v731, %v1021
        %v1092 = vadd.f32 %v734, %v1024
        %v1093 = vadd.f32 %v739, %v1029
        %v1094 = vadd.f32 %v742, %v1032
        %v1095 = vadd.f32 %v747, %v1037
        %v1096 = vadd.f32 %v750, %v1040
        %v1097 = vadd.f32 %v755, %v1045
        %v1098 = vadd.f32 %v758, %v1048
        %v1099 = vadd.f32 %v763, %v1053
        %v1100 = vadd.f32 %v766, %v1056
        %v1101 = vadd.f32 %v771, %v1061
        %v1102 = vadd.f32 %v774, %v1064
        %v1103 = vld [vmem:[%s194 + $0x12] sm:$0xff]
        %v1104 = vld [vmem:[%s194 + $0x1a] sm:$0xff]
        %v1105 = vld [vmem:[%s194 + $0x22] sm:$0xff]
        %v1106 = vld [vmem:[%s194 + $0x2a] sm:$0xff]
        %v1107 = vld [vmem:[%s194 + $0x32] sm:$0xff]
        %v1108 = vld [vmem:[%s194 + $0x3a] sm:$0xff]
        %v1109 = vld [vmem:[%s194 + $0x42] sm:$0xff]
        %v1110 = vld [vmem:[%s194 + $0x4a] sm:$0xff]
        %v1111 = vld [vmem:[%s194 + $0x52] sm:$0xff]
        %v1112 = vld [vmem:[%s194 + $0x5a] sm:$0xff]
        %v1113 = vld [vmem:[%s194 + $0x62] sm:$0xff]
        %v1114 = vld [vmem:[%s194 + $0x6a] sm:$0xff]
        %v1115 = vld [vmem:[%s194 + $0x72] sm:$0xff]
        %v1116 = vld [vmem:[%s194 + $0x7a] sm:$0xff]
        %v1117 = vld [vmem:[%s194 + $0x82] sm:$0xff]
        %v1118 = vld [vmem:[%s194 + $0x8a] sm:$0xff]
        %v1119 = vld [vmem:[%s194 + $0x92] sm:$0xff]
        %v1120 = vld [vmem:[%s194 + $0x9a] sm:$0xff]
        %v1121 = vld [vmem:[%s194 + $0xa2] sm:$0xff]
        %v1122 = vld [vmem:[%s194 + $0xaa] sm:$0xff]
        %v1123 = vld [vmem:[%s194 + $0xb2] sm:$0xff]
        %v1124 = vld [vmem:[%s194 + $0xba] sm:$0xff]
        %v1125 = vld [vmem:[%s194 + $0xc2] sm:$0xff]
        %v1126 = vld [vmem:[%s194 + $0xca] sm:$0xff]
        %v1127 = vld [vmem:[%s194 + $0xd2] sm:$0xff]
        %v1128 = vld [vmem:[%s194 + $0xda] sm:$0xff]
        %v1129 = vld [vmem:[%s194 + $0xe2] sm:$0xff]
        %v1130 = vld [vmem:[%s194 + $0xea] sm:$0xff]
        %v1131 = vld [vmem:[%s194 + $0xf2] sm:$0xff]
        %v1132 = vld [vmem:[%s194 + $0xfa] sm:$0xff]
        %v1133 = vld [vmem:[%s194 + $0x102] sm:$0xff]
        %v1134 = vld [vmem:[%s194 + $0x10a] sm:$0xff]
        %v1135 = vld [vmem:[%s194 + $0x112] sm:$0xff]
        %v1136 = vld [vmem:[%s194 + $0x11a] sm:$0xff]
        %v1137 = vld [vmem:[%s194 + $0x122] sm:$0xff]
        %v1138 = vld [vmem:[%s194 + $0x12a] sm:$0x3f]
        %v1139 = vpack.c.bf16 %v1104, %v1103
        %v1140 = vpack.c.bf16 %v1106, %v1105
        %v1141 = vpack.c.bf16 %v1108, %v1107
        %v1142 = vpack.c.bf16 %v1110, %v1109
        %v1143 = vpack.c.bf16 %v1112, %v1111
        %v1144 = vpack.c.bf16 %v1114, %v1113
        %v1145 = vpack.c.bf16 %v1116, %v1115
        %v1146 = vpack.c.bf16 %v1118, %v1117
        %v1147 = vpack.c.bf16 %v1120, %v1119
        %v1148 = vpack.c.bf16 %v1122, %v1121
        %v1149 = vpack.c.bf16 %v1124, %v1123
        %v1150 = vpack.c.bf16 %v1126, %v1125
        %v1151 = vpack.c.bf16 %v1128, %v1127
        %v1152 = vpack.c.bf16 %v1130, %v1129
        %v1153 = vpack.c.bf16 %v1132, %v1131
        %v1154 = vpack.c.bf16 %v1134, %v1133
        %v1155 = vpack.c.bf16 %v1136, %v1135
        %v1156 = vpack.c.bf16 %v1138, %v1137
        %s1157 = scalar_lea.vmem %s1, 6
        %v1158 = vld [vmem:[%s1157] sm:$0x3]
        %v1160 = vsel %vm307, %v1139, 0
        %v1163 = vsel %vm307, %v1140, 0
        %v1166 = vsel %vm307, %v1141, 0
        %v1169 = vsel %vm307, %v1142, 0
        %v1172 = vsel %vm307, %v1143, 0
        %v1175 = vsel %vm307, %v1144, 0
        %v1178 = vsel %vm307, %v1145, 0
        %v1181 = vsel %vm307, %v1146, 0
        %v1184 = vsel %vm307, %v1147, 0
        %v1187 = vsel %vm307, %v1148, 0
        %v1190 = vsel %vm307, %v1149, 0
        %v1193 = vsel %vm307, %v1150, 0
        %v1196 = vsel %vm307, %v1151, 0
        %v1199 = vsel %vm307, %v1152, 0
        %v1202 = vsel %vm307, %v1153, 0
        %v1205 = vsel %vm307, %v1154, 0
        %v1208 = vsel %vm307, %v1155, 0
        %v1211 = vsel %vm307, %v1156, 0
        %v1214 = vsel %vm362, %v1158, 0
        %1216 = vmatprep.subr.bf16.mxu0 0
        %1217 = vmatpush1.bf16.msra.mxu0 0
        %1218 = vmatprep.subr.bf16.mxu0 0
        %1219 = vmatpush1.bf16.msra.mxu0 0
        %1220 = vmatprep.subr.bf16.mxu0 0
        %1221 = vmatpush1.bf16.msra.mxu0 0
        %1222 = vmatprep.subr.bf16.mxu0 0
        %1223 = vmatpush1.bf16.msra.mxu0 0
        %1224 = vmatprep.subr.bf16.mxu0 0
        %1225 = vmatpush1.bf16.msra.mxu0 0
        %1226 = vmatprep.subr.bf16.mxu0 0
        %1227 = vmatpush1.bf16.msra.mxu0 0
        %1228 = vmatprep.subr.bf16.mxu0 0
        %1229 = vmatpush1.bf16.msra.mxu0 0
        %1230 = vmatprep.subr.bf16.mxu0 0
        %1231 = vmatpush1.bf16.msra.mxu0 %v1214
        %1232 = vmatprep.subr.bf16.mxu0 0
        %1233 = vmatpush2.bf16.msra.mxu0 0
        %1234 = vmatprep.subr.bf16.mxu0 0
        %1235 = vmatpush2.bf16.msra.mxu0 0
        %1236 = vmatprep.subr.bf16.mxu0 0
        %1237 = vmatpush2.bf16.msra.mxu0 0
        %1238 = vmatprep.subr.bf16.mxu0 0
        %1239 = vmatpush2.bf16.msra.mxu0 0
        %1240 = vmatprep.subr.bf16.mxu0 0
        %1241 = vmatpush2.bf16.msra.mxu0 0
        %1242 = vmatprep.subr.bf16.mxu0 0
        %1243 = vmatpush2.bf16.msra.mxu0 0
        %1244 = vmatprep.subr.bf16.mxu0 0
        %1245 = vmatpush2.bf16.msra.mxu0 0
        %1246 = vmatprep.subr.bf16.mxu0 0
        %1247 = vmatpush2.bf16.msra.mxu0 0
        %1248 = vmatprep.mubr.bf16.mxu0 0
        %1249 = vmatmul.mubr.bf16.gmra.mxu0 %v1160
        %v1250 = vpop.f32.mrf.mxu0
        %v1251 = vadd.f32 0.0, %v1250
        %v1252 = vpop.f32.mrf.mxu0
        %v1253 = vpop.f32.mrf.mxu0
        %v1254 = vadd.f32 0.0, %v1253
        %v1255 = vpop.f32.mrf.mxu0
        %1256 = vmatprep.mubr.bf16.mxu0 0
        %1257 = vmatmul.mubr.bf16.gmra.mxu0 %v1163
        %v1258 = vpop.f32.mrf.mxu0
        %v1259 = vadd.f32 0.0, %v1258
        %v1260 = vpop.f32.mrf.mxu0
        %v1261 = vpop.f32.mrf.mxu0
        %v1262 = vadd.f32 0.0, %v1261
        %v1263 = vpop.f32.mrf.mxu0
        %1264 = vmatprep.mubr.bf16.mxu0 0
        %1265 = vmatmul.mubr.bf16.gmra.mxu0 %v1166
        %v1266 = vpop.f32.mrf.mxu0
        %v1267 = vadd.f32 0.0, %v1266
        %v1268 = vpop.f32.mrf.mxu0
        %v1269 = vpop.f32.mrf.mxu0
        %v1270 = vadd.f32 0.0, %v1269
        %v1271 = vpop.f32.mrf.mxu0
        %1272 = vmatprep.mubr.bf16.mxu0 0
        %1273 = vmatmul.mubr.bf16.gmra.mxu0 %v1169
        %v1274 = vpop.f32.mrf.mxu0
        %v1275 = vadd.f32 0.0, %v1274
        %v1276 = vpop.f32.mrf.mxu0
        %v1277 = vpop.f32.mrf.mxu0
        %v1278 = vadd.f32 0.0, %v1277
        %v1279 = vpop.f32.mrf.mxu0
        %1280 = vmatprep.mubr.bf16.mxu0 0
        %1281 = vmatmul.mubr.bf16.gmra.mxu0 %v1172
        %v1282 = vpop.f32.mrf.mxu0
        %v1283 = vadd.f32 0.0, %v1282
        %v1284 = vpop.f32.mrf.mxu0
        %v1285 = vpop.f32.mrf.mxu0
        %v1286 = vadd.f32 0.0, %v1285
        %v1287 = vpop.f32.mrf.mxu0
        %1288 = vmatprep.mubr.bf16.mxu0 0
        %1289 = vmatmul.mubr.bf16.gmra.mxu0 %v1175
        %v1290 = vpop.f32.mrf.mxu0
        %v1291 = vadd.f32 0.0, %v1290
        %v1292 = vpop.f32.mrf.mxu0
        %v1293 = vpop.f32.mrf.mxu0
        %v1294 = vadd.f32 0.0, %v1293
        %v1295 = vpop.f32.mrf.mxu0
        %1296 = vmatprep.mubr.bf16.mxu0 0
        %1297 = vmatmul.mubr.bf16.gmra.mxu0 %v1178
        %v1298 = vpop.f32.mrf.mxu0
        %v1299 = vadd.f32 0.0, %v1298
        %v1300 = vpop.f32.mrf.mxu0
        %v1301 = vpop.f32.mrf.mxu0
        %v1302 = vadd.f32 0.0, %v1301
        %v1303 = vpop.f32.mrf.mxu0
        %1304 = vmatprep.mubr.bf16.mxu0 0
        %1305 = vmatmul.mubr.bf16.gmra.mxu0 %v1181
        %v1306 = vpop.f32.mrf.mxu0
        %v1307 = vadd.f32 0.0, %v1306
        %v1308 = vpop.f32.mrf.mxu0
        %v1309 = vpop.f32.mrf.mxu0
        %v1310 = vadd.f32 0.0, %v1309
        %v1311 = vpop.f32.mrf.mxu0
        %1312 = vmatprep.mubr.bf16.mxu0 0
        %1313 = vmatmul.mubr.bf16.gmra.mxu0 %v1184
        %v1314 = vpop.f32.mrf.mxu0
        %v1315 = vadd.f32 0.0, %v1314
        %v1316 = vpop.f32.mrf.mxu0
        %v1317 = vpop.f32.mrf.mxu0
        %v1318 = vadd.f32 0.0, %v1317
        %v1319 = vpop.f32.mrf.mxu0
        %1320 = vmatprep.mubr.bf16.mxu0 0
        %1321 = vmatmul.mubr.bf16.gmra.mxu0 %v1187
        %v1322 = vpop.f32.mrf.mxu0
        %v1323 = vadd.f32 0.0, %v1322
        %v1324 = vpop.f32.mrf.mxu0
        %v1325 = vpop.f32.mrf.mxu0
        %v1326 = vadd.f32 0.0, %v1325
        %v1327 = vpop.f32.mrf.mxu0
        %1328 = vmatprep.mubr.bf16.mxu0 0
        %1329 = vmatmul.mubr.bf16.gmra.mxu0 %v1190
        %v1330 = vpop.f32.mrf.mxu0
        %v1331 = vadd.f32 0.0, %v1330
        %v1332 = vpop.f32.mrf.mxu0
        %v1333 = vpop.f32.mrf.mxu0
        %v1334 = vadd.f32 0.0, %v1333
        %v1335 = vpop.f32.mrf.mxu0
        %1336 = vmatprep.mubr.bf16.mxu0 0
        %1337 = vmatmul.mubr.bf16.gmra.mxu0 %v1193
        %v1338 = vpop.f32.mrf.mxu0
        %v1339 = vadd.f32 0.0, %v1338
        %v1340 = vpop.f32.mrf.mxu0
        %v1341 = vpop.f32.mrf.mxu0
        %v1342 = vadd.f32 0.0, %v1341
        %v1343 = vpop.f32.mrf.mxu0
        %1344 = vmatprep.mubr.bf16.mxu0 0
        %1345 = vmatmul.mubr.bf16.gmra.mxu0 %v1196
        %v1346 = vpop.f32.mrf.mxu0
        %v1347 = vadd.f32 0.0, %v1346
        %v1348 = vpop.f32.mrf.mxu0
        %v1349 = vpop.f32.mrf.mxu0
        %v1350 = vadd.f32 0.0, %v1349
        %v1351 = vpop.f32.mrf.mxu0
        %1352 = vmatprep.mubr.bf16.mxu0 0
        %1353 = vmatmul.mubr.bf16.gmra.mxu0 %v1199
        %v1354 = vpop.f32.mrf.mxu0
        %v1355 = vadd.f32 0.0, %v1354
        %v1356 = vpop.f32.mrf.mxu0
        %v1357 = vpop.f32.mrf.mxu0
        %v1358 = vadd.f32 0.0, %v1357
        %v1359 = vpop.f32.mrf.mxu0
        %1360 = vmatprep.mubr.bf16.mxu0 0
        %1361 = vmatmul.mubr.bf16.gmra.mxu0 %v1202
        %v1362 = vpop.f32.mrf.mxu0
        %v1363 = vadd.f32 0.0, %v1362
        %v1364 = vpop.f32.mrf.mxu0
        %v1365 = vpop.f32.mrf.mxu0
        %v1366 = vadd.f32 0.0, %v1365
        %v1367 = vpop.f32.mrf.mxu0
        %1368 = vmatprep.mubr.bf16.mxu0 0
        %1369 = vmatmul.mubr.bf16.gmra.mxu0 %v1205
        %v1370 = vpop.f32.mrf.mxu0
        %v1371 = vadd.f32 0.0, %v1370
        %v1372 = vpop.f32.mrf.mxu0
        %v1373 = vpop.f32.mrf.mxu0
        %v1374 = vadd.f32 0.0, %v1373
        %v1375 = vpop.f32.mrf.mxu0
        %1376 = vmatprep.mubr.bf16.mxu0 0
        %1377 = vmatmul.mubr.bf16.gmra.mxu0 %v1208
        %v1378 = vpop.f32.mrf.mxu0
        %v1379 = vadd.f32 0.0, %v1378
        %v1380 = vpop.f32.mrf.mxu0
        %v1381 = vpop.f32.mrf.mxu0
        %v1382 = vadd.f32 0.0, %v1381
        %v1383 = vpop.f32.mrf.mxu0
        %1384 = vmatprep.mubr.bf16.mxu0 0
        %1385 = vmatmul.mubr.bf16.gmra.mxu0 %v1211
        %v1386 = vpop.f32.mrf.mxu0
        %v1387 = vadd.f32 0.0, %v1386
        %v1388 = vpop.f32.mrf.mxu0
        %v1389 = vpop.f32.mrf.mxu0
        %v1390 = vadd.f32 0.0, %v1389
        %v1391 = vpop.f32.mrf.mxu0
        %1392 = vdwg.mxu0
        %v1393 = vadd.f32 %v1067, %v1251
        %v1394 = vadd.f32 %v1068, %v1254
        %v1395 = vadd.f32 %v1069, %v1259
        %v1396 = vadd.f32 %v1070, %v1262
        %v1397 = vadd.f32 %v1071, %v1267
        %v1398 = vadd.f32 %v1072, %v1270
        %v1399 = vadd.f32 %v1073, %v1275
        %v1400 = vadd.f32 %v1074, %v1278
        %v1401 = vadd.f32 %v1075, %v1283
        %v1402 = vadd.f32 %v1076, %v1286
        %v1403 = vadd.f32 %v1077, %v1291
        %v1404 = vadd.f32 %v1078, %v1294
        %v1405 = vadd.f32 %v1079, %v1299
        %v1406 = vadd.f32 %v1080, %v1302
        %v1407 = vadd.f32 %v1081, %v1307
        %v1408 = vadd.f32 %v1082, %v1310
        %v1409 = vadd.f32 %v1083, %v1315
        %v1410 = vadd.f32 %v1084, %v1318
        %v1411 = vadd.f32 %v1085, %v1323
        %v1412 = vadd.f32 %v1086, %v1326
        %v1413 = vadd.f32 %v1087, %v1331
        %v1414 = vadd.f32 %v1088, %v1334
        %v1415 = vadd.f32 %v1089, %v1339
        %v1416 = vadd.f32 %v1090, %v1342
        %v1417 = vadd.f32 %v1091, %v1347
        %v1418 = vadd.f32 %v1092, %v1350
        %v1419 = vadd.f32 %v1093, %v1355
        %v1420 = vadd.f32 %v1094, %v1358
        %v1421 = vadd.f32 %v1095, %v1363
        %v1422 = vadd.f32 %v1096, %v1366
        %v1423 = vadd.f32 %v1097, %v1371
        %v1424 = vadd.f32 %v1098, %v1374
        %v1425 = vadd.f32 %v1099, %v1379
        %v1426 = vadd.f32 %v1100, %v1382
        %v1427 = vadd.f32 %v1101, %v1387
        %v1428 = vadd.f32 %v1102, %v1390
        %v1429 = vld [vmem:[%s194 + $0x13] sm:$0xff]
        %v1430 = vld [vmem:[%s194 + $0x1b] sm:$0xff]
        %v1431 = vld [vmem:[%s194 + $0x23] sm:$0xff]
        %v1432 = vld [vmem:[%s194 + $0x2b] sm:$0xff]
        %v1433 = vld [vmem:[%s194 + $0x33] sm:$0xff]
        %v1434 = vld [vmem:[%s194 + $0x3b] sm:$0xff]
        %v1435 = vld [vmem:[%s194 + $0x43] sm:$0xff]
        %v1436 = vld [vmem:[%s194 + $0x4b] sm:$0xff]
        %v1437 = vld [vmem:[%s194 + $0x53] sm:$0xff]
        %v1438 = vld [vmem:[%s194 + $0x5b] sm:$0xff]
        %v1439 = vld [vmem:[%s194 + $0x63] sm:$0xff]
        %v1440 = vld [vmem:[%s194 + $0x6b] sm:$0xff]
        %v1441 = vld [vmem:[%s194 + $0x73] sm:$0xff]
        %v1442 = vld [vmem:[%s194 + $0x7b] sm:$0xff]
        %v1443 = vld [vmem:[%s194 + $0x83] sm:$0xff]
        %v1444 = vld [vmem:[%s194 + $0x8b] sm:$0xff]
        %v1445 = vld [vmem:[%s194 + $0x93] sm:$0xff]
        %v1446 = vld [vmem:[%s194 + $0x9b] sm:$0xff]
        %v1447 = vld [vmem:[%s194 + $0xa3] sm:$0xff]
        %v1448 = vld [vmem:[%s194 + $0xab] sm:$0xff]
        %v1449 = vld [vmem:[%s194 + $0xb3] sm:$0xff]
        %v1450 = vld [vmem:[%s194 + $0xbb] sm:$0xff]
        %v1451 = vld [vmem:[%s194 + $0xc3] sm:$0xff]
        %v1452 = vld [vmem:[%s194 + $0xcb] sm:$0xff]
        %v1453 = vld [vmem:[%s194 + $0xd3] sm:$0xff]
        %v1454 = vld [vmem:[%s194 + $0xdb] sm:$0xff]
        %v1455 = vld [vmem:[%s194 + $0xe3] sm:$0xff]
        %v1456 = vld [vmem:[%s194 + $0xeb] sm:$0xff]
        %v1457 = vld [vmem:[%s194 + $0xf3] sm:$0xff]
        %v1458 = vld [vmem:[%s194 + $0xfb] sm:$0xff]
        %v1459 = vld [vmem:[%s194 + $0x103] sm:$0xff]
        %v1460 = vld [vmem:[%s194 + $0x10b] sm:$0xff]
        %v1461 = vld [vmem:[%s194 + $0x113] sm:$0xff]
        %v1462 = vld [vmem:[%s194 + $0x11b] sm:$0xff]
        %v1463 = vld [vmem:[%s194 + $0x123] sm:$0xff]
        %v1464 = vld [vmem:[%s194 + $0x12b] sm:$0x3f]
        %v1465 = vpack.c.bf16 %v1430, %v1429
        %v1466 = vpack.c.bf16 %v1432, %v1431
        %v1467 = vpack.c.bf16 %v1434, %v1433
        %v1468 = vpack.c.bf16 %v1436, %v1435
        %v1469 = vpack.c.bf16 %v1438, %v1437
        %v1470 = vpack.c.bf16 %v1440, %v1439
        %v1471 = vpack.c.bf16 %v1442, %v1441
        %v1472 = vpack.c.bf16 %v1444, %v1443
        %v1473 = vpack.c.bf16 %v1446, %v1445
        %v1474 = vpack.c.bf16 %v1448, %v1447
        %v1475 = vpack.c.bf16 %v1450, %v1449
        %v1476 = vpack.c.bf16 %v1452, %v1451
        %v1477 = vpack.c.bf16 %v1454, %v1453
        %v1478 = vpack.c.bf16 %v1456, %v1455
        %v1479 = vpack.c.bf16 %v1458, %v1457
        %v1480 = vpack.c.bf16 %v1460, %v1459
        %v1481 = vpack.c.bf16 %v1462, %v1461
        %v1482 = vpack.c.bf16 %v1464, %v1463
        %s1483 = scalar_lea.vmem %s1, 8
        %v1484 = vld [vmem:[%s1483] sm:$0x3]
        %v1486 = vsel %vm307, %v1465, 0
        %v1489 = vsel %vm307, %v1466, 0
        %v1492 = vsel %vm307, %v1467, 0
        %v1495 = vsel %vm307, %v1468, 0
        %v1498 = vsel %vm307, %v1469, 0
        %v1501 = vsel %vm307, %v1470, 0
        %v1504 = vsel %vm307, %v1471, 0
        %v1507 = vsel %vm307, %v1472, 0
        %v1510 = vsel %vm307, %v1473, 0
        %v1513 = vsel %vm307, %v1474, 0
        %v1516 = vsel %vm307, %v1475, 0
        %v1519 = vsel %vm307, %v1476, 0
        %v1522 = vsel %vm307, %v1477, 0
        %v1525 = vsel %vm307, %v1478, 0
        %v1528 = vsel %vm307, %v1479, 0
        %v1531 = vsel %vm307, %v1480, 0
        %v1534 = vsel %vm307, %v1481, 0
        %v1537 = vsel %vm307, %v1482, 0
        %v1540 = vsel %vm362, %v1484, 0
        %1542 = vmatprep.subr.bf16.mxu0 0
        %1543 = vmatpush1.bf16.msra.mxu0 0
        %1544 = vmatprep.subr.bf16.mxu0 0
        %1545 = vmatpush1.bf16.msra.mxu0 0
        %1546 = vmatprep.subr.bf16.mxu0 0
        %1547 = vmatpush1.bf16.msra.mxu0 0
        %1548 = vmatprep.subr.bf16.mxu0 0
        %1549 = vmatpush1.bf16.msra.mxu0 0
        %1550 = vmatprep.subr.bf16.mxu0 0
        %1551 = vmatpush1.bf16.msra.mxu0 0
        %1552 = vmatprep.subr.bf16.mxu0 0
        %1553 = vmatpush1.bf16.msra.mxu0 0
        %1554 = vmatprep.subr.bf16.mxu0 0
        %1555 = vmatpush1.bf16.msra.mxu0 0
        %1556 = vmatprep.subr.bf16.mxu0 0
        %1557 = vmatpush1.bf16.msra.mxu0 %v1540
        %1558 = vmatprep.subr.bf16.mxu0 0
        %1559 = vmatpush2.bf16.msra.mxu0 0
        %1560 = vmatprep.subr.bf16.mxu0 0
        %1561 = vmatpush2.bf16.msra.mxu0 0
        %1562 = vmatprep.subr.bf16.mxu0 0
        %1563 = vmatpush2.bf16.msra.mxu0 0
        %1564 = vmatprep.subr.bf16.mxu0 0
        %1565 = vmatpush2.bf16.msra.mxu0 0
        %1566 = vmatprep.subr.bf16.mxu0 0
        %1567 = vmatpush2.bf16.msra.mxu0 0
        %1568 = vmatprep.subr.bf16.mxu0 0
        %1569 = vmatpush2.bf16.msra.mxu0 0
        %1570 = vmatprep.subr.bf16.mxu0 0
        %1571 = vmatpush2.bf16.msra.mxu0 0
        %1572 = vmatprep.subr.bf16.mxu0 0
        %1573 = vmatpush2.bf16.msra.mxu0 0
        %1574 = vmatprep.mubr.bf16.mxu0 0
        %1575 = vmatmul.mubr.bf16.gmra.mxu0 %v1486
        %v1576 = vpop.f32.mrf.mxu0
        %v1577 = vadd.f32 0.0, %v1576
        %v1578 = vpop.f32.mrf.mxu0
        %v1579 = vpop.f32.mrf.mxu0
        %v1580 = vadd.f32 0.0, %v1579
        %v1581 = vpop.f32.mrf.mxu0
        %1582 = vmatprep.mubr.bf16.mxu0 0
        %1583 = vmatmul.mubr.bf16.gmra.mxu0 %v1489
        %v1584 = vpop.f32.mrf.mxu0
        %v1585 = vadd.f32 0.0, %v1584
        %v1586 = vpop.f32.mrf.mxu0
        %v1587 = vpop.f32.mrf.mxu0
        %v1588 = vadd.f32 0.0, %v1587
        %v1589 = vpop.f32.mrf.mxu0
        %1590 = vmatprep.mubr.bf16.mxu0 0
        %1591 = vmatmul.mubr.bf16.gmra.mxu0 %v1492
        %v1592 = vpop.f32.mrf.mxu0
        %v1593 = vadd.f32 0.0, %v1592
        %v1594 = vpop.f32.mrf.mxu0
        %v1595 = vpop.f32.mrf.mxu0
        %v1596 = vadd.f32 0.0, %v1595
        %v1597 = vpop.f32.mrf.mxu0
        %1598 = vmatprep.mubr.bf16.mxu0 0
        %1599 = vmatmul.mubr.bf16.gmra.mxu0 %v1495
        %v1600 = vpop.f32.mrf.mxu0
        %v1601 = vadd.f32 0.0, %v1600
        %v1602 = vpop.f32.mrf.mxu0
        %v1603 = vpop.f32.mrf.mxu0
        %v1604 = vadd.f32 0.0, %v1603
        %v1605 = vpop.f32.mrf.mxu0
        %1606 = vmatprep.mubr.bf16.mxu0 0
        %1607 = vmatmul.mubr.bf16.gmra.mxu0 %v1498
        %v1608 = vpop.f32.mrf.mxu0
        %v1609 = vadd.f32 0.0, %v1608
        %v1610 = vpop.f32.mrf.mxu0
        %v1611 = vpop.f32.mrf.mxu0
        %v1612 = vadd.f32 0.0, %v1611
        %v1613 = vpop.f32.mrf.mxu0
        %1614 = vmatprep.mubr.bf16.mxu0 0
        %1615 = vmatmul.mubr.bf16.gmra.mxu0 %v1501
        %v1616 = vpop.f32.mrf.mxu0
        %v1617 = vadd.f32 0.0, %v1616
        %v1618 = vpop.f32.mrf.mxu0
        %v1619 = vpop.f32.mrf.mxu0
        %v1620 = vadd.f32 0.0, %v1619
        %v1621 = vpop.f32.mrf.mxu0
        %1622 = vmatprep.mubr.bf16.mxu0 0
        %1623 = vmatmul.mubr.bf16.gmra.mxu0 %v1504
        %v1624 = vpop.f32.mrf.mxu0
        %v1625 = vadd.f32 0.0, %v1624
        %v1626 = vpop.f32.mrf.mxu0
        %v1627 = vpop.f32.mrf.mxu0
        %v1628 = vadd.f32 0.0, %v1627
        %v1629 = vpop.f32.mrf.mxu0
        %1630 = vmatprep.mubr.bf16.mxu0 0
        %1631 = vmatmul.mubr.bf16.gmra.mxu0 %v1507
        %v1632 = vpop.f32.mrf.mxu0
        %v1633 = vadd.f32 0.0, %v1632
        %v1634 = vpop.f32.mrf.mxu0
        %v1635 = vpop.f32.mrf.mxu0
        %v1636 = vadd.f32 0.0, %v1635
        %v1637 = vpop.f32.mrf.mxu0
        %1638 = vmatprep.mubr.bf16.mxu0 0
        %1639 = vmatmul.mubr.bf16.gmra.mxu0 %v1510
        %v1640 = vpop.f32.mrf.mxu0
        %v1641 = vadd.f32 0.0, %v1640
        %v1642 = vpop.f32.mrf.mxu0
        %v1643 = vpop.f32.mrf.mxu0
        %v1644 = vadd.f32 0.0, %v1643
        %v1645 = vpop.f32.mrf.mxu0
        %1646 = vmatprep.mubr.bf16.mxu0 0
        %1647 = vmatmul.mubr.bf16.gmra.mxu0 %v1513
        %v1648 = vpop.f32.mrf.mxu0
        %v1649 = vadd.f32 0.0, %v1648
        %v1650 = vpop.f32.mrf.mxu0
        %v1651 = vpop.f32.mrf.mxu0
        %v1652 = vadd.f32 0.0, %v1651
        %v1653 = vpop.f32.mrf.mxu0
        %1654 = vmatprep.mubr.bf16.mxu0 0
        %1655 = vmatmul.mubr.bf16.gmra.mxu0 %v1516
        %v1656 = vpop.f32.mrf.mxu0
        %v1657 = vadd.f32 0.0, %v1656
        %v1658 = vpop.f32.mrf.mxu0
        %v1659 = vpop.f32.mrf.mxu0
        %v1660 = vadd.f32 0.0, %v1659
        %v1661 = vpop.f32.mrf.mxu0
        %1662 = vmatprep.mubr.bf16.mxu0 0
        %1663 = vmatmul.mubr.bf16.gmra.mxu0 %v1519
        %v1664 = vpop.f32.mrf.mxu0
        %v1665 = vadd.f32 0.0, %v1664
        %v1666 = vpop.f32.mrf.mxu0
        %v1667 = vpop.f32.mrf.mxu0
        %v1668 = vadd.f32 0.0, %v1667
        %v1669 = vpop.f32.mrf.mxu0
        %1670 = vmatprep.mubr.bf16.mxu0 0
        %1671 = vmatmul.mubr.bf16.gmra.mxu0 %v1522
        %v1672 = vpop.f32.mrf.mxu0
        %v1673 = vadd.f32 0.0, %v1672
        %v1674 = vpop.f32.mrf.mxu0
        %v1675 = vpop.f32.mrf.mxu0
        %v1676 = vadd.f32 0.0, %v1675
        %v1677 = vpop.f32.mrf.mxu0
        %1678 = vmatprep.mubr.bf16.mxu0 0
        %1679 = vmatmul.mubr.bf16.gmra.mxu0 %v1525
        %v1680 = vpop.f32.mrf.mxu0
        %v1681 = vadd.f32 0.0, %v1680
        %v1682 = vpop.f32.mrf.mxu0
        %v1683 = vpop.f32.mrf.mxu0
        %v1684 = vadd.f32 0.0, %v1683
        %v1685 = vpop.f32.mrf.mxu0
        %1686 = vmatprep.mubr.bf16.mxu0 0
        %1687 = vmatmul.mubr.bf16.gmra.mxu0 %v1528
        %v1688 = vpop.f32.mrf.mxu0
        %v1689 = vadd.f32 0.0, %v1688
        %v1690 = vpop.f32.mrf.mxu0
        %v1691 = vpop.f32.mrf.mxu0
        %v1692 = vadd.f32 0.0, %v1691
        %v1693 = vpop.f32.mrf.mxu0
        %1694 = vmatprep.mubr.bf16.mxu0 0
        %1695 = vmatmul.mubr.bf16.gmra.mxu0 %v1531
        %v1696 = vpop.f32.mrf.mxu0
        %v1697 = vadd.f32 0.0, %v1696
        %v1698 = vpop.f32.mrf.mxu0
        %v1699 = vpop.f32.mrf.mxu0
        %v1700 = vadd.f32 0.0, %v1699
        %v1701 = vpop.f32.mrf.mxu0
        %1702 = vmatprep.mubr.bf16.mxu0 0
        %1703 = vmatmul.mubr.bf16.gmra.mxu0 %v1534
        %v1704 = vpop.f32.mrf.mxu0
        %v1705 = vadd.f32 0.0, %v1704
        %v1706 = vpop.f32.mrf.mxu0
        %v1707 = vpop.f32.mrf.mxu0
        %v1708 = vadd.f32 0.0, %v1707
        %v1709 = vpop.f32.mrf.mxu0
        %1710 = vmatprep.mubr.bf16.mxu0 0
        %1711 = vmatmul.mubr.bf16.gmra.mxu0 %v1537
        %v1712 = vpop.f32.mrf.mxu0
        %v1713 = vadd.f32 0.0, %v1712
        %v1714 = vpop.f32.mrf.mxu0
        %v1715 = vpop.f32.mrf.mxu0
        %v1716 = vadd.f32 0.0, %v1715
        %v1717 = vpop.f32.mrf.mxu0
        %1718 = vdwg.mxu0
        %v1719 = vadd.f32 %v1393, %v1577
        %v1720 = vadd.f32 %v1394, %v1580
        %v1721 = vadd.f32 %v1395, %v1585
        %v1722 = vadd.f32 %v1396, %v1588
        %v1723 = vadd.f32 %v1397, %v1593
        %v1724 = vadd.f32 %v1398, %v1596
        %v1725 = vadd.f32 %v1399, %v1601
        %v1726 = vadd.f32 %v1400, %v1604
        %v1727 = vadd.f32 %v1401, %v1609
        %v1728 = vadd.f32 %v1402, %v1612
        %v1729 = vadd.f32 %v1403, %v1617
        %v1730 = vadd.f32 %v1404, %v1620
        %v1731 = vadd.f32 %v1405, %v1625
        %v1732 = vadd.f32 %v1406, %v1628
        %v1733 = vadd.f32 %v1407, %v1633
        %v1734 = vadd.f32 %v1408, %v1636
        %v1735 = vadd.f32 %v1409, %v1641
        %v1736 = vadd.f32 %v1410, %v1644
        %v1737 = vadd.f32 %v1411, %v1649
        %v1738 = vadd.f32 %v1412, %v1652
        %v1739 = vadd.f32 %v1413, %v1657
        %v1740 = vadd.f32 %v1414, %v1660
        %v1741 = vadd.f32 %v1415, %v1665
        %v1742 = vadd.f32 %v1416, %v1668
        %v1743 = vadd.f32 %v1417, %v1673
        %v1744 = vadd.f32 %v1418, %v1676
        %v1745 = vadd.f32 %v1419, %v1681
        %v1746 = vadd.f32 %v1420, %v1684
        %v1747 = vadd.f32 %v1421, %v1689
        %v1748 = vadd.f32 %v1422, %v1692
        %v1749 = vadd.f32 %v1423, %v1697
        %v1750 = vadd.f32 %v1424, %v1700
        %v1751 = vadd.f32 %v1425, %v1705
        %v1752 = vadd.f32 %v1426, %v1708
        %v1753 = vadd.f32 %v1427, %v1713
        %v1754 = vadd.f32 %v1428, %v1716
        %v1755 = vld [vmem:[%s194 + $0x14] sm:$0xff]
        %v1756 = vld [vmem:[%s194 + $0x1c] sm:$0xff]
        %v1757 = vld [vmem:[%s194 + $0x24] sm:$0xff]
        %v1758 = vld [vmem:[%s194 + $0x2c] sm:$0xff]
        %v1759 = vld [vmem:[%s194 + $0x34] sm:$0xff]
        %v1760 = vld [vmem:[%s194 + $0x3c] sm:$0xff]
        %v1761 = vld [vmem:[%s194 + $0x44] sm:$0xff]
        %v1762 = vld [vmem:[%s194 + $0x4c] sm:$0xff]
        %v1763 = vld [vmem:[%s194 + $0x54] sm:$0xff]
        %v1764 = vld [vmem:[%s194 + $0x5c] sm:$0xff]
        %v1765 = vld [vmem:[%s194 + $0x64] sm:$0xff]
        %v1766 = vld [vmem:[%s194 + $0x6c] sm:$0xff]
        %v1767 = vld [vmem:[%s194 + $0x74] sm:$0xff]
        %v1768 = vld [vmem:[%s194 + $0x7c] sm:$0xff]
        %v1769 = vld [vmem:[%s194 + $0x84] sm:$0xff]
        %v1770 = vld [vmem:[%s194 + $0x8c] sm:$0xff]
        %v1771 = vld [vmem:[%s194 + $0x94] sm:$0xff]
        %v1772 = vld [vmem:[%s194 + $0x9c] sm:$0xff]
        %v1773 = vld [vmem:[%s194 + $0xa4] sm:$0xff]
        %v1774 = vld [vmem:[%s194 + $0xac] sm:$0xff]
        %v1775 = vld [vmem:[%s194 + $0xb4] sm:$0xff]
        %v1776 = vld [vmem:[%s194 + $0xbc] sm:$0xff]
        %v1777 = vld [vmem:[%s194 + $0xc4] sm:$0xff]
        %v1778 = vld [vmem:[%s194 + $0xcc] sm:$0xff]
        %v1779 = vld [vmem:[%s194 + $0xd4] sm:$0xff]
        %v1780 = vld [vmem:[%s194 + $0xdc] sm:$0xff]
        %v1781 = vld [vmem:[%s194 + $0xe4] sm:$0xff]
        %v1782 = vld [vmem:[%s194 + $0xec] sm:$0xff]
        %v1783 = vld [vmem:[%s194 + $0xf4] sm:$0xff]
        %v1784 = vld [vmem:[%s194 + $0xfc] sm:$0xff]
        %v1785 = vld [vmem:[%s194 + $0x104] sm:$0xff]
        %v1786 = vld [vmem:[%s194 + $0x10c] sm:$0xff]
        %v1787 = vld [vmem:[%s194 + $0x114] sm:$0xff]
        %v1788 = vld [vmem:[%s194 + $0x11c] sm:$0xff]
        %v1789 = vld [vmem:[%s194 + $0x124] sm:$0xff]
        %v1790 = vld [vmem:[%s194 + $0x12c] sm:$0x3f]
        %v1791 = vpack.c.bf16 %v1756, %v1755
        %v1792 = vpack.c.bf16 %v1758, %v1757
        %v1793 = vpack.c.bf16 %v1760, %v1759
        %v1794 = vpack.c.bf16 %v1762, %v1761
        %v1795 = vpack.c.bf16 %v1764, %v1763
        %v1796 = vpack.c.bf16 %v1766, %v1765
        %v1797 = vpack.c.bf16 %v1768, %v1767
        %v1798 = vpack.c.bf16 %v1770, %v1769
        %v1799 = vpack.c.bf16 %v1772, %v1771
        %v1800 = vpack.c.bf16 %v1774, %v1773
        %v1801 = vpack.c.bf16 %v1776, %v1775
        %v1802 = vpack.c.bf16 %v1778, %v1777
        %v1803 = vpack.c.bf16 %v1780, %v1779
        %v1804 = vpack.c.bf16 %v1782, %v1781
        %v1805 = vpack.c.bf16 %v1784, %v1783
        %v1806 = vpack.c.bf16 %v1786, %v1785
        %v1807 = vpack.c.bf16 %v1788, %v1787
        %v1808 = vpack.c.bf16 %v1790, %v1789
        %s1809 = scalar_lea.vmem %s1, 10
        %v1810 = vld [vmem:[%s1809] sm:$0x3]
        %v1812 = vsel %vm307, %v1791, 0
        %v1815 = vsel %vm307, %v1792, 0
        %v1818 = vsel %vm307, %v1793, 0
        %v1821 = vsel %vm307, %v1794, 0
        %v1824 = vsel %vm307, %v1795, 0
        %v1827 = vsel %vm307, %v1796, 0
        %v1830 = vsel %vm307, %v1797, 0
        %v1833 = vsel %vm307, %v1798, 0
        %v1836 = vsel %vm307, %v1799, 0
        %v1839 = vsel %vm307, %v1800, 0
        %v1842 = vsel %vm307, %v1801, 0
        %v1845 = vsel %vm307, %v1802, 0
        %v1848 = vsel %vm307, %v1803, 0
        %v1851 = vsel %vm307, %v1804, 0
        %v1854 = vsel %vm307, %v1805, 0
        %v1857 = vsel %vm307, %v1806, 0
        %v1860 = vsel %vm307, %v1807, 0
        %v1863 = vsel %vm307, %v1808, 0
        %v1866 = vsel %vm362, %v1810, 0
        %1868 = vmatprep.subr.bf16.mxu0 0
        %1869 = vmatpush1.bf16.msra.mxu0 0
        %1870 = vmatprep.subr.bf16.mxu0 0
        %1871 = vmatpush1.bf16.msra.mxu0 0
        %1872 = vmatprep.subr.bf16.mxu0 0
        %1873 = vmatpush1.bf16.msra.mxu0 0
        %1874 = vmatprep.subr.bf16.mxu0 0
        %1875 = vmatpush1.bf16.msra.mxu0 0
        %1876 = vmatprep.subr.bf16.mxu0 0
        %1877 = vmatpush1.bf16.msra.mxu0 0
        %1878 = vmatprep.subr.bf16.mxu0 0
        %1879 = vmatpush1.bf16.msra.mxu0 0
        %1880 = vmatprep.subr.bf16.mxu0 0
        %1881 = vmatpush1.bf16.msra.mxu0 0
        %1882 = vmatprep.subr.bf16.mxu0 0
        %1883 = vmatpush1.bf16.msra.mxu0 %v1866
        %1884 = vmatprep.subr.bf16.mxu0 0
        %1885 = vmatpush2.bf16.msra.mxu0 0
        %1886 = vmatprep.subr.bf16.mxu0 0
        %1887 = vmatpush2.bf16.msra.mxu0 0
        %1888 = vmatprep.subr.bf16.mxu0 0
        %1889 = vmatpush2.bf16.msra.mxu0 0
        %1890 = vmatprep.subr.bf16.mxu0 0
        %1891 = vmatpush2.bf16.msra.mxu0 0
        %1892 = vmatprep.subr.bf16.mxu0 0
        %1893 = vmatpush2.bf16.msra.mxu0 0
        %1894 = vmatprep.subr.bf16.mxu0 0
        %1895 = vmatpush2.bf16.msra.mxu0 0
        %1896 = vmatprep.subr.bf16.mxu0 0
        %1897 = vmatpush2.bf16.msra.mxu0 0
        %1898 = vmatprep.subr.bf16.mxu0 0
        %1899 = vmatpush2.bf16.msra.mxu0 0
        %1900 = vmatprep.mubr.bf16.mxu0 0
        %1901 = vmatmul.mubr.bf16.gmra.mxu0 %v1812
        %v1902 = vpop.f32.mrf.mxu0
        %v1903 = vadd.f32 0.0, %v1902
        %v1904 = vpop.f32.mrf.mxu0
        %v1905 = vpop.f32.mrf.mxu0
        %v1906 = vadd.f32 0.0, %v1905
        %v1907 = vpop.f32.mrf.mxu0
        %1908 = vmatprep.mubr.bf16.mxu0 0
        %1909 = vmatmul.mubr.bf16.gmra.mxu0 %v1815
        %v1910 = vpop.f32.mrf.mxu0
        %v1911 = vadd.f32 0.0, %v1910
        %v1912 = vpop.f32.mrf.mxu0
        %v1913 = vpop.f32.mrf.mxu0
        %v1914 = vadd.f32 0.0, %v1913
        %v1915 = vpop.f32.mrf.mxu0
        %1916 = vmatprep.mubr.bf16.mxu0 0
        %1917 = vmatmul.mubr.bf16.gmra.mxu0 %v1818
        %v1918 = vpop.f32.mrf.mxu0
        %v1919 = vadd.f32 0.0, %v1918
        %v1920 = vpop.f32.mrf.mxu0
        %v1921 = vpop.f32.mrf.mxu0
        %v1922 = vadd.f32 0.0, %v1921
        %v1923 = vpop.f32.mrf.mxu0
        %1924 = vmatprep.mubr.bf16.mxu0 0
        %1925 = vmatmul.mubr.bf16.gmra.mxu0 %v1821
        %v1926 = vpop.f32.mrf.mxu0
        %v1927 = vadd.f32 0.0, %v1926
        %v1928 = vpop.f32.mrf.mxu0
        %v1929 = vpop.f32.mrf.mxu0
        %v1930 = vadd.f32 0.0, %v1929
        %v1931 = vpop.f32.mrf.mxu0
        %1932 = vmatprep.mubr.bf16.mxu0 0
        %1933 = vmatmul.mubr.bf16.gmra.mxu0 %v1824
        %v1934 = vpop.f32.mrf.mxu0
        %v1935 = vadd.f32 0.0, %v1934
        %v1936 = vpop.f32.mrf.mxu0
        %v1937 = vpop.f32.mrf.mxu0
        %v1938 = vadd.f32 0.0, %v1937
        %v1939 = vpop.f32.mrf.mxu0
        %1940 = vmatprep.mubr.bf16.mxu0 0
        %1941 = vmatmul.mubr.bf16.gmra.mxu0 %v1827
        %v1942 = vpop.f32.mrf.mxu0
        %v1943 = vadd.f32 0.0, %v1942
        %v1944 = vpop.f32.mrf.mxu0
        %v1945 = vpop.f32.mrf.mxu0
        %v1946 = vadd.f32 0.0, %v1945
        %v1947 = vpop.f32.mrf.mxu0
        %1948 = vmatprep.mubr.bf16.mxu0 0
        %1949 = vmatmul.mubr.bf16.gmra.mxu0 %v1830
        %v1950 = vpop.f32.mrf.mxu0
        %v1951 = vadd.f32 0.0, %v1950
        %v1952 = vpop.f32.mrf.mxu0
        %v1953 = vpop.f32.mrf.mxu0
        %v1954 = vadd.f32 0.0, %v1953
        %v1955 = vpop.f32.mrf.mxu0
        %1956 = vmatprep.mubr.bf16.mxu0 0
        %1957 = vmatmul.mubr.bf16.gmra.mxu0 %v1833
        %v1958 = vpop.f32.mrf.mxu0
        %v1959 = vadd.f32 0.0, %v1958
        %v1960 = vpop.f32.mrf.mxu0
        %v1961 = vpop.f32.mrf.mxu0
        %v1962 = vadd.f32 0.0, %v1961
        %v1963 = vpop.f32.mrf.mxu0
        %1964 = vmatprep.mubr.bf16.mxu0 0
        %1965 = vmatmul.mubr.bf16.gmra.mxu0 %v1836
        %v1966 = vpop.f32.mrf.mxu0
        %v1967 = vadd.f32 0.0, %v1966
        %v1968 = vpop.f32.mrf.mxu0
        %v1969 = vpop.f32.mrf.mxu0
        %v1970 = vadd.f32 0.0, %v1969
        %v1971 = vpop.f32.mrf.mxu0
        %1972 = vmatprep.mubr.bf16.mxu0 0
        %1973 = vmatmul.mubr.bf16.gmra.mxu0 %v1839
        %v1974 = vpop.f32.mrf.mxu0
        %v1975 = vadd.f32 0.0, %v1974
        %v1976 = vpop.f32.mrf.mxu0
        %v1977 = vpop.f32.mrf.mxu0
        %v1978 = vadd.f32 0.0, %v1977
        %v1979 = vpop.f32.mrf.mxu0
        %1980 = vmatprep.mubr.bf16.mxu0 0
        %1981 = vmatmul.mubr.bf16.gmra.mxu0 %v1842
        %v1982 = vpop.f32.mrf.mxu0
        %v1983 = vadd.f32 0.0, %v1982
        %v1984 = vpop.f32.mrf.mxu0
        %v1985 = vpop.f32.mrf.mxu0
        %v1986 = vadd.f32 0.0, %v1985
        %v1987 = vpop.f32.mrf.mxu0
        %1988 = vmatprep.mubr.bf16.mxu0 0
        %1989 = vmatmul.mubr.bf16.gmra.mxu0 %v1845
        %v1990 = vpop.f32.mrf.mxu0
        %v1991 = vadd.f32 0.0, %v1990
        %v1992 = vpop.f32.mrf.mxu0
        %v1993 = vpop.f32.mrf.mxu0
        %v1994 = vadd.f32 0.0, %v1993
        %v1995 = vpop.f32.mrf.mxu0
        %1996 = vmatprep.mubr.bf16.mxu0 0
        %1997 = vmatmul.mubr.bf16.gmra.mxu0 %v1848
        %v1998 = vpop.f32.mrf.mxu0
        %v1999 = vadd.f32 0.0, %v1998
        %v2000 = vpop.f32.mrf.mxu0
        %v2001 = vpop.f32.mrf.mxu0
        %v2002 = vadd.f32 0.0, %v2001
        %v2003 = vpop.f32.mrf.mxu0
        %2004 = vmatprep.mubr.bf16.mxu0 0
        %2005 = vmatmul.mubr.bf16.gmra.mxu0 %v1851
        %v2006 = vpop.f32.mrf.mxu0
        %v2007 = vadd.f32 0.0, %v2006
        %v2008 = vpop.f32.mrf.mxu0
        %v2009 = vpop.f32.mrf.mxu0
        %v2010 = vadd.f32 0.0, %v2009
        %v2011 = vpop.f32.mrf.mxu0
        %2012 = vmatprep.mubr.bf16.mxu0 0
        %2013 = vmatmul.mubr.bf16.gmra.mxu0 %v1854
        %v2014 = vpop.f32.mrf.mxu0
        %v2015 = vadd.f32 0.0, %v2014
        %v2016 = vpop.f32.mrf.mxu0
        %v2017 = vpop.f32.mrf.mxu0
        %v2018 = vadd.f32 0.0, %v2017
        %v2019 = vpop.f32.mrf.mxu0
        %2020 = vmatprep.mubr.bf16.mxu0 0
        %2021 = vmatmul.mubr.bf16.gmra.mxu0 %v1857
        %v2022 = vpop.f32.mrf.mxu0
        %v2023 = vadd.f32 0.0, %v2022
        %v2024 = vpop.f32.mrf.mxu0
        %v2025 = vpop.f32.mrf.mxu0
        %v2026 = vadd.f32 0.0, %v2025
        %v2027 = vpop.f32.mrf.mxu0
        %2028 = vmatprep.mubr.bf16.mxu0 0
        %2029 = vmatmul.mubr.bf16.gmra.mxu0 %v1860
        %v2030 = vpop.f32.mrf.mxu0
        %v2031 = vadd.f32 0.0, %v2030
        %v2032 = vpop.f32.mrf.mxu0
        %v2033 = vpop.f32.mrf.mxu0
        %v2034 = vadd.f32 0.0, %v2033
        %v2035 = vpop.f32.mrf.mxu0
        %2036 = vmatprep.mubr.bf16.mxu0 0
        %2037 = vmatmul.mubr.bf16.gmra.mxu0 %v1863
        %v2038 = vpop.f32.mrf.mxu0
        %v2039 = vadd.f32 0.0, %v2038
        %v2040 = vpop.f32.mrf.mxu0
        %v2041 = vpop.f32.mrf.mxu0
        %v2042 = vadd.f32 0.0, %v2041
        %v2043 = vpop.f32.mrf.mxu0
        %2044 = vdwg.mxu0
        %v2045 = vadd.f32 %v1719, %v1903
        %v2046 = vadd.f32 %v1720, %v1906
        %v2047 = vadd.f32 %v1721, %v1911
        %v2048 = vadd.f32 %v1722, %v1914
        %v2049 = vadd.f32 %v1723, %v1919
        %v2050 = vadd.f32 %v1724, %v1922
        %v2051 = vadd.f32 %v1725, %v1927
        %v2052 = vadd.f32 %v1726, %v1930
        %v2053 = vadd.f32 %v1727, %v1935
        %v2054 = vadd.f32 %v1728, %v1938
        %v2055 = vadd.f32 %v1729, %v1943
        %v2056 = vadd.f32 %v1730, %v1946
        %v2057 = vadd.f32 %v1731, %v1951
        %v2058 = vadd.f32 %v1732, %v1954
        %v2059 = vadd.f32 %v1733, %v1959
        %v2060 = vadd.f32 %v1734, %v1962
        %v2061 = vadd.f32 %v1735, %v1967
        %v2062 = vadd.f32 %v1736, %v1970
        %v2063 = vadd.f32 %v1737, %v1975
        %v2064 = vadd.f32 %v1738, %v1978
        %v2065 = vadd.f32 %v1739, %v1983
        %v2066 = vadd.f32 %v1740, %v1986
        %v2067 = vadd.f32 %v1741, %v1991
        %v2068 = vadd.f32 %v1742, %v1994
        %v2069 = vadd.f32 %v1743, %v1999
        %v2070 = vadd.f32 %v1744, %v2002
        %v2071 = vadd.f32 %v1745, %v2007
        %v2072 = vadd.f32 %v1746, %v2010
        %v2073 = vadd.f32 %v1747, %v2015
        %v2074 = vadd.f32 %v1748, %v2018
        %v2075 = vadd.f32 %v1749, %v2023
        %v2076 = vadd.f32 %v1750, %v2026
        %v2077 = vadd.f32 %v1751, %v2031
        %v2078 = vadd.f32 %v1752, %v2034
        %v2079 = vadd.f32 %v1753, %v2039
        %v2080 = vadd.f32 %v1754, %v2042
        %v2081 = vld [vmem:[%s194 + $0x24] sm:$0xff]
        %v2082 = vld [vmem:[%s194 + $0x2c] sm:$0xff]
        %v2083 = vld [vmem:[%s194 + $0x34] sm:$0xff]
        %v2084 = vld [vmem:[%s194 + $0x3c] sm:$0xff]
        %v2085 = vld [vmem:[%s194 + $0x44] sm:$0xff]
        %v2086 = vld [vmem:[%s194 + $0x4c] sm:$0xff]
        %v2087 = vld [vmem:[%s194 + $0x54] sm:$0xff]
        %v2088 = vld [vmem:[%s194 + $0x5c] sm:$0xff]
        %v2089 = vld [vmem:[%s194 + $0x64] sm:$0xff]
        %v2090 = vld [vmem:[%s194 + $0x6c] sm:$0xff]
        %v2091 = vld [vmem:[%s194 + $0x74] sm:$0xff]
        %v2092 = vld [vmem:[%s194 + $0x7c] sm:$0xff]
        %v2093 = vld [vmem:[%s194 + $0x84] sm:$0xff]
        %v2094 = vld [vmem:[%s194 + $0x8c] sm:$0xff]
        %v2095 = vld [vmem:[%s194 + $0x94] sm:$0xff]
        %v2096 = vld [vmem:[%s194 + $0x9c] sm:$0xff]
        %v2097 = vld [vmem:[%s194 + $0xa4] sm:$0xff]
        %v2098 = vld [vmem:[%s194 + $0xac] sm:$0xff]
        %v2099 = vld [vmem:[%s194 + $0xb4] sm:$0xff]
        %v2100 = vld [vmem:[%s194 + $0xbc] sm:$0xff]
        %v2101 = vld [vmem:[%s194 + $0xc4] sm:$0xff]
        %v2102 = vld [vmem:[%s194 + $0xcc] sm:$0xff]
        %v2103 = vld [vmem:[%s194 + $0xd4] sm:$0xff]
        %v2104 = vld [vmem:[%s194 + $0xdc] sm:$0xff]
        %v2105 = vld [vmem:[%s194 + $0xe4] sm:$0xff]
        %v2106 = vld [vmem:[%s194 + $0xec] sm:$0xff]
        %v2107 = vld [vmem:[%s194 + $0xf4] sm:$0xff]
        %v2108 = vld [vmem:[%s194 + $0xfc] sm:$0xff]
        %v2109 = vld [vmem:[%s194 + $0x104] sm:$0xff]
        %v2110 = vld [vmem:[%s194 + $0x10c] sm:$0xff]
        %v2111 = vld [vmem:[%s194 + $0x114] sm:$0xff]
        %v2112 = vld [vmem:[%s194 + $0x11c] sm:$0xff]
        %v2113 = vld [vmem:[%s194 + $0x124] sm:$0xff]
        %v2114 = vld [vmem:[%s194 + $0x12c] sm:$0xff]
        %v2115 = vld [vmem:[%s194 + $0x134] sm:$0xff]
        %v2116 = vld [vmem:[%s194 + $0x13c] sm:$0x3f]
        %v2117 = vpack.c.bf16 %v2082, %v2081
        %v2118 = vpack.c.bf16 %v2084, %v2083
        %v2119 = vpack.c.bf16 %v2086, %v2085
        %v2120 = vpack.c.bf16 %v2088, %v2087
        %v2121 = vpack.c.bf16 %v2090, %v2089
        %v2122 = vpack.c.bf16 %v2092, %v2091
        %v2123 = vpack.c.bf16 %v2094, %v2093
        %v2124 = vpack.c.bf16 %v2096, %v2095
        %v2125 = vpack.c.bf16 %v2098, %v2097
        %v2126 = vpack.c.bf16 %v2100, %v2099
        %v2127 = vpack.c.bf16 %v2102, %v2101
        %v2128 = vpack.c.bf16 %v2104, %v2103
        %v2129 = vpack.c.bf16 %v2106, %v2105
        %v2130 = vpack.c.bf16 %v2108, %v2107
        %v2131 = vpack.c.bf16 %v2110, %v2109
        %v2132 = vpack.c.bf16 %v2112, %v2111
        %v2133 = vpack.c.bf16 %v2114, %v2113
        %v2134 = vpack.c.bf16 %v2116, %v2115
        %s2135 = scalar_lea.vmem %s1, 12
        %v2136 = vld [vmem:[%s2135] sm:$0x3]
        %v2138 = vsel %vm307, %v2117, 0
        %v2141 = vsel %vm307, %v2118, 0
        %v2144 = vsel %vm307, %v2119, 0
        %v2147 = vsel %vm307, %v2120, 0
        %v2150 = vsel %vm307, %v2121, 0
        %v2153 = vsel %vm307, %v2122, 0
        %v2156 = vsel %vm307, %v2123, 0
        %v2159 = vsel %vm307, %v2124, 0
        %v2162 = vsel %vm307, %v2125, 0
        %v2165 = vsel %vm307, %v2126, 0
        %v2168 = vsel %vm307, %v2127, 0
        %v2171 = vsel %vm307, %v2128, 0
        %v2174 = vsel %vm307, %v2129, 0
        %v2177 = vsel %vm307, %v2130, 0
        %v2180 = vsel %vm307, %v2131, 0
        %v2183 = vsel %vm307, %v2132, 0
        %v2186 = vsel %vm307, %v2133, 0
        %v2189 = vsel %vm307, %v2134, 0
        %v2192 = vsel %vm362, %v2136, 0
        %2194 = vmatprep.subr.bf16.mxu0 0
        %2195 = vmatpush1.bf16.msra.mxu0 0
        %2196 = vmatprep.subr.bf16.mxu0 0
        %2197 = vmatpush1.bf16.msra.mxu0 0
        %2198 = vmatprep.subr.bf16.mxu0 0
        %2199 = vmatpush1.bf16.msra.mxu0 0
        %2200 = vmatprep.subr.bf16.mxu0 0
        %2201 = vmatpush1.bf16.msra.mxu0 0
        %2202 = vmatprep.subr.bf16.mxu0 0
        %2203 = vmatpush1.bf16.msra.mxu0 0
        %2204 = vmatprep.subr.bf16.mxu0 0
        %2205 = vmatpush1.bf16.msra.mxu0 0
        %2206 = vmatprep.subr.bf16.mxu0 0
        %2207 = vmatpush1.bf16.msra.mxu0 0
        %2208 = vmatprep.subr.bf16.mxu0 0
        %2209 = vmatpush1.bf16.msra.mxu0 %v2192
        %2210 = vmatprep.subr.bf16.mxu0 0
        %2211 = vmatpush2.bf16.msra.mxu0 0
        %2212 = vmatprep.subr.bf16.mxu0 0
        %2213 = vmatpush2.bf16.msra.mxu0 0
        %2214 = vmatprep.subr.bf16.mxu0 0
        %2215 = vmatpush2.bf16.msra.mxu0 0
        %2216 = vmatprep.subr.bf16.mxu0 0
        %2217 = vmatpush2.bf16.msra.mxu0 0
        %2218 = vmatprep.subr.bf16.mxu0 0
        %2219 = vmatpush2.bf16.msra.mxu0 0
        %2220 = vmatprep.subr.bf16.mxu0 0
        %2221 = vmatpush2.bf16.msra.mxu0 0
        %2222 = vmatprep.subr.bf16.mxu0 0
        %2223 = vmatpush2.bf16.msra.mxu0 0
        %2224 = vmatprep.subr.bf16.mxu0 0
        %2225 = vmatpush2.bf16.msra.mxu0 0
        %2226 = vmatprep.mubr.bf16.mxu0 0
        %2227 = vmatmul.mubr.bf16.gmra.mxu0 %v2138
        %v2228 = vpop.f32.mrf.mxu0
        %v2229 = vadd.f32 0.0, %v2228
        %v2230 = vpop.f32.mrf.mxu0
        %v2231 = vpop.f32.mrf.mxu0
        %v2232 = vadd.f32 0.0, %v2231
        %v2233 = vpop.f32.mrf.mxu0
        %2234 = vmatprep.mubr.bf16.mxu0 0
        %2235 = vmatmul.mubr.bf16.gmra.mxu0 %v2141
        %v2236 = vpop.f32.mrf.mxu0
        %v2237 = vadd.f32 0.0, %v2236
        %v2238 = vpop.f32.mrf.mxu0
        %v2239 = vpop.f32.mrf.mxu0
        %v2240 = vadd.f32 0.0, %v2239
        %v2241 = vpop.f32.mrf.mxu0
        %2242 = vmatprep.mubr.bf16.mxu0 0
        %2243 = vmatmul.mubr.bf16.gmra.mxu0 %v2144
        %v2244 = vpop.f32.mrf.mxu0
        %v2245 = vadd.f32 0.0, %v2244
        %v2246 = vpop.f32.mrf.mxu0
        %v2247 = vpop.f32.mrf.mxu0
        %v2248 = vadd.f32 0.0, %v2247
        %v2249 = vpop.f32.mrf.mxu0
        %2250 = vmatprep.mubr.bf16.mxu0 0
        %2251 = vmatmul.mubr.bf16.gmra.mxu0 %v2147
        %v2252 = vpop.f32.mrf.mxu0
        %v2253 = vadd.f32 0.0, %v2252
        %v2254 = vpop.f32.mrf.mxu0
        %v2255 = vpop.f32.mrf.mxu0
        %v2256 = vadd.f32 0.0, %v2255
        %v2257 = vpop.f32.mrf.mxu0
        %2258 = vmatprep.mubr.bf16.mxu0 0
        %2259 = vmatmul.mubr.bf16.gmra.mxu0 %v2150
        %v2260 = vpop.f32.mrf.mxu0
        %v2261 = vadd.f32 0.0, %v2260
        %v2262 = vpop.f32.mrf.mxu0
        %v2263 = vpop.f32.mrf.mxu0
        %v2264 = vadd.f32 0.0, %v2263
        %v2265 = vpop.f32.mrf.mxu0
        %2266 = vmatprep.mubr.bf16.mxu0 0
        %2267 = vmatmul.mubr.bf16.gmra.mxu0 %v2153
        %v2268 = vpop.f32.mrf.mxu0
        %v2269 = vadd.f32 0.0, %v2268
        %v2270 = vpop.f32.mrf.mxu0
        %v2271 = vpop.f32.mrf.mxu0
        %v2272 = vadd.f32 0.0, %v2271
        %v2273 = vpop.f32.mrf.mxu0
        %2274 = vmatprep.mubr.bf16.mxu0 0
        %2275 = vmatmul.mubr.bf16.gmra.mxu0 %v2156
        %v2276 = vpop.f32.mrf.mxu0
        %v2277 = vadd.f32 0.0, %v2276
        %v2278 = vpop.f32.mrf.mxu0
        %v2279 = vpop.f32.mrf.mxu0
        %v2280 = vadd.f32 0.0, %v2279
        %v2281 = vpop.f32.mrf.mxu0
        %2282 = vmatprep.mubr.bf16.mxu0 0
        %2283 = vmatmul.mubr.bf16.gmra.mxu0 %v2159
        %v2284 = vpop.f32.mrf.mxu0
        %v2285 = vadd.f32 0.0, %v2284
        %v2286 = vpop.f32.mrf.mxu0
        %v2287 = vpop.f32.mrf.mxu0
        %v2288 = vadd.f32 0.0, %v2287
        %v2289 = vpop.f32.mrf.mxu0
        %2290 = vmatprep.mubr.bf16.mxu0 0
        %2291 = vmatmul.mubr.bf16.gmra.mxu0 %v2162
        %v2292 = vpop.f32.mrf.mxu0
        %v2293 = vadd.f32 0.0, %v2292
        %v2294 = vpop.f32.mrf.mxu0
        %v2295 = vpop.f32.mrf.mxu0
        %v2296 = vadd.f32 0.0, %v2295
        %v2297 = vpop.f32.mrf.mxu0
        %2298 = vmatprep.mubr.bf16.mxu0 0
        %2299 = vmatmul.mubr.bf16.gmra.mxu0 %v2165
        %v2300 = vpop.f32.mrf.mxu0
        %v2301 = vadd.f32 0.0, %v2300
        %v2302 = vpop.f32.mrf.mxu0
        %v2303 = vpop.f32.mrf.mxu0
        %v2304 = vadd.f32 0.0, %v2303
        %v2305 = vpop.f32.mrf.mxu0
        %2306 = vmatprep.mubr.bf16.mxu0 0
        %2307 = vmatmul.mubr.bf16.gmra.mxu0 %v2168
        %v2308 = vpop.f32.mrf.mxu0
        %v2309 = vadd.f32 0.0, %v2308
        %v2310 = vpop.f32.mrf.mxu0
        %v2311 = vpop.f32.mrf.mxu0
        %v2312 = vadd.f32 0.0, %v2311
        %v2313 = vpop.f32.mrf.mxu0
        %2314 = vmatprep.mubr.bf16.mxu0 0
        %2315 = vmatmul.mubr.bf16.gmra.mxu0 %v2171
        %v2316 = vpop.f32.mrf.mxu0
        %v2317 = vadd.f32 0.0, %v2316
        %v2318 = vpop.f32.mrf.mxu0
        %v2319 = vpop.f32.mrf.mxu0
        %v2320 = vadd.f32 0.0, %v2319
        %v2321 = vpop.f32.mrf.mxu0
        %2322 = vmatprep.mubr.bf16.mxu0 0
        %2323 = vmatmul.mubr.bf16.gmra.mxu0 %v2174
        %v2324 = vpop.f32.mrf.mxu0
        %v2325 = vadd.f32 0.0, %v2324
        %v2326 = vpop.f32.mrf.mxu0
        %v2327 = vpop.f32.mrf.mxu0
        %v2328 = vadd.f32 0.0, %v2327
        %v2329 = vpop.f32.mrf.mxu0
        %2330 = vmatprep.mubr.bf16.mxu0 0
        %2331 = vmatmul.mubr.bf16.gmra.mxu0 %v2177
        %v2332 = vpop.f32.mrf.mxu0
        %v2333 = vadd.f32 0.0, %v2332
        %v2334 = vpop.f32.mrf.mxu0
        %v2335 = vpop.f32.mrf.mxu0
        %v2336 = vadd.f32 0.0, %v2335
        %v2337 = vpop.f32.mrf.mxu0
        %2338 = vmatprep.mubr.bf16.mxu0 0
        %2339 = vmatmul.mubr.bf16.gmra.mxu0 %v2180
        %v2340 = vpop.f32.mrf.mxu0
        %v2341 = vadd.f32 0.0, %v2340
        %v2342 = vpop.f32.mrf.mxu0
        %v2343 = vpop.f32.mrf.mxu0
        %v2344 = vadd.f32 0.0, %v2343
        %v2345 = vpop.f32.mrf.mxu0
        %2346 = vmatprep.mubr.bf16.mxu0 0
        %2347 = vmatmul.mubr.bf16.gmra.mxu0 %v2183
        %v2348 = vpop.f32.mrf.mxu0
        %v2349 = vadd.f32 0.0, %v2348
        %v2350 = vpop.f32.mrf.mxu0
        %v2351 = vpop.f32.mrf.mxu0
        %v2352 = vadd.f32 0.0, %v2351
        %v2353 = vpop.f32.mrf.mxu0
        %2354 = vmatprep.mubr.bf16.mxu0 0
        %2355 = vmatmul.mubr.bf16.gmra.mxu0 %v2186
        %v2356 = vpop.f32.mrf.mxu0
        %v2357 = vadd.f32 0.0, %v2356
        %v2358 = vpop.f32.mrf.mxu0
        %v2359 = vpop.f32.mrf.mxu0
        %v2360 = vadd.f32 0.0, %v2359
        %v2361 = vpop.f32.mrf.mxu0
        %2362 = vmatprep.mubr.bf16.mxu0 0
        %2363 = vmatmul.mubr.bf16.gmra.mxu0 %v2189
        %v2364 = vpop.f32.mrf.mxu0
        %v2365 = vadd.f32 0.0, %v2364
        %v2366 = vpop.f32.mrf.mxu0
        %v2367 = vpop.f32.mrf.mxu0
        %v2368 = vadd.f32 0.0, %v2367
        %v2369 = vpop.f32.mrf.mxu0
        %2370 = vdwg.mxu0
        %v2371 = vadd.f32 %v2045, %v2229
        %v2372 = vadd.f32 %v2046, %v2232
        %v2373 = vadd.f32 %v2047, %v2237
        %v2374 = vadd.f32 %v2048, %v2240
        %v2375 = vadd.f32 %v2049, %v2245
        %v2376 = vadd.f32 %v2050, %v2248
        %v2377 = vadd.f32 %v2051, %v2253
        %v2378 = vadd.f32 %v2052, %v2256
        %v2379 = vadd.f32 %v2053, %v2261
        %v2380 = vadd.f32 %v2054, %v2264
        %v2381 = vadd.f32 %v2055, %v2269
        %v2382 = vadd.f32 %v2056, %v2272
        %v2383 = vadd.f32 %v2057, %v2277
        %v2384 = vadd.f32 %v2058, %v2280
        %v2385 = vadd.f32 %v2059, %v2285
        %v2386 = vadd.f32 %v2060, %v2288
        %v2387 = vadd.f32 %v2061, %v2293
        %v2388 = vadd.f32 %v2062, %v2296
        %v2389 = vadd.f32 %v2063, %v2301
        %v2390 = vadd.f32 %v2064, %v2304
        %v2391 = vadd.f32 %v2065, %v2309
        %v2392 = vadd.f32 %v2066, %v2312
        %v2393 = vadd.f32 %v2067, %v2317
        %v2394 = vadd.f32 %v2068, %v2320
        %v2395 = vadd.f32 %v2069, %v2325
        %v2396 = vadd.f32 %v2070, %v2328
        %v2397 = vadd.f32 %v2071, %v2333
        %v2398 = vadd.f32 %v2072, %v2336
        %v2399 = vadd.f32 %v2073, %v2341
        %v2400 = vadd.f32 %v2074, %v2344
        %v2401 = vadd.f32 %v2075, %v2349
        %v2402 = vadd.f32 %v2076, %v2352
        %v2403 = vadd.f32 %v2077, %v2357
        %v2404 = vadd.f32 %v2078, %v2360
        %v2405 = vadd.f32 %v2079, %v2365
        %v2406 = vadd.f32 %v2080, %v2368
        %v2407 = vld [vmem:[%s194 + $0x25] sm:$0xff]
        %v2408 = vld [vmem:[%s194 + $0x2d] sm:$0xff]
        %v2409 = vld [vmem:[%s194 + $0x35] sm:$0xff]
        %v2410 = vld [vmem:[%s194 + $0x3d] sm:$0xff]
        %v2411 = vld [vmem:[%s194 + $0x45] sm:$0xff]
        %v2412 = vld [vmem:[%s194 + $0x4d] sm:$0xff]
        %v2413 = vld [vmem:[%s194 + $0x55] sm:$0xff]
        %v2414 = vld [vmem:[%s194 + $0x5d] sm:$0xff]
        %v2415 = vld [vmem:[%s194 + $0x65] sm:$0xff]
        %v2416 = vld [vmem:[%s194 + $0x6d] sm:$0xff]
        %v2417 = vld [vmem:[%s194 + $0x75] sm:$0xff]
        %v2418 = vld [vmem:[%s194 + $0x7d] sm:$0xff]
        %v2419 = vld [vmem:[%s194 + $0x85] sm:$0xff]
        %v2420 = vld [vmem:[%s194 + $0x8d] sm:$0xff]
        %v2421 = vld [vmem:[%s194 + $0x95] sm:$0xff]
        %v2422 = vld [vmem:[%s194 + $0x9d] sm:$0xff]
        %v2423 = vld [vmem:[%s194 + $0xa5] sm:$0xff]
        %v2424 = vld [vmem:[%s194 + $0xad] sm:$0xff]
        %v2425 = vld [vmem:[%s194 + $0xb5] sm:$0xff]
        %v2426 = vld [vmem:[%s194 + $0xbd] sm:$0xff]
        %v2427 = vld [vmem:[%s194 + $0xc5] sm:$0xff]
        %v2428 = vld [vmem:[%s194 + $0xcd] sm:$0xff]
        %v2429 = vld [vmem:[%s194 + $0xd5] sm:$0xff]
        %v2430 = vld [vmem:[%s194 + $0xdd] sm:$0xff]
        %v2431 = vld [vmem:[%s194 + $0xe5] sm:$0xff]
        %v2432 = vld [vmem:[%s194 + $0xed] sm:$0xff]
        %v2433 = vld [vmem:[%s194 + $0xf5] sm:$0xff]
        %v2434 = vld [vmem:[%s194 + $0xfd] sm:$0xff]
        %v2435 = vld [vmem:[%s194 + $0x105] sm:$0xff]
        %v2436 = vld [vmem:[%s194 + $0x10d] sm:$0xff]
        %v2437 = vld [vmem:[%s194 + $0x115] sm:$0xff]
        %v2438 = vld [vmem:[%s194 + $0x11d] sm:$0xff]
        %v2439 = vld [vmem:[%s194 + $0x125] sm:$0xff]
        %v2440 = vld [vmem:[%s194 + $0x12d] sm:$0xff]
        %v2441 = vld [vmem:[%s194 + $0x135] sm:$0xff]
        %v2442 = vld [vmem:[%s194 + $0x13d] sm:$0x3f]
        %v2443 = vpack.c.bf16 %v2408, %v2407
        %v2444 = vpack.c.bf16 %v2410, %v2409
        %v2445 = vpack.c.bf16 %v2412, %v2411
        %v2446 = vpack.c.bf16 %v2414, %v2413
        %v2447 = vpack.c.bf16 %v2416, %v2415
        %v2448 = vpack.c.bf16 %v2418, %v2417
        %v2449 = vpack.c.bf16 %v2420, %v2419
        %v2450 = vpack.c.bf16 %v2422, %v2421
        %v2451 = vpack.c.bf16 %v2424, %v2423
        %v2452 = vpack.c.bf16 %v2426, %v2425
        %v2453 = vpack.c.bf16 %v2428, %v2427
        %v2454 = vpack.c.bf16 %v2430, %v2429
        %v2455 = vpack.c.bf16 %v2432, %v2431
        %v2456 = vpack.c.bf16 %v2434, %v2433
        %v2457 = vpack.c.bf16 %v2436, %v2435
        %v2458 = vpack.c.bf16 %v2438, %v2437
        %v2459 = vpack.c.bf16 %v2440, %v2439
        %v2460 = vpack.c.bf16 %v2442, %v2441
        %s2461 = scalar_lea.vmem %s1, 14
        %v2462 = vld [vmem:[%s2461] sm:$0x3]
        %v2464 = vsel %vm307, %v2443, 0
        %v2467 = vsel %vm307, %v2444, 0
        %v2470 = vsel %vm307, %v2445, 0
        %v2473 = vsel %vm307, %v2446, 0
        %v2476 = vsel %vm307, %v2447, 0
        %v2479 = vsel %vm307, %v2448, 0
        %v2482 = vsel %vm307, %v2449, 0
        %v2485 = vsel %vm307, %v2450, 0
        %v2488 = vsel %vm307, %v2451, 0
        %v2491 = vsel %vm307, %v2452, 0
        %v2494 = vsel %vm307, %v2453, 0
        %v2497 = vsel %vm307, %v2454, 0
        %v2500 = vsel %vm307, %v2455, 0
        %v2503 = vsel %vm307, %v2456, 0
        %v2506 = vsel %vm307, %v2457, 0
        %v2509 = vsel %vm307, %v2458, 0
        %v2512 = vsel %vm307, %v2459, 0
        %v2515 = vsel %vm307, %v2460, 0
        %v2518 = vsel %vm362, %v2462, 0
        %2520 = vmatprep.subr.bf16.mxu0 0
        %2521 = vmatpush1.bf16.msra.mxu0 0
        %2522 = vmatprep.subr.bf16.mxu0 0
        %2523 = vmatpush1.bf16.msra.mxu0 0
        %2524 = vmatprep.subr.bf16.mxu0 0
        %2525 = vmatpush1.bf16.msra.mxu0 0
        %2526 = vmatprep.subr.bf16.mxu0 0
        %2527 = vmatpush1.bf16.msra.mxu0 0
        %2528 = vmatprep.subr.bf16.mxu0 0
        %2529 = vmatpush1.bf16.msra.mxu0 0
        %2530 = vmatprep.subr.bf16.mxu0 0
        %2531 = vmatpush1.bf16.msra.mxu0 0
        %2532 = vmatprep.subr.bf16.mxu0 0
        %2533 = vmatpush1.bf16.msra.mxu0 0
        %2534 = vmatprep.subr.bf16.mxu0 0
        %2535 = vmatpush1.bf16.msra.mxu0 %v2518
        %2536 = vmatprep.subr.bf16.mxu0 0
        %2537 = vmatpush2.bf16.msra.mxu0 0
        %2538 = vmatprep.subr.bf16.mxu0 0
        %2539 = vmatpush2.bf16.msra.mxu0 0
        %2540 = vmatprep.subr.bf16.mxu0 0
        %2541 = vmatpush2.bf16.msra.mxu0 0
        %2542 = vmatprep.subr.bf16.mxu0 0
        %2543 = vmatpush2.bf16.msra.mxu0 0
        %2544 = vmatprep.subr.bf16.mxu0 0
        %2545 = vmatpush2.bf16.msra.mxu0 0
        %2546 = vmatprep.subr.bf16.mxu0 0
        %2547 = vmatpush2.bf16.msra.mxu0 0
        %2548 = vmatprep.subr.bf16.mxu0 0
        %2549 = vmatpush2.bf16.msra.mxu0 0
        %2550 = vmatprep.subr.bf16.mxu0 0
        %2551 = vmatpush2.bf16.msra.mxu0 0
        %2552 = vmatprep.mubr.bf16.mxu0 0
        %2553 = vmatmul.mubr.bf16.gmra.mxu0 %v2464
        %v2554 = vpop.f32.mrf.mxu0
        %v2555 = vadd.f32 0.0, %v2554
        %v2556 = vpop.f32.mrf.mxu0
        %v2557 = vpop.f32.mrf.mxu0
        %v2558 = vadd.f32 0.0, %v2557
        %v2559 = vpop.f32.mrf.mxu0
        %2560 = vmatprep.mubr.bf16.mxu0 0
        %2561 = vmatmul.mubr.bf16.gmra.mxu0 %v2467
        %v2562 = vpop.f32.mrf.mxu0
        %v2563 = vadd.f32 0.0, %v2562
        %v2564 = vpop.f32.mrf.mxu0
        %v2565 = vpop.f32.mrf.mxu0
        %v2566 = vadd.f32 0.0, %v2565
        %v2567 = vpop.f32.mrf.mxu0
        %2568 = vmatprep.mubr.bf16.mxu0 0
        %2569 = vmatmul.mubr.bf16.gmra.mxu0 %v2470
        %v2570 = vpop.f32.mrf.mxu0
        %v2571 = vadd.f32 0.0, %v2570
        %v2572 = vpop.f32.mrf.mxu0
        %v2573 = vpop.f32.mrf.mxu0
        %v2574 = vadd.f32 0.0, %v2573
        %v2575 = vpop.f32.mrf.mxu0
        %2576 = vmatprep.mubr.bf16.mxu0 0
        %2577 = vmatmul.mubr.bf16.gmra.mxu0 %v2473
        %v2578 = vpop.f32.mrf.mxu0
        %v2579 = vadd.f32 0.0, %v2578
        %v2580 = vpop.f32.mrf.mxu0
        %v2581 = vpop.f32.mrf.mxu0
        %v2582 = vadd.f32 0.0, %v2581
        %v2583 = vpop.f32.mrf.mxu0
        %2584 = vmatprep.mubr.bf16.mxu0 0
        %2585 = vmatmul.mubr.bf16.gmra.mxu0 %v2476
        %v2586 = vpop.f32.mrf.mxu0
        %v2587 = vadd.f32 0.0, %v2586
        %v2588 = vpop.f32.mrf.mxu0
        %v2589 = vpop.f32.mrf.mxu0
        %v2590 = vadd.f32 0.0, %v2589
        %v2591 = vpop.f32.mrf.mxu0
        %2592 = vmatprep.mubr.bf16.mxu0 0
        %2593 = vmatmul.mubr.bf16.gmra.mxu0 %v2479
        %v2594 = vpop.f32.mrf.mxu0
        %v2595 = vadd.f32 0.0, %v2594
        %v2596 = vpop.f32.mrf.mxu0
        %v2597 = vpop.f32.mrf.mxu0
        %v2598 = vadd.f32 0.0, %v2597
        %v2599 = vpop.f32.mrf.mxu0
        %2600 = vmatprep.mubr.bf16.mxu0 0
        %2601 = vmatmul.mubr.bf16.gmra.mxu0 %v2482
        %v2602 = vpop.f32.mrf.mxu0
        %v2603 = vadd.f32 0.0, %v2602
        %v2604 = vpop.f32.mrf.mxu0
        %v2605 = vpop.f32.mrf.mxu0
        %v2606 = vadd.f32 0.0, %v2605
        %v2607 = vpop.f32.mrf.mxu0
        %2608 = vmatprep.mubr.bf16.mxu0 0
        %2609 = vmatmul.mubr.bf16.gmra.mxu0 %v2485
        %v2610 = vpop.f32.mrf.mxu0
        %v2611 = vadd.f32 0.0, %v2610
        %v2612 = vpop.f32.mrf.mxu0
        %v2613 = vpop.f32.mrf.mxu0
        %v2614 = vadd.f32 0.0, %v2613
        %v2615 = vpop.f32.mrf.mxu0
        %2616 = vmatprep.mubr.bf16.mxu0 0
        %2617 = vmatmul.mubr.bf16.gmra.mxu0 %v2488
        %v2618 = vpop.f32.mrf.mxu0
        %v2619 = vadd.f32 0.0, %v2618
        %v2620 = vpop.f32.mrf.mxu0
        %v2621 = vpop.f32.mrf.mxu0
        %v2622 = vadd.f32 0.0, %v2621
        %v2623 = vpop.f32.mrf.mxu0
        %2624 = vmatprep.mubr.bf16.mxu0 0
        %2625 = vmatmul.mubr.bf16.gmra.mxu0 %v2491
        %v2626 = vpop.f32.mrf.mxu0
        %v2627 = vadd.f32 0.0, %v2626
        %v2628 = vpop.f32.mrf.mxu0
        %v2629 = vpop.f32.mrf.mxu0
        %v2630 = vadd.f32 0.0, %v2629
        %v2631 = vpop.f32.mrf.mxu0
        %2632 = vmatprep.mubr.bf16.mxu0 0
        %2633 = vmatmul.mubr.bf16.gmra.mxu0 %v2494
        %v2634 = vpop.f32.mrf.mxu0
        %v2635 = vadd.f32 0.0, %v2634
        %v2636 = vpop.f32.mrf.mxu0
        %v2637 = vpop.f32.mrf.mxu0
        %v2638 = vadd.f32 0.0, %v2637
        %v2639 = vpop.f32.mrf.mxu0
        %2640 = vmatprep.mubr.bf16.mxu0 0
        %2641 = vmatmul.mubr.bf16.gmra.mxu0 %v2497
        %v2642 = vpop.f32.mrf.mxu0
        %v2643 = vadd.f32 0.0, %v2642
        %v2644 = vpop.f32.mrf.mxu0
        %v2645 = vpop.f32.mrf.mxu0
        %v2646 = vadd.f32 0.0, %v2645
        %v2647 = vpop.f32.mrf.mxu0
        %2648 = vmatprep.mubr.bf16.mxu0 0
        %2649 = vmatmul.mubr.bf16.gmra.mxu0 %v2500
        %v2650 = vpop.f32.mrf.mxu0
        %v2651 = vadd.f32 0.0, %v2650
        %v2652 = vpop.f32.mrf.mxu0
        %v2653 = vpop.f32.mrf.mxu0
        %v2654 = vadd.f32 0.0, %v2653
        %v2655 = vpop.f32.mrf.mxu0
        %2656 = vmatprep.mubr.bf16.mxu0 0
        %2657 = vmatmul.mubr.bf16.gmra.mxu0 %v2503
        %v2658 = vpop.f32.mrf.mxu0
        %v2659 = vadd.f32 0.0, %v2658
        %v2660 = vpop.f32.mrf.mxu0
        %v2661 = vpop.f32.mrf.mxu0
        %v2662 = vadd.f32 0.0, %v2661
        %v2663 = vpop.f32.mrf.mxu0
        %2664 = vmatprep.mubr.bf16.mxu0 0
        %2665 = vmatmul.mubr.bf16.gmra.mxu0 %v2506
        %v2666 = vpop.f32.mrf.mxu0
        %v2667 = vadd.f32 0.0, %v2666
        %v2668 = vpop.f32.mrf.mxu0
        %v2669 = vpop.f32.mrf.mxu0
        %v2670 = vadd.f32 0.0, %v2669
        %v2671 = vpop.f32.mrf.mxu0
        %2672 = vmatprep.mubr.bf16.mxu0 0
        %2673 = vmatmul.mubr.bf16.gmra.mxu0 %v2509
        %v2674 = vpop.f32.mrf.mxu0
        %v2675 = vadd.f32 0.0, %v2674
        %v2676 = vpop.f32.mrf.mxu0
        %v2677 = vpop.f32.mrf.mxu0
        %v2678 = vadd.f32 0.0, %v2677
        %v2679 = vpop.f32.mrf.mxu0
        %2680 = vmatprep.mubr.bf16.mxu0 0
        %2681 = vmatmul.mubr.bf16.gmra.mxu0 %v2512
        %v2682 = vpop.f32.mrf.mxu0
        %v2683 = vadd.f32 0.0, %v2682
        %v2684 = vpop.f32.mrf.mxu0
        %v2685 = vpop.f32.mrf.mxu0
        %v2686 = vadd.f32 0.0, %v2685
        %v2687 = vpop.f32.mrf.mxu0
        %2688 = vmatprep.mubr.bf16.mxu0 0
        %2689 = vmatmul.mubr.bf16.gmra.mxu0 %v2515
        %v2690 = vpop.f32.mrf.mxu0
        %v2691 = vadd.f32 0.0, %v2690
        %v2692 = vpop.f32.mrf.mxu0
        %v2693 = vpop.f32.mrf.mxu0
        %v2694 = vadd.f32 0.0, %v2693
        %v2695 = vpop.f32.mrf.mxu0
        %2696 = vdwg.mxu0
        %v2697 = vadd.f32 %v2371, %v2555
        %v2698 = vadd.f32 %v2372, %v2558
        %v2699 = vadd.f32 %v2373, %v2563
        %v2700 = vadd.f32 %v2374, %v2566
        %v2701 = vadd.f32 %v2375, %v2571
        %v2702 = vadd.f32 %v2376, %v2574
        %v2703 = vadd.f32 %v2377, %v2579
        %v2704 = vadd.f32 %v2378, %v2582
        %v2705 = vadd.f32 %v2379, %v2587
        %v2706 = vadd.f32 %v2380, %v2590
        %v2707 = vadd.f32 %v2381, %v2595
        %v2708 = vadd.f32 %v2382, %v2598
        %v2709 = vadd.f32 %v2383, %v2603
        %v2710 = vadd.f32 %v2384, %v2606
        %v2711 = vadd.f32 %v2385, %v2611
        %v2712 = vadd.f32 %v2386, %v2614
        %v2713 = vadd.f32 %v2387, %v2619
        %v2714 = vadd.f32 %v2388, %v2622
        %v2715 = vadd.f32 %v2389, %v2627
        %v2716 = vadd.f32 %v2390, %v2630
        %v2717 = vadd.f32 %v2391, %v2635
        %v2718 = vadd.f32 %v2392, %v2638
        %v2719 = vadd.f32 %v2393, %v2643
        %v2720 = vadd.f32 %v2394, %v2646
        %v2721 = vadd.f32 %v2395, %v2651
        %v2722 = vadd.f32 %v2396, %v2654
        %v2723 = vadd.f32 %v2397, %v2659
        %v2724 = vadd.f32 %v2398, %v2662
        %v2725 = vadd.f32 %v2399, %v2667
        %v2726 = vadd.f32 %v2400, %v2670
        %v2727 = vadd.f32 %v2401, %v2675
        %v2728 = vadd.f32 %v2402, %v2678
        %v2729 = vadd.f32 %v2403, %v2683
        %v2730 = vadd.f32 %v2404, %v2686
        %v2731 = vadd.f32 %v2405, %v2691
        %v2732 = vadd.f32 %v2406, %v2694
        %v2733 = vld [vmem:[%s194 + $0x26] sm:$0xff]
        %v2734 = vld [vmem:[%s194 + $0x2e] sm:$0xff]
        %v2735 = vld [vmem:[%s194 + $0x36] sm:$0xff]
        %v2736 = vld [vmem:[%s194 + $0x3e] sm:$0xff]
        %v2737 = vld [vmem:[%s194 + $0x46] sm:$0xff]
        %v2738 = vld [vmem:[%s194 + $0x4e] sm:$0xff]
        %v2739 = vld [vmem:[%s194 + $0x56] sm:$0xff]
        %v2740 = vld [vmem:[%s194 + $0x5e] sm:$0xff]
        %v2741 = vld [vmem:[%s194 + $0x66] sm:$0xff]
        %v2742 = vld [vmem:[%s194 + $0x6e] sm:$0xff]
        %v2743 = vld [vmem:[%s194 + $0x76] sm:$0xff]
        %v2744 = vld [vmem:[%s194 + $0x7e] sm:$0xff]
        %v2745 = vld [vmem:[%s194 + $0x86] sm:$0xff]
        %v2746 = vld [vmem:[%s194 + $0x8e] sm:$0xff]
        %v2747 = vld [vmem:[%s194 + $0x96] sm:$0xff]
        %v2748 = vld [vmem:[%s194 + $0x9e] sm:$0xff]
        %v2749 = vld [vmem:[%s194 + $0xa6] sm:$0xff]
        %v2750 = vld [vmem:[%s194 + $0xae] sm:$0xff]
        %v2751 = vld [vmem:[%s194 + $0xb6] sm:$0xff]
        %v2752 = vld [vmem:[%s194 + $0xbe] sm:$0xff]
        %v2753 = vld [vmem:[%s194 + $0xc6] sm:$0xff]
        %v2754 = vld [vmem:[%s194 + $0xce] sm:$0xff]
        %v2755 = vld [vmem:[%s194 + $0xd6] sm:$0xff]
        %v2756 = vld [vmem:[%s194 + $0xde] sm:$0xff]
        %v2757 = vld [vmem:[%s194 + $0xe6] sm:$0xff]
        %v2758 = vld [vmem:[%s194 + $0xee] sm:$0xff]
        %v2759 = vld [vmem:[%s194 + $0xf6] sm:$0xff]
        %v2760 = vld [vmem:[%s194 + $0xfe] sm:$0xff]
        %v2761 = vld [vmem:[%s194 + $0x106] sm:$0xff]
        %v2762 = vld [vmem:[%s194 + $0x10e] sm:$0xff]
        %v2763 = vld [vmem:[%s194 + $0x116] sm:$0xff]
        %v2764 = vld [vmem:[%s194 + $0x11e] sm:$0xff]
        %v2765 = vld [vmem:[%s194 + $0x126] sm:$0xff]
        %v2766 = vld [vmem:[%s194 + $0x12e] sm:$0xff]
        %v2767 = vld [vmem:[%s194 + $0x136] sm:$0xff]
        %v2768 = vld [vmem:[%s194 + $0x13e] sm:$0x3f]
        %v2769 = vpack.c.bf16 %v2734, %v2733
        %v2770 = vpack.c.bf16 %v2736, %v2735
        %v2771 = vpack.c.bf16 %v2738, %v2737
        %v2772 = vpack.c.bf16 %v2740, %v2739
        %v2773 = vpack.c.bf16 %v2742, %v2741
        %v2774 = vpack.c.bf16 %v2744, %v2743
        %v2775 = vpack.c.bf16 %v2746, %v2745
        %v2776 = vpack.c.bf16 %v2748, %v2747
        %v2777 = vpack.c.bf16 %v2750, %v2749
        %v2778 = vpack.c.bf16 %v2752, %v2751
        %v2779 = vpack.c.bf16 %v2754, %v2753
        %v2780 = vpack.c.bf16 %v2756, %v2755
        %v2781 = vpack.c.bf16 %v2758, %v2757
        %v2782 = vpack.c.bf16 %v2760, %v2759
        %v2783 = vpack.c.bf16 %v2762, %v2761
        %v2784 = vpack.c.bf16 %v2764, %v2763
        %v2785 = vpack.c.bf16 %v2766, %v2765
        %v2786 = vpack.c.bf16 %v2768, %v2767
        %s2787 = scalar_lea.vmem %s1, 16
        %v2788 = vld [vmem:[%s2787] sm:$0x3]
        %v2790 = vsel %vm307, %v2769, 0
        %v2793 = vsel %vm307, %v2770, 0
        %v2796 = vsel %vm307, %v2771, 0
        %v2799 = vsel %vm307, %v2772, 0
        %v2802 = vsel %vm307, %v2773, 0
        %v2805 = vsel %vm307, %v2774, 0
        %v2808 = vsel %vm307, %v2775, 0
        %v2811 = vsel %vm307, %v2776, 0
        %v2814 = vsel %vm307, %v2777, 0
        %v2817 = vsel %vm307, %v2778, 0
        %v2820 = vsel %vm307, %v2779, 0
        %v2823 = vsel %vm307, %v2780, 0
        %v2826 = vsel %vm307, %v2781, 0
        %v2829 = vsel %vm307, %v2782, 0
        %v2832 = vsel %vm307, %v2783, 0
        %v2835 = vsel %vm307, %v2784, 0
        %v2838 = vsel %vm307, %v2785, 0
        %v2841 = vsel %vm307, %v2786, 0
        %v2844 = vsel %vm362, %v2788, 0
        %2846 = vmatprep.subr.bf16.mxu0 0
        %2847 = vmatpush1.bf16.msra.mxu0 0
        %2848 = vmatprep.subr.bf16.mxu0 0
        %2849 = vmatpush1.bf16.msra.mxu0 0
        %2850 = vmatprep.subr.bf16.mxu0 0
        %2851 = vmatpush1.bf16.msra.mxu0 0
        %2852 = vmatprep.subr.bf16.mxu0 0
        %2853 = vmatpush1.bf16.msra.mxu0 0
        %2854 = vmatprep.subr.bf16.mxu0 0
        %2855 = vmatpush1.bf16.msra.mxu0 0
        %2856 = vmatprep.subr.bf16.mxu0 0
        %2857 = vmatpush1.bf16.msra.mxu0 0
        %2858 = vmatprep.subr.bf16.mxu0 0
        %2859 = vmatpush1.bf16.msra.mxu0 0
        %2860 = vmatprep.subr.bf16.mxu0 0
        %2861 = vmatpush1.bf16.msra.mxu0 %v2844
        %2862 = vmatprep.subr.bf16.mxu0 0
        %2863 = vmatpush2.bf16.msra.mxu0 0
        %2864 = vmatprep.subr.bf16.mxu0 0
        %2865 = vmatpush2.bf16.msra.mxu0 0
        %2866 = vmatprep.subr.bf16.mxu0 0
        %2867 = vmatpush2.bf16.msra.mxu0 0
        %2868 = vmatprep.subr.bf16.mxu0 0
        %2869 = vmatpush2.bf16.msra.mxu0 0
        %2870 = vmatprep.subr.bf16.mxu0 0
        %2871 = vmatpush2.bf16.msra.mxu0 0
        %2872 = vmatprep.subr.bf16.mxu0 0
        %2873 = vmatpush2.bf16.msra.mxu0 0
        %2874 = vmatprep.subr.bf16.mxu0 0
        %2875 = vmatpush2.bf16.msra.mxu0 0
        %2876 = vmatprep.subr.bf16.mxu0 0
        %2877 = vmatpush2.bf16.msra.mxu0 0
        %2878 = vmatprep.mubr.bf16.mxu0 0
        %2879 = vmatmul.mubr.bf16.gmra.mxu0 %v2790
        %v2880 = vpop.f32.mrf.mxu0
        %v2881 = vadd.f32 0.0, %v2880
        %v2882 = vpop.f32.mrf.mxu0
        %v2883 = vpop.f32.mrf.mxu0
        %v2884 = vadd.f32 0.0, %v2883
        %v2885 = vpop.f32.mrf.mxu0
        %2886 = vmatprep.mubr.bf16.mxu0 0
        %2887 = vmatmul.mubr.bf16.gmra.mxu0 %v2793
        %v2888 = vpop.f32.mrf.mxu0
        %v2889 = vadd.f32 0.0, %v2888
        %v2890 = vpop.f32.mrf.mxu0
        %v2891 = vpop.f32.mrf.mxu0
        %v2892 = vadd.f32 0.0, %v2891
        %v2893 = vpop.f32.mrf.mxu0
        %2894 = vmatprep.mubr.bf16.mxu0 0
        %2895 = vmatmul.mubr.bf16.gmra.mxu0 %v2796
        %v2896 = vpop.f32.mrf.mxu0
        %v2897 = vadd.f32 0.0, %v2896
        %v2898 = vpop.f32.mrf.mxu0
        %v2899 = vpop.f32.mrf.mxu0
        %v2900 = vadd.f32 0.0, %v2899
        %v2901 = vpop.f32.mrf.mxu0
        %2902 = vmatprep.mubr.bf16.mxu0 0
        %2903 = vmatmul.mubr.bf16.gmra.mxu0 %v2799
        %v2904 = vpop.f32.mrf.mxu0
        %v2905 = vadd.f32 0.0, %v2904
        %v2906 = vpop.f32.mrf.mxu0
        %v2907 = vpop.f32.mrf.mxu0
        %v2908 = vadd.f32 0.0, %v2907
        %v2909 = vpop.f32.mrf.mxu0
        %2910 = vmatprep.mubr.bf16.mxu0 0
        %2911 = vmatmul.mubr.bf16.gmra.mxu0 %v2802
        %v2912 = vpop.f32.mrf.mxu0
        %v2913 = vadd.f32 0.0, %v2912
        %v2914 = vpop.f32.mrf.mxu0
        %v2915 = vpop.f32.mrf.mxu0
        %v2916 = vadd.f32 0.0, %v2915
        %v2917 = vpop.f32.mrf.mxu0
        %2918 = vmatprep.mubr.bf16.mxu0 0
        %2919 = vmatmul.mubr.bf16.gmra.mxu0 %v2805
        %v2920 = vpop.f32.mrf.mxu0
        %v2921 = vadd.f32 0.0, %v2920
        %v2922 = vpop.f32.mrf.mxu0
        %v2923 = vpop.f32.mrf.mxu0
        %v2924 = vadd.f32 0.0, %v2923
        %v2925 = vpop.f32.mrf.mxu0
        %2926 = vmatprep.mubr.bf16.mxu0 0
        %2927 = vmatmul.mubr.bf16.gmra.mxu0 %v2808
        %v2928 = vpop.f32.mrf.mxu0
        %v2929 = vadd.f32 0.0, %v2928
        %v2930 = vpop.f32.mrf.mxu0
        %v2931 = vpop.f32.mrf.mxu0
        %v2932 = vadd.f32 0.0, %v2931
        %v2933 = vpop.f32.mrf.mxu0
        %2934 = vmatprep.mubr.bf16.mxu0 0
        %2935 = vmatmul.mubr.bf16.gmra.mxu0 %v2811
        %v2936 = vpop.f32.mrf.mxu0
        %v2937 = vadd.f32 0.0, %v2936
        %v2938 = vpop.f32.mrf.mxu0
        %v2939 = vpop.f32.mrf.mxu0
        %v2940 = vadd.f32 0.0, %v2939
        %v2941 = vpop.f32.mrf.mxu0
        %2942 = vmatprep.mubr.bf16.mxu0 0
        %2943 = vmatmul.mubr.bf16.gmra.mxu0 %v2814
        %v2944 = vpop.f32.mrf.mxu0
        %v2945 = vadd.f32 0.0, %v2944
        %v2946 = vpop.f32.mrf.mxu0
        %v2947 = vpop.f32.mrf.mxu0
        %v2948 = vadd.f32 0.0, %v2947
        %v2949 = vpop.f32.mrf.mxu0
        %2950 = vmatprep.mubr.bf16.mxu0 0
        %2951 = vmatmul.mubr.bf16.gmra.mxu0 %v2817
        %v2952 = vpop.f32.mrf.mxu0
        %v2953 = vadd.f32 0.0, %v2952
        %v2954 = vpop.f32.mrf.mxu0
        %v2955 = vpop.f32.mrf.mxu0
        %v2956 = vadd.f32 0.0, %v2955
        %v2957 = vpop.f32.mrf.mxu0
        %2958 = vmatprep.mubr.bf16.mxu0 0
        %2959 = vmatmul.mubr.bf16.gmra.mxu0 %v2820
        %v2960 = vpop.f32.mrf.mxu0
        %v2961 = vadd.f32 0.0, %v2960
        %v2962 = vpop.f32.mrf.mxu0
        %v2963 = vpop.f32.mrf.mxu0
        %v2964 = vadd.f32 0.0, %v2963
        %v2965 = vpop.f32.mrf.mxu0
        %2966 = vmatprep.mubr.bf16.mxu0 0
        %2967 = vmatmul.mubr.bf16.gmra.mxu0 %v2823
        %v2968 = vpop.f32.mrf.mxu0
        %v2969 = vadd.f32 0.0, %v2968
        %v2970 = vpop.f32.mrf.mxu0
        %v2971 = vpop.f32.mrf.mxu0
        %v2972 = vadd.f32 0.0, %v2971
        %v2973 = vpop.f32.mrf.mxu0
        %2974 = vmatprep.mubr.bf16.mxu0 0
        %2975 = vmatmul.mubr.bf16.gmra.mxu0 %v2826
        %v2976 = vpop.f32.mrf.mxu0
        %v2977 = vadd.f32 0.0, %v2976
        %v2978 = vpop.f32.mrf.mxu0
        %v2979 = vpop.f32.mrf.mxu0
        %v2980 = vadd.f32 0.0, %v2979
        %v2981 = vpop.f32.mrf.mxu0
        %2982 = vmatprep.mubr.bf16.mxu0 0
        %2983 = vmatmul.mubr.bf16.gmra.mxu0 %v2829
        %v2984 = vpop.f32.mrf.mxu0
        %v2985 = vadd.f32 0.0, %v2984
        %v2986 = vpop.f32.mrf.mxu0
        %v2987 = vpop.f32.mrf.mxu0
        %v2988 = vadd.f32 0.0, %v2987
        %v2989 = vpop.f32.mrf.mxu0
        %2990 = vmatprep.mubr.bf16.mxu0 0
        %2991 = vmatmul.mubr.bf16.gmra.mxu0 %v2832
        %v2992 = vpop.f32.mrf.mxu0
        %v2993 = vadd.f32 0.0, %v2992
        %v2994 = vpop.f32.mrf.mxu0
        %v2995 = vpop.f32.mrf.mxu0
        %v2996 = vadd.f32 0.0, %v2995
        %v2997 = vpop.f32.mrf.mxu0
        %2998 = vmatprep.mubr.bf16.mxu0 0
        %2999 = vmatmul.mubr.bf16.gmra.mxu0 %v2835
        %v3000 = vpop.f32.mrf.mxu0
        %v3001 = vadd.f32 0.0, %v3000
        %v3002 = vpop.f32.mrf.mxu0
        %v3003 = vpop.f32.mrf.mxu0
        %v3004 = vadd.f32 0.0, %v3003
        %v3005 = vpop.f32.mrf.mxu0
        %3006 = vmatprep.mubr.bf16.mxu0 0
        %3007 = vmatmul.mubr.bf16.gmra.mxu0 %v2838
        %v3008 = vpop.f32.mrf.mxu0
        %v3009 = vadd.f32 0.0, %v3008
        %v3010 = vpop.f32.mrf.mxu0
        %v3011 = vpop.f32.mrf.mxu0
        %v3012 = vadd.f32 0.0, %v3011
        %v3013 = vpop.f32.mrf.mxu0
        %3014 = vmatprep.mubr.bf16.mxu0 0
        %3015 = vmatmul.mubr.bf16.gmra.mxu0 %v2841
        %v3016 = vpop.f32.mrf.mxu0
        %v3017 = vadd.f32 0.0, %v3016
        %v3018 = vpop.f32.mrf.mxu0
        %v3019 = vpop.f32.mrf.mxu0
        %v3020 = vadd.f32 0.0, %v3019
        %v3021 = vpop.f32.mrf.mxu0
        %3022 = vdwg.mxu0
        %v3023 = vadd.f32 %v2697, %v2881
        %v3024 = vadd.f32 %v2698, %v2884
        %v3025 = vadd.f32 %v2699, %v2889
        %v3026 = vadd.f32 %v2700, %v2892
        %v3027 = vadd.f32 %v2701, %v2897
        %v3028 = vadd.f32 %v2702, %v2900
        %v3029 = vadd.f32 %v2703, %v2905
        %v3030 = vadd.f32 %v2704, %v2908
        %v3031 = vadd.f32 %v2705, %v2913
        %v3032 = vadd.f32 %v2706, %v2916
        %v3033 = vadd.f32 %v2707, %v2921
        %v3034 = vadd.f32 %v2708, %v2924
        %v3035 = vadd.f32 %v2709, %v2929
        %v3036 = vadd.f32 %v2710, %v2932
        %v3037 = vadd.f32 %v2711, %v2937
        %v3038 = vadd.f32 %v2712, %v2940
        %v3039 = vadd.f32 %v2713, %v2945
        %v3040 = vadd.f32 %v2714, %v2948
        %v3041 = vadd.f32 %v2715, %v2953
        %v3042 = vadd.f32 %v2716, %v2956
        %v3043 = vadd.f32 %v2717, %v2961
        %v3044 = vadd.f32 %v2718, %v2964
        %v3045 = vadd.f32 %v2719, %v2969
        %v3046 = vadd.f32 %v2720, %v2972
        %v3047 = vadd.f32 %v2721, %v2977
        %v3048 = vadd.f32 %v2722, %v2980
        %v3049 = vadd.f32 %v2723, %v2985
        %v3050 = vadd.f32 %v2724, %v2988
        %v3051 = vadd.f32 %v2725, %v2993
        %v3052 = vadd.f32 %v2726, %v2996
        %v3053 = vadd.f32 %v2727, %v3001
        %v3054 = vadd.f32 %v2728, %v3004
        %v3055 = vadd.f32 %v2729, %v3009
        %v3056 = vadd.f32 %v2730, %v3012
        %v3057 = vadd.f32 %v2731, %v3017
        %v3058 = vadd.f32 %v2732, %v3020
        %v3059 = vld [vmem:[%s2] sm:$0x1]
        %v3061 = vlaneseq
        %v3062 = vshrl.u32 %v3061, 7
        %v3063 = vsub.s32 0, %v3062
        %v3064 = vrot.slane %v3059, %v3063
        %v3066 = vadd.f32 %v3023, %v3064
        %v3067 = vadd.f32 %v3024, %v3064
        %v3068 = vadd.f32 %v3025, %v3064
        %v3069 = vadd.f32 %v3026, %v3064
        %v3070 = vadd.f32 %v3027, %v3064
        %v3071 = vadd.f32 %v3028, %v3064
        %v3072 = vadd.f32 %v3029, %v3064
        %v3073 = vadd.f32 %v3030, %v3064
        %v3074 = vadd.f32 %v3031, %v3064
        %v3075 = vadd.f32 %v3032, %v3064
        %v3076 = vadd.f32 %v3033, %v3064
        %v3077 = vadd.f32 %v3034, %v3064
        %v3078 = vadd.f32 %v3035, %v3064
        %v3079 = vadd.f32 %v3036, %v3064
        %v3080 = vadd.f32 %v3037, %v3064
        %v3081 = vadd.f32 %v3038, %v3064
        %v3082 = vadd.f32 %v3039, %v3064
        %v3083 = vadd.f32 %v3040, %v3064
        %v3084 = vadd.f32 %v3041, %v3064
        %v3085 = vadd.f32 %v3042, %v3064
        %v3086 = vadd.f32 %v3043, %v3064
        %v3087 = vadd.f32 %v3044, %v3064
        %v3088 = vadd.f32 %v3045, %v3064
        %v3089 = vadd.f32 %v3046, %v3064
        %v3090 = vadd.f32 %v3047, %v3064
        %v3091 = vadd.f32 %v3048, %v3064
        %v3092 = vadd.f32 %v3049, %v3064
        %v3093 = vadd.f32 %v3050, %v3064
        %v3094 = vadd.f32 %v3051, %v3064
        %v3095 = vadd.f32 %v3052, %v3064
        %v3096 = vadd.f32 %v3053, %v3064
        %v3097 = vadd.f32 %v3054, %v3064
        %v3098 = vadd.f32 %v3055, %v3064
        %v3099 = vadd.f32 %v3056, %v3064
        %v3100 = vadd.f32 %v3057, %v3064
        %v3101 = vadd.f32 %v3058, %v3064
        %v3102 = vmax.f32 %v3066, 0.0
        %v3103 = vmax.f32 %v3067, 0.0
        %v3104 = vmax.f32 %v3068, 0.0
        %v3105 = vmax.f32 %v3069, 0.0
        %v3106 = vmax.f32 %v3070, 0.0
        %v3107 = vmax.f32 %v3071, 0.0
        %v3108 = vmax.f32 %v3072, 0.0
        %v3109 = vmax.f32 %v3073, 0.0
        %v3110 = vmax.f32 %v3074, 0.0
        %v3111 = vmax.f32 %v3075, 0.0
        %v3112 = vmax.f32 %v3076, 0.0
        %v3113 = vmax.f32 %v3077, 0.0
        %v3114 = vmax.f32 %v3078, 0.0
        %v3115 = vmax.f32 %v3079, 0.0
        %v3116 = vmax.f32 %v3080, 0.0
        %v3117 = vmax.f32 %v3081, 0.0
        %v3118 = vmax.f32 %v3082, 0.0
        %v3119 = vmax.f32 %v3083, 0.0
        %v3120 = vmax.f32 %v3084, 0.0
        %v3121 = vmax.f32 %v3085, 0.0
        %v3122 = vmax.f32 %v3086, 0.0
        %v3123 = vmax.f32 %v3087, 0.0
        %v3124 = vmax.f32 %v3088, 0.0
        %v3125 = vmax.f32 %v3089, 0.0
        %v3126 = vmax.f32 %v3090, 0.0
        %v3127 = vmax.f32 %v3091, 0.0
        %v3128 = vmax.f32 %v3092, 0.0
        %v3129 = vmax.f32 %v3093, 0.0
        %v3130 = vmax.f32 %v3094, 0.0
        %v3131 = vmax.f32 %v3095, 0.0
        %v3132 = vmax.f32 %v3096, 0.0
        %v3133 = vmax.f32 %v3097, 0.0
        %v3134 = vmax.f32 %v3098, 0.0
        %v3135 = vmax.f32 %v3099, 0.0
        %v3136 = vmax.f32 %v3100, 0.0
        %v3137 = vmax.f32 %v3101, 0.0
        %v3138 = vld [vmem:[%s3] sm:$0xff]
        %v3139 = vld [vmem:[%s3 + $0x8] sm:$0xff]
        %v3140 = vld [vmem:[%s3 + $0x10] sm:$0xff]
        %v3141 = vld [vmem:[%s3 + $0x18] sm:$0xff]
        %v3142 = vld [vmem:[%s3 + $0x20] sm:$0xff]
        %v3143 = vld [vmem:[%s3 + $0x28] sm:$0xff]
        %v3144 = vld [vmem:[%s3 + $0x30] sm:$0xff]
        %v3145 = vld [vmem:[%s3 + $0x38] sm:$0xff]
        %v3146 = vld [vmem:[%s3 + $0x40] sm:$0xff]
        %v3147 = vld [vmem:[%s3 + $0x48] sm:$0xff]
        %v3148 = vld [vmem:[%s3 + $0x50] sm:$0xff]
        %v3149 = vld [vmem:[%s3 + $0x58] sm:$0xff]
        %v3150 = vld [vmem:[%s3 + $0x60] sm:$0xff]
        %v3151 = vld [vmem:[%s3 + $0x68] sm:$0xff]
        %v3152 = vld [vmem:[%s3 + $0x70] sm:$0xff]
        %v3153 = vld [vmem:[%s3 + $0x78] sm:$0xff]
        %v3154 = vld [vmem:[%s3 + $0x80] sm:$0xff]
        %v3155 = vld [vmem:[%s3 + $0x88] sm:$0xff]
        %v3156 = vld [vmem:[%s3 + $0x90] sm:$0xff]
        %v3157 = vld [vmem:[%s3 + $0x98] sm:$0xff]
        %v3158 = vld [vmem:[%s3 + $0xa0] sm:$0xff]
        %v3159 = vld [vmem:[%s3 + $0xa8] sm:$0xff]
        %v3160 = vld [vmem:[%s3 + $0xb0] sm:$0xff]
        %v3161 = vld [vmem:[%s3 + $0xb8] sm:$0xff]
        %v3162 = vld [vmem:[%s3 + $0xc0] sm:$0xff]
        %v3163 = vld [vmem:[%s3 + $0xc8] sm:$0xff]
        %v3164 = vld [vmem:[%s3 + $0xd0] sm:$0xff]
        %v3165 = vld [vmem:[%s3 + $0xd8] sm:$0xff]
        %v3166 = vld [vmem:[%s3 + $0xe0] sm:$0xff]
        %v3167 = vld [vmem:[%s3 + $0xe8] sm:$0xff]
        %v3168 = vld [vmem:[%s3 + $0xf0] sm:$0xff]
        %v3169 = vld [vmem:[%s3 + $0xf8] sm:$0xff]
        %v3170 = vld [vmem:[%s3 + $0x100] sm:$0xff]
        %v3171 = vld [vmem:[%s3 + $0x108] sm:$0xff]
        %v3172 = vld [vmem:[%s3 + $0x110] sm:$0xff]
        %v3173 = vld [vmem:[%s3 + $0x118] sm:$0x3f]
        %3175 = vset.pattern.permute.xlu0 0
        %3176 = vperm.xlu0 %3175, %v3138
        %v3177 = vpop.permute.xlu0 %3176
        %3180 = vset.pattern.permute.xlu0 0
        %3181 = vperm.xlu0 %3180, %v3139
        %v3182 = vpop.permute.xlu0 %3181
        %3185 = vset.pattern.permute.xlu0 0
        %3186 = vperm.xlu0 %3185, %v3140
        %v3187 = vpop.permute.xlu0 %3186
        %3190 = vset.pattern.permute.xlu0 0
        %3191 = vperm.xlu0 %3190, %v3141
        %v3192 = vpop.permute.xlu0 %3191
        %3195 = vset.pattern.permute.xlu0 0
        %3196 = vperm.xlu0 %3195, %v3142
        %v3197 = vpop.permute.xlu0 %3196
        %3200 = vset.pattern.permute.xlu0 0
        %3201 = vperm.xlu0 %3200, %v3143
        %v3202 = vpop.permute.xlu0 %3201
        %3205 = vset.pattern.permute.xlu0 0
        %3206 = vperm.xlu0 %3205, %v3144
        %v3207 = vpop.permute.xlu0 %3206
        %3210 = vset.pattern.permute.xlu0 0
        %3211 = vperm.xlu0 %3210, %v3145
        %v3212 = vpop.permute.xlu0 %3211
        %3215 = vset.pattern.permute.xlu0 0
        %3216 = vperm.xlu0 %3215, %v3146
        %v3217 = vpop.permute.xlu0 %3216
        %3220 = vset.pattern.permute.xlu0 0
        %3221 = vperm.xlu0 %3220, %v3147
        %v3222 = vpop.permute.xlu0 %3221
        %3225 = vset.pattern.permute.xlu0 0
        %3226 = vperm.xlu0 %3225, %v3148
        %v3227 = vpop.permute.xlu0 %3226
        %3230 = vset.pattern.permute.xlu0 0
        %3231 = vperm.xlu0 %3230, %v3149
        %v3232 = vpop.permute.xlu0 %3231
        %3235 = vset.pattern.permute.xlu0 0
        %3236 = vperm.xlu0 %3235, %v3150
        %v3237 = vpop.permute.xlu0 %3236
        %3240 = vset.pattern.permute.xlu0 0
        %3241 = vperm.xlu0 %3240, %v3151
        %v3242 = vpop.permute.xlu0 %3241
        %3245 = vset.pattern.permute.xlu0 0
        %3246 = vperm.xlu0 %3245, %v3152
        %v3247 = vpop.permute.xlu0 %3246
        %3250 = vset.pattern.permute.xlu0 0
        %3251 = vperm.xlu0 %3250, %v3153
        %v3252 = vpop.permute.xlu0 %3251
        %3255 = vset.pattern.permute.xlu0 0
        %3256 = vperm.xlu0 %3255, %v3154
        %v3257 = vpop.permute.xlu0 %3256
        %3260 = vset.pattern.permute.xlu0 0
        %3261 = vperm.xlu0 %3260, %v3155
        %v3262 = vpop.permute.xlu0 %3261
        %3265 = vset.pattern.permute.xlu0 0
        %3266 = vperm.xlu0 %3265, %v3156
        %v3267 = vpop.permute.xlu0 %3266
        %3270 = vset.pattern.permute.xlu0 0
        %3271 = vperm.xlu0 %3270, %v3157
        %v3272 = vpop.permute.xlu0 %3271
        %3275 = vset.pattern.permute.xlu0 0
        %3276 = vperm.xlu0 %3275, %v3158
        %v3277 = vpop.permute.xlu0 %3276
        %3280 = vset.pattern.permute.xlu0 0
        %3281 = vperm.xlu0 %3280, %v3159
        %v3282 = vpop.permute.xlu0 %3281
        %3285 = vset.pattern.permute.xlu0 0
        %3286 = vperm.xlu0 %3285, %v3160
        %v3287 = vpop.permute.xlu0 %3286
        %3290 = vset.pattern.permute.xlu0 0
        %3291 = vperm.xlu0 %3290, %v3161
        %v3292 = vpop.permute.xlu0 %3291
        %3295 = vset.pattern.permute.xlu0 0
        %3296 = vperm.xlu0 %3295, %v3162
        %v3297 = vpop.permute.xlu0 %3296
        %3300 = vset.pattern.permute.xlu0 0
        %3301 = vperm.xlu0 %3300, %v3163
        %v3302 = vpop.permute.xlu0 %3301
        %3305 = vset.pattern.permute.xlu0 0
        %3306 = vperm.xlu0 %3305, %v3164
        %v3307 = vpop.permute.xlu0 %3306
        %3310 = vset.pattern.permute.xlu0 0
        %3311 = vperm.xlu0 %3310, %v3165
        %v3312 = vpop.permute.xlu0 %3311
        %3315 = vset.pattern.permute.xlu0 0
        %3316 = vperm.xlu0 %3315, %v3166
        %v3317 = vpop.permute.xlu0 %3316
        %3320 = vset.pattern.permute.xlu0 0
        %3321 = vperm.xlu0 %3320, %v3167
        %v3322 = vpop.permute.xlu0 %3321
        %3325 = vset.pattern.permute.xlu0 0
        %3326 = vperm.xlu0 %3325, %v3168
        %v3327 = vpop.permute.xlu0 %3326
        %3330 = vset.pattern.permute.xlu0 0
        %3331 = vperm.xlu0 %3330, %v3169
        %v3332 = vpop.permute.xlu0 %3331
        %3335 = vset.pattern.permute.xlu0 0
        %3336 = vperm.xlu0 %3335, %v3170
        %v3337 = vpop.permute.xlu0 %3336
        %3340 = vset.pattern.permute.xlu0 0
        %3341 = vperm.xlu0 %3340, %v3171
        %v3342 = vpop.permute.xlu0 %3341
        %3345 = vset.pattern.permute.xlu0 0
        %3346 = vperm.xlu0 %3345, %v3172
        %v3347 = vpop.permute.xlu0 %3346
        %3350 = vset.pattern.permute.xlu0 0
        %3351 = vperm.xlu0 %3350, %v3173
        %v3352 = vpop.permute.xlu0 %3351
        %v3354 = vmul.f32 %v3102, %v3177
        %v3355 = vmul.f32 %v3103, %v3182
        %v3356 = vmul.f32 %v3104, %v3187
        %v3357 = vmul.f32 %v3105, %v3192
        %v3358 = vmul.f32 %v3106, %v3197
        %v3359 = vmul.f32 %v3107, %v3202
        %v3360 = vmul.f32 %v3108, %v3207
        %v3361 = vmul.f32 %v3109, %v3212
        %v3362 = vmul.f32 %v3110, %v3217
        %v3363 = vmul.f32 %v3111, %v3222
        %v3364 = vmul.f32 %v3112, %v3227
        %v3365 = vmul.f32 %v3113, %v3232
        %v3366 = vmul.f32 %v3114, %v3237
        %v3367 = vmul.f32 %v3115, %v3242
        %v3368 = vmul.f32 %v3116, %v3247
        %v3369 = vmul.f32 %v3117, %v3252
        %v3370 = vmul.f32 %v3118, %v3257
        %v3371 = vmul.f32 %v3119, %v3262
        %v3372 = vmul.f32 %v3120, %v3267
        %v3373 = vmul.f32 %v3121, %v3272
        %v3374 = vmul.f32 %v3122, %v3277
        %v3375 = vmul.f32 %v3123, %v3282
        %v3376 = vmul.f32 %v3124, %v3287
        %v3377 = vmul.f32 %v3125, %v3292
        %v3378 = vmul.f32 %v3126, %v3297
        %v3379 = vmul.f32 %v3127, %v3302
        %v3380 = vmul.f32 %v3128, %v3307
        %v3381 = vmul.f32 %v3129, %v3312
        %v3382 = vmul.f32 %v3130, %v3317
        %v3383 = vmul.f32 %v3131, %v3322
        %v3384 = vmul.f32 %v3132, %v3327
        %v3385 = vmul.f32 %v3133, %v3332
        %v3386 = vmul.f32 %v3134, %v3337
        %v3387 = vmul.f32 %v3135, %v3342
        %v3388 = vmul.f32 %v3136, %v3347
        %v3389 = vmul.f32 %v3137, %v3352
        %v3390 = vadd.f32 %v3354, %v3355
        %v3391 = vadd.f32 %v3390, %v3356
        %v3392 = vadd.f32 %v3391, %v3357
        %v3393 = vadd.f32 %v3392, %v3358
        %v3394 = vadd.f32 %v3393, %v3359
        %v3395 = vadd.f32 %v3394, %v3360
        %v3396 = vadd.f32 %v3395, %v3361
        %v3397 = vadd.f32 %v3396, %v3362
        %v3398 = vadd.f32 %v3397, %v3363
        %v3399 = vadd.f32 %v3398, %v3364
        %v3400 = vadd.f32 %v3399, %v3365
        %v3401 = vadd.f32 %v3400, %v3366
        %v3402 = vadd.f32 %v3401, %v3367
        %v3403 = vadd.f32 %v3402, %v3368
        %v3404 = vadd.f32 %v3403, %v3369
        %v3405 = vadd.f32 %v3404, %v3370
        %v3406 = vadd.f32 %v3405, %v3371
        %v3407 = vadd.f32 %v3406, %v3372
        %v3408 = vadd.f32 %v3407, %v3373
        %v3409 = vadd.f32 %v3408, %v3374
        %v3410 = vadd.f32 %v3409, %v3375
        %v3411 = vadd.f32 %v3410, %v3376
        %v3412 = vadd.f32 %v3411, %v3377
        %v3413 = vadd.f32 %v3412, %v3378
        %v3414 = vadd.f32 %v3413, %v3379
        %v3415 = vadd.f32 %v3414, %v3380
        %v3416 = vadd.f32 %v3415, %v3381
        %v3417 = vadd.f32 %v3416, %v3382
        %v3418 = vadd.f32 %v3417, %v3383
        %v3419 = vadd.f32 %v3418, %v3384
        %v3420 = vadd.f32 %v3419, %v3385
        %v3421 = vadd.f32 %v3420, %v3386
        %v3422 = vadd.f32 %v3421, %v3387
        %v3423 = vadd.f32 %v3422, %v3388
        %vm3424 = vcmask 1045504
        %v3425 = vsel %vm3424, %v3389, 0.0
        %v3426 = vadd.f32 %v3423, %v3425
        %v3427 = vrot.slane %v3426, 4
        %v3428 = vadd.f32 %v3426, %v3427
        %v3429 = vrot.slane %v3428, 2
        %v3430 = vadd.f32 %v3428, %v3429
        %v3431 = vrot.slane %v3430, 1
        %v3432 = vadd.f32 %v3430, %v3431
        %v3433 = vmul.f32 %v3432, 0.00390625
        %3434 = vst [vmem:[%s189] sm:$0x1] %v3433
        %s3435 = sand.u32 %s115, 1
        %s3436 = scalar_lea.sflag [#allocation3], %s3435
        %s3437 = sand.u32 %s115, 1
        %s3438 = scalar_lea.vmem [#allocation2], %s3437
        // Predicated region
        $region37: #{tpu_custom_call.1} parent=35 // pred_check
          %p3439 = pneg %p125
        $region38: #{tpu_custom_call.1} parent=35 // pred_check_branch
          %3441 = sbr.rel (%p3439) target = $region40
        $region39: #{tpu_custom_call.1} parent=35 // pred_region
          %s3443 = ssub.s32 16, 16
          %3444 = vsyncadd %s3436, %s3443
          %s3445 = smul.addr %s18, 16
          %s3446 = scalar_lea.hbm %s4, %s3445
          %s3448 = sshll.u32 %s3438, 4
          %s3449 = int_to_ptr.vmem [resolvable:$true] %s3448
          %3451 = dma.vmem_to_hbm [thread:$0]  %s3449, 16, %s3446, %s3436
        $region40: #{tpu_custom_call.1} parent=35 // pred_fallthru
          _
      $region36: #{tpu_custom_call.1} parent=5 // pred_fallthru
        _
      %p3452 = scmp.le.s32.totalorder 2, %s13
      // Predicated region
      $region41: #{tpu_custom_call.1} parent=5 // pred_check
        %p3453 = pneg %p3452
      $region42: #{tpu_custom_call.1} parent=5 // pred_check_branch
        %3455 = sbr.rel (%p3453) target = $region44
      $region43: #{tpu_custom_call.1} parent=5 // pred_region
        %s3456 = ssub.s32 %s13, 2
        // Predicated region
        $region45: #{tpu_custom_call.1} parent=43 // pred_check
          %p3457 = pneg %p131
        $region46: #{tpu_custom_call.1} parent=43 // pred_check_branch
          %3459 = sbr.rel (%p3457) target = $region48
        $region47: #{tpu_custom_call.1} parent=43 // pred_region
          %s3460 = sand.u32 %s116, 1
          %s3461 = scalar_lea.sflag [#allocation3], %s3460
          %s3462 = sand.u32 %s116, 1
          %s3463 = scalar_lea.vmem [#allocation2], %s3462
          %3464 = dma.done %s3461, 16
        $region48: #{tpu_custom_call.1} parent=43 // pred_fallthru
          _
      $region44: #{tpu_custom_call.1} parent=5 // pred_fallthru
        _
    $region6: #{tpu_custom_call.1} parent=1 // loop_footer
      %s17 = sadd.s32 1, %s13
    $region7: #{tpu_custom_call.1} parent=1 // loop_footer_branch
      %12 = sbr.rel target = $region3
    $region8: #{tpu_custom_call.1} parent=1 // loop_exit
      _
    %3465 = vsyncpa [#allocation3], 1
    %s3466 = scalar_lea.sflag [#allocation3], 1
    %3467 = vsyncpa %s3466, 1

</llo_original>
